<compile_context>
chip_gen: v5e
topology: v5e:2x2
jax: 0.10.0
libtpu: 0.0.40
codegen_flags: <defaults>
</compile_context>

<pallas_src>
import functools

import jax
import jax.numpy as jnp
from jax.experimental import pallas as pl
from jax.experimental.pallas import tpu as pltpu


# ------------------------------------------------------------------ helpers --

def _silu(v):
    return v * jax.nn.sigmoid(v)


def _beta_coeff(n, m):
    # Matches PyTorch: (m + n) * (m - n) * n**2 / (m**2 / (4.0 * n**2 - 1.0))
    return (m + n) * (m - n) * n ** 2 / (m ** 2 / (4.0 * n ** 2 - 1.0))


def _largest_divisor_leq(n, target):
    best = 1
    for d in range(1, min(n, target) + 1):
        if n % d == 0:
            best = d
    return best


def _compiler_params():
    kw = dict(dimension_semantics=("parallel",))
    try:
        cap = int(getattr(pltpu.get_tpu_info(), "vmem_capacity_bytes", 0))
        if cap > 0:
            # ~half of physical VMEM, capped at 64 MiB (safe on v5e/v6e/v7x).
            kw["vmem_limit_bytes"] = min(cap // 2, 64 * 1024 * 1024)
    except Exception:
        pass
    return pltpu.CompilerParams(**kw)


# ------------------------------------------------------------------- kernel --

def _kagn_kernel(betas_ref, x_ref, w_ref, out_ref, basis_ref, *,
                 degree, K, C, H, W, pad, Hb, NB, Wo, Wo_p, count):
    """One grid step = one batch sample; Ho is processed in NB row-bands.

    betas_ref : (max(degree-1,1),)       f32  SMEM  Gram recursion coefficients
    x_ref     : (1, Hp, Wp_p, C)         f32  VMEM  zero-padded raw sample (NHWC)
    w_ref     : (K, K*Cb, O)             bf16 VMEM  kw-folded fused [poly;base] weights
    out_ref   : (1, Ho*Wo_p, O)          f32  VMEM  SiLU(InstanceNorm(conv)), row-major
    basis_ref : (Hb+K-1, Wo_p+K-1, Cb)   bf16 VMEM  per-band activated basis scratch
    """
    Cb = (degree + 2) * C
    KCb = K * Cb
    rows = Hb + K - 1
    BHW = Hb * Wo_p
    O = out_ref.shape[-1]

    def conv_band(b, carry):
        s_acc, ss_acc = carry
        r0 = pl.multiple_of(b * Hb, Hb)

        xb = x_ref[0, pl.ds(r0, rows), :, :]                    # (rows, Wp_p, C) f32

        # Valid-tap mask generated in-kernel (no HBM mask input): 1 inside the
        # original image, 0 on the conv pad ring / alignment-pad columns.
        rid = jax.lax.broadcasted_iota(jnp.int32, xb.shape, 0) + r0
        cid = jax.lax.broadcasted_iota(jnp.int32, xb.shape, 1)
        mask = ((rid >= pad) & (rid < pad + H) &
                (cid >= pad) & (cid < pad + W)).astype(jnp.float32)

        # Elementwise stage (f32; MXU operands cast to bf16 below).
        silu_x = _silu(xb)              # SiLU(0) = 0 at padded taps
        xt = jnp.tanh(xb)               # tanh(0) = 0 at padded taps

        # Gram polynomial basis, degree-major, streamed straight into the bf16
        # scratch.  p0 = mask (not ones) reproduces "activate then zero-pad":
        # every basis entry is exactly 0 at padded taps.
        basis_ref[:, :, 0:C] = _silu(mask).astype(jnp.bfloat16)
        basis_ref[:, :, (degree + 1) * C:] = silu_x.astype(jnp.bfloat16)
        if degree >= 1:
            p0, p1 = mask, xt
            basis_ref[:, :, C:2 * C] = _silu(p1).astype(jnp.bfloat16)
            for i in range(2, degree + 1):
                p2 = xt * p1 - betas_ref[i - 2] * p0
                basis_ref[:, :, i * C:(i + 1) * C] = _silu(p2).astype(jnp.bfloat16)
                p0, p1 = p1, p2

        # kw folded into the MXU contraction: one (rows, Wo_p, K*Cb) slab, then
        # K matmuls of depth K*Cb (instead of K*K matmuls of depth Cb).
        U = jnp.concatenate(
            [basis_ref[:, kw:kw + Wo_p, :] for kw in range(K)], axis=-1)

        y = jnp.zeros((BHW, O), jnp.float32)
        for kh in range(K):
            slab = U[kh:kh + Hb].reshape(BHW, KCb)
            y = y + jnp.dot(slab, w_ref[kh], preferred_element_type=jnp.float32)

        if Wo_p != Wo:
            # Zero alignment-pad output columns so they stay out of the stats.
            col = jax.lax.broadcasted_iota(jnp.int32, (BHW, 1), 0) % Wo_p
            y = jnp.where(col < Wo, y, 0.0)

        hw0 = pl.multiple_of(b * BHW, BHW)
        out_ref[0, pl.ds(hw0, BHW), :] = y                      # pre-norm band

        # Single-sweep InstanceNorm statistics (sum, sum of squares).
        return (s_acc + jnp.sum(y, axis=0, keepdims=True),
                ss_acc + jnp.sum(y * y, axis=0, keepdims=True))

    zeros = jnp.zeros((1, O), jnp.float32)
    s_acc, ss_acc = jax.lax.fori_loop(0, NB, conv_band, (zeros, zeros))

    inv_n = 1.0 / count
    mean = s_acc * inv_n
    var = jnp.maximum(ss_acc * inv_n - mean * mean, 0.0)
    scale = jax.lax.rsqrt(var + 1e-5)

    # Second pass over the resident output block: normalize + SiLU in place.
    def norm_band(b, carry):
        hw0 = pl.multiple_of(b * BHW, BHW)
        yb = out_ref[0, pl.ds(hw0, BHW), :]
        out_ref[0, pl.ds(hw0, BHW), :] = _silu((yb - mean) * scale)
        return carry

    jax.lax.fori_loop(0, NB, norm_band, 0)


# ------------------------------------------------------------------ wrapper --

def kagn_conv_forward(x, w_base, w_poly, beta_weights, *, degree, kernel_size,
                      padding, band_rows=8):
    N, C, H, W = x.shape
    O = w_base.shape[0]
    K = kernel_size
    p = padding

    Hp, Wp = H + 2 * p, W + 2 * p
    Ho, Wo = Hp - K + 1, Wp - K + 1
    Wo_p = ((Wo + 7) // 8) * 8              # sublane-aligned output columns
    Wp_p = Wo_p + K - 1
    Cb = (degree + 2) * C
    Hb = _largest_divisor_leq(Ho, band_rows)
    NB = Ho // Hb
    HW_p = Ho * Wo_p

    # Zero-padded NHWC input: conv pad ring + alignment columns on the right.
    x_pad = jnp.pad(jnp.transpose(x, (0, 2, 3, 1)).astype(jnp.float32),
                    ((0, 0), (p, p), (p, p + (Wp_p - Wp)), (0, 0)))

    # Fused [poly (degree-major); base] weights with kw folded into the
    # contraction: w_fused[kh, kw*Cb + cb, o] = w_cat[o, cb, kh, kw].
    w_cat = jnp.concatenate([w_poly.reshape(O, (degree + 1) * C, K, K),
                             w_base.reshape(O, C, K, K)], axis=1)   # (O,Cb,K,K)
    w_fused = jnp.transpose(w_cat, (2, 3, 1, 0)).reshape(K, K * Cb, O)
    w_fused = w_fused.astype(jnp.bfloat16)

    # Gram recursion coefficients beta(i-1, i) * beta_weights[i-1], i = 2..degree.
    DB = max(degree - 1, 1)
    if degree >= 2:
        coefs = jnp.array([_beta_coeff(i - 1, i) for i in range(2, degree + 1)],
                          jnp.float32)
        betas = coefs * beta_weights[1:degree].astype(jnp.float32)
    else:
        betas = jnp.zeros((DB,), jnp.float32)

    grid_spec = pltpu.PrefetchScalarGridSpec(
        num_scalar_prefetch=0,
        grid=(N,),
        in_specs=[
            pl.BlockSpec(memory_space=pltpu.MemorySpace.SMEM),           # betas
            pl.BlockSpec((1, Hp, Wp_p, C), lambda n: (n, 0, 0, 0)),      # x_pad
            pl.BlockSpec((K, K * Cb, O), lambda n: (0, 0, 0)),           # weights
        ],
        out_specs=pl.BlockSpec((1, HW_p, O), lambda n: (n, 0, 0)),
        scratch_shapes=[pltpu.VMEM((Hb + K - 1, Wp_p, Cb), jnp.bfloat16)],
    )

    kernel = functools.partial(
        _kagn_kernel, degree=degree, K=K, C=C, H=H, W=W, pad=p,
        Hb=Hb, NB=NB, Wo=Wo, Wo_p=Wo_p, count=float(Ho * Wo))

    out = pl.pallas_call(
        kernel,
        out_shape=jax.ShapeDtypeStruct((N, HW_p, O), jnp.float32),
        grid_spec=grid_spec,
        compiler_params=_compiler_params(),
    )(betas, x_pad, w_fused)

    # (N, Ho*Wo_p, O) -> NCHW; one XLA transpose, no in-kernel XLU transpose.
    out = out.reshape(N, Ho, Wo_p, O)[:, :, :Wo, :]
    return jnp.transpose(out, (0, 3, 1, 2))


# ----------------------------------------------------- reference & init glue --

def _reference(x, w_base, w_poly, beta_weights, degree, K, padding):
    dn = ("NCHW", "OIHW", "NCHW")

    def conv(a, w):
        return jax.lax.conv_general_dilated(
            a, w, (1, 1), [(padding, padding)] * 2, dimension_numbers=dn,
            precision=jax.lax.Precision.HIGHEST)

    basis = conv(jax.nn.silu(x), w_base)
    xt = jnp.tanh(x)
    grams = [jnp.ones_like(xt)]
    if degree >= 1:
        p0, p1 = jnp.ones_like(xt), xt
        grams.append(p1)
        for i in range(2, degree + 1):
            p2 = xt * p1 - (_beta_coeff(i - 1, i) * beta_weights[i - 1]) * p0
            grams.append(p2)
            p0, p1 = p1, p2
    gb = jnp.concatenate(grams, axis=1)              # degree-major channels
    y = conv(jax.nn.silu(gb), w_poly) + basis
    mean = y.mean(axis=(2, 3), keepdims=True)
    var = ((y - mean) ** 2).mean(axis=(2, 3), keepdims=True)
    yn = (y - mean) * jax.lax.rsqrt(var + 1e-5)
    return jax.nn.silu(yn)


def init_params(key, C, O, degree, K):
    k1, k2, k3 = jax.random.split(key, 3)
    # kaiming_uniform_(nonlinearity='linear'): bound = sqrt(3 / fan_in)
    fan_base = C * K * K
    b_base = (3.0 / fan_base) ** 0.5
    w_base = jax.random.uniform(k1, (O, C, K, K), jnp.float32, -b_base, b_base)
    fan_poly = C * (degree + 1) * K * K
    b_poly = (3.0 / fan_poly) ** 0.5
    w_poly = jax.random.uniform(k2, (O, C * (degree + 1), K, K), jnp.float32,
                                -b_poly, b_poly)
    std = 1.0 / (K ** 2 * C * (degree + 1.0))
    beta_weights = std * jax.random.normal(k3, (degree + 1,), jnp.float32)
    return w_base, w_poly, beta_weights


if __name__ == "__main__":
    key = jax.random.PRNGKey(0)
    kx, kp = jax.random.split(key)

    N, C, H, W = 2, 4, 16, 16
    O, degree, K, padding = 8, 3, 3, 1

    x = jax.random.normal(kx, (N, C, H, W), jnp.float32)
    w_base, w_poly, beta_weights = init_params(kp, C, O, degree, K)

    out = kagn_conv_forward(x, w_base, w_poly, beta_weights,
                            degree=degree, kernel_size=K, padding=padding)
    out = jax.block_until_ready(out)

    ref = _reference(x, w_base, w_poly, beta_weights, degree, K, padding)
    err = float(jnp.max(jnp.abs(out - ref)))
    assert bool(jnp.all(jnp.isfinite(out))) and err < 5e-2, f"mismatch {err}"

    print("KERNEL_OK")
</pallas_src>

<mosaic_0001>
module attributes {stable_mosaic.version = 11 : i64} {
  func.func @_kagn_kernel(%arg0: i32, %arg1: memref<2xf32, #tpu.memory_space<smem>>, %arg2: memref<1x18x18x4xf32, #tpu.memory_space<vmem>>, %arg3: memref<3x60x8xbf16, #tpu.memory_space<vmem>>, %arg4: memref<1x256x8xf32, #tpu.memory_space<vmem>>, %arg5: memref<10x18x20xbf16, #tpu.memory_space<vmem>>) attributes {dimension_semantics = [#tpu.dimension_semantics<parallel>], iteration_bounds = array<i64: 2>, scalar_prefetch = 0 : i64, scratch_operands = 1 : i64, tpu.core_type = #tpu.core_type<tc>, window_params = [{transform_indices = @transform_0, window_bounds = array<i64: 2>}, {transform_indices = @transform_1, window_bounds = array<i64: 1, 18, 18, 4>}, {pipeline_mode = #tpu.pipeline_mode<synchronous>, transform_indices = @transform_2, window_bounds = array<i64: 3, 60, 8>}, {transform_indices = @transform_3, window_bounds = array<i64: 1, 256, 8>}]} {
    %cst = arith.constant 0.000000e+00 : f32
    %0 = vector.broadcast %cst : f32 to vector<1x8xf32>
    %c0_i32 = arith.constant 0 : i32
    %c2_i32 = arith.constant 2 : i32
    %1 = arith.addi %c0_i32, %c2_i32 : i32
    %c1_i32 = arith.constant 1 : i32
    %2:2 = scf.for %arg6 = %c0_i32 to %1 step %c1_i32 iter_args(%arg7 = %0, %arg8 = %0) -> (vector<1x8xf32>, vector<1x8xf32>)  : i32 {
      %c8_i32 = arith.constant 8 : i32
      %15 = arith.muli %arg6, %c8_i32 : i32
      %16 = tpu.assume_multiple %15, 8 : i32
      %c0 = arith.constant 0 : index
      %17 = arith.index_cast %16 : i32 to index
      %c0_9 = arith.constant 0 : index
      %c0_10 = arith.constant 0 : index
      %18 = vector.load %arg2[%c0, %17, %c0_9, %c0_10] : memref<1x18x18x4xf32, #tpu.memory_space<vmem>>, vector<1x10x18x4xf32>
      %19 = vector.shape_cast %18 : vector<1x10x18x4xf32> to vector<10x18x4xf32>
      %20 = tpu.iota {dimensions = array<i32: 0>} : vector<10x18x4xi32>
      %21 = vector.broadcast %16 : i32 to vector<10x18x4xi32>
      %22 = arith.addi %20, %21 : vector<10x18x4xi32>
      %23 = tpu.iota {dimensions = array<i32: 1>} : vector<10x18x4xi32>
      %c1_i32_11 = arith.constant 1 : i32
      %24 = vector.broadcast %c1_i32_11 : i32 to vector<10x18x4xi32>
      %25 = arith.cmpi sge, %22, %24 : vector<10x18x4xi32>
      %c17_i32 = arith.constant 17 : i32
      %26 = vector.broadcast %c17_i32 : i32 to vector<10x18x4xi32>
      %27 = arith.cmpi slt, %22, %26 : vector<10x18x4xi32>
      %28 = arith.andi %25, %27 : vector<10x18x4xi1>
      %c1_i32_12 = arith.constant 1 : i32
      %29 = vector.broadcast %c1_i32_12 : i32 to vector<10x18x4xi32>
      %30 = arith.cmpi sge, %23, %29 : vector<10x18x4xi32>
      %31 = arith.andi %28, %30 : vector<10x18x4xi1>
      %c17_i32_13 = arith.constant 17 : i32
      %32 = vector.broadcast %c17_i32_13 : i32 to vector<10x18x4xi32>
      %33 = arith.cmpi slt, %23, %32 : vector<10x18x4xi32>
      %34 = arith.andi %31, %33 : vector<10x18x4xi1>
      %35 = arith.extui %34 : vector<10x18x4xi1> to vector<10x18x4xi32>
      %36 = arith.sitofp %35 : vector<10x18x4xi32> to vector<10x18x4xf32>
      %37 = arith.negf %19 : vector<10x18x4xf32>
      %38 = math.exp %37 : vector<10x18x4xf32>
      %cst_14 = arith.constant 1.000000e+00 : f32
      %39 = vector.broadcast %cst_14 : f32 to vector<10x18x4xf32>
      %40 = arith.addf %39, %38 : vector<10x18x4xf32>
      %41 = arith.divf %39, %40 : vector<10x18x4xf32>
      %42 = arith.mulf %19, %41 : vector<10x18x4xf32>
      %43 = math.tanh %19 : vector<10x18x4xf32>
      %44 = arith.negf %36 : vector<10x18x4xf32>
      %45 = math.exp %44 : vector<10x18x4xf32>
      %cst_15 = arith.constant 1.000000e+00 : f32
      %46 = vector.broadcast %cst_15 : f32 to vector<10x18x4xf32>
      %47 = arith.addf %46, %45 : vector<10x18x4xf32>
      %48 = arith.divf %46, %47 : vector<10x18x4xf32>
      %49 = arith.mulf %36, %48 : vector<10x18x4xf32>
      %50 = arith.truncf %49 : vector<10x18x4xf32> to vector<10x18x4xbf16>
      %c0_16 = arith.constant 0 : index
      %c0_17 = arith.constant 0 : index
      %c0_18 = arith.constant 0 : index
      %51 = vector.load %arg5[%c0_16, %c0_17, %c0_18] : memref<10x18x20xbf16, #tpu.memory_space<vmem>>, vector<10x18x4xbf16>
      tpu.vector_store %arg5[%c0_16, %c0_17, %c0_18], %50 {strides = array<i32>} : memref<10x18x20xbf16, #tpu.memory_space<vmem>>, vector<10x18x4xbf16>,
      %52 = arith.truncf %42 : vector<10x18x4xf32> to vector<10x18x4xbf16>
      %c0_19 = arith.constant 0 : index
      %c0_20 = arith.constant 0 : index
      %c16 = arith.constant 16 : index
      %53 = vector.load %arg5[%c0_19, %c0_20, %c16] : memref<10x18x20xbf16, #tpu.memory_space<vmem>>, vector<10x18x4xbf16>
      tpu.vector_store %arg5[%c0_19, %c0_20, %c16], %52 {strides = array<i32>} : memref<10x18x20xbf16, #tpu.memory_space<vmem>>, vector<10x18x4xbf16>,
      %54 = arith.negf %43 : vector<10x18x4xf32>
      %55 = math.exp %54 : vector<10x18x4xf32>
      %cst_21 = arith.constant 1.000000e+00 : f32
      %56 = vector.broadcast %cst_21 : f32 to vector<10x18x4xf32>
      %57 = arith.addf %56, %55 : vector<10x18x4xf32>
      %58 = arith.divf %56, %57 : vector<10x18x4xf32>
      %59 = arith.mulf %43, %58 : vector<10x18x4xf32>
      %60 = arith.truncf %59 : vector<10x18x4xf32> to vector<10x18x4xbf16>
      %c0_22 = arith.constant 0 : index
      %c0_23 = arith.constant 0 : index
      %c4 = arith.constant 4 : index
      %61 = vector.load %arg5[%c0_22, %c0_23, %c4] : memref<10x18x20xbf16, #tpu.memory_space<vmem>>, vector<10x18x4xbf16>
      tpu.vector_store %arg5[%c0_22, %c0_23, %c4], %60 {strides = array<i32>} : memref<10x18x20xbf16, #tpu.memory_space<vmem>>, vector<10x18x4xbf16>,
      %62 = arith.mulf %43, %43 : vector<10x18x4xf32>
      %c0_24 = arith.constant 0 : index
      %63 = memref.load %arg1[%c0_24] : memref<2xf32, #tpu.memory_space<smem>>
      %64 = vector.broadcast %63 : f32 to vector<10x18x4xf32>
      %65 = arith.mulf %64, %36 : vector<10x18x4xf32>
      %66 = arith.subf %62, %65 : vector<10x18x4xf32>
      %67 = arith.negf %66 : vector<10x18x4xf32>
      %68 = math.exp %67 : vector<10x18x4xf32>
      %cst_25 = arith.constant 1.000000e+00 : f32
      %69 = vector.broadcast %cst_25 : f32 to vector<10x18x4xf32>
      %70 = arith.addf %69, %68 : vector<10x18x4xf32>
      %71 = arith.divf %69, %70 : vector<10x18x4xf32>
      %72 = arith.mulf %66, %71 : vector<10x18x4xf32>
      %73 = arith.truncf %72 : vector<10x18x4xf32> to vector<10x18x4xbf16>
      %c0_26 = arith.constant 0 : index
      %c0_27 = arith.constant 0 : index
      %c8 = arith.constant 8 : index
      %74 = vector.load %arg5[%c0_26, %c0_27, %c8] : memref<10x18x20xbf16, #tpu.memory_space<vmem>>, vector<10x18x4xbf16>
      tpu.vector_store %arg5[%c0_26, %c0_27, %c8], %73 {strides = array<i32>} : memref<10x18x20xbf16, #tpu.memory_space<vmem>>, vector<10x18x4xbf16>,
      %75 = arith.mulf %43, %66 : vector<10x18x4xf32>
      %c1 = arith.constant 1 : index
      %76 = memref.load %arg1[%c1] : memref<2xf32, #tpu.memory_space<smem>>
      %77 = vector.broadcast %76 : f32 to vector<10x18x4xf32>
      %78 = arith.mulf %77, %43 : vector<10x18x4xf32>
      %79 = arith.subf %75, %78 : vector<10x18x4xf32>
      %80 = arith.negf %79 : vector<10x18x4xf32>
      %81 = math.exp %80 : vector<10x18x4xf32>
      %cst_28 = arith.constant 1.000000e+00 : f32
      %82 = vector.broadcast %cst_28 : f32 to vector<10x18x4xf32>
      %83 = arith.addf %82, %81 : vector<10x18x4xf32>
      %84 = arith.divf %82, %83 : vector<10x18x4xf32>
      %85 = arith.mulf %79, %84 : vector<10x18x4xf32>
      %86 = arith.truncf %85 : vector<10x18x4xf32> to vector<10x18x4xbf16>
      %c0_29 = arith.constant 0 : index
      %c0_30 = arith.constant 0 : index
      %c12 = arith.constant 12 : index
      %87 = vector.load %arg5[%c0_29, %c0_30, %c12] : memref<10x18x20xbf16, #tpu.memory_space<vmem>>, vector<10x18x4xbf16>
      tpu.vector_store %arg5[%c0_29, %c0_30, %c12], %86 {strides = array<i32>} : memref<10x18x20xbf16, #tpu.memory_space<vmem>>, vector<10x18x4xbf16>,
      %c0_31 = arith.constant 0 : index
      %c0_32 = arith.constant 0 : index
      %c0_33 = arith.constant 0 : index
      %88 = vector.load %arg5[%c0_31, %c0_32, %c0_33] : memref<10x18x20xbf16, #tpu.memory_space<vmem>>, vector<10x16x20xbf16>
      %c0_34 = arith.constant 0 : index
      %c1_35 = arith.constant 1 : index
      %c0_36 = arith.constant 0 : index
      %89 = vector.load %arg5[%c0_34, %c1_35, %c0_36] : memref<10x18x20xbf16, #tpu.memory_space<vmem>>, vector<10x16x20xbf16>
      %c0_37 = arith.constant 0 : index
      %c2 = arith.constant 2 : index
      %c0_38 = arith.constant 0 : index
      %90 = vector.load %arg5[%c0_37, %c2, %c0_38] : memref<10x18x20xbf16, #tpu.memory_space<vmem>>, vector<10x16x20xbf16>
      %91 = tpu.concatenate %88, %89, %90 in 2 : vector<10x16x20xbf16>, vector<10x16x20xbf16>, vector<10x16x20xbf16> -> vector<10x16x60xbf16>
      %cst_39 = arith.constant 0.000000e+00 : f32
      %92 = vector.broadcast %cst_39 : f32 to vector<128x8xf32>
      %93 = vector.extract_strided_slice %91 {offsets = [0, 0, 0], sizes = [8, 16, 60], strides = [1, 1, 1]} : vector<10x16x60xbf16> to vector<8x16x60xbf16>
      %94 = vector.shape_cast %93 : vector<8x16x60xbf16> to vector<128x60xbf16>
      %c0_40 = arith.constant 0 : index
      %c0_41 = arith.constant 0 : index
      %c0_42 = arith.constant 0 : index
      %95 = vector.load %arg3[%c0_40, %c0_41, %c0_42] : memref<3x60x8xbf16, #tpu.memory_space<vmem>>, vector<1x60x8xbf16>
      %96 = vector.shape_cast %95 : vector<1x60x8xbf16> to vector<60x8xbf16>
      %cst_43 = arith.constant dense<0.000000e+00> : vector<128x8xf32>
      %97 = tpu.matmul %94, %96, %cst_43 {dimension_numbers = #tpu.dot_dimension_numbers<[1], [0], [0], [1], [0, 0, 1, 1], [], []>} : vector<128x60xbf16>, vector<60x8xbf16>, vector<128x8xf32> -> vector<128x8xf32>
      %98 = arith.addf %92, %97 : vector<128x8xf32>
      %99 = vector.extract_strided_slice %91 {offsets = [1, 0, 0], sizes = [8, 16, 60], strides = [1, 1, 1]} : vector<10x16x60xbf16> to vector<8x16x60xbf16>
      %100 = vector.shape_cast %99 : vector<8x16x60xbf16> to vector<128x60xbf16>
      %c1_44 = arith.constant 1 : index
      %c0_45 = arith.constant 0 : index
      %c0_46 = arith.constant 0 : index
      %101 = vector.load %arg3[%c1_44, %c0_45, %c0_46] : memref<3x60x8xbf16, #tpu.memory_space<vmem>>, vector<1x60x8xbf16>
      %102 = vector.shape_cast %101 : vector<1x60x8xbf16> to vector<60x8xbf16>
      %cst_47 = arith.constant dense<0.000000e+00> : vector<128x8xf32>
      %103 = tpu.matmul %100, %102, %cst_47 {dimension_numbers = #tpu.dot_dimension_numbers<[1], [0], [0], [1], [0, 0, 1, 1], [], []>} : vector<128x60xbf16>, vector<60x8xbf16>, vector<128x8xf32> -> vector<128x8xf32>
      %104 = arith.addf %98, %103 : vector<128x8xf32>
      %105 = vector.extract_strided_slice %91 {offsets = [2, 0, 0], sizes = [8, 16, 60], strides = [1, 1, 1]} : vector<10x16x60xbf16> to vector<8x16x60xbf16>
      %106 = vector.shape_cast %105 : vector<8x16x60xbf16> to vector<128x60xbf16>
      %c2_48 = arith.constant 2 : index
      %c0_49 = arith.constant 0 : index
      %c0_50 = arith.constant 0 : index
      %107 = vector.load %arg3[%c2_48, %c0_49, %c0_50] : memref<3x60x8xbf16, #tpu.memory_space<vmem>>, vector<1x60x8xbf16>
      %108 = vector.shape_cast %107 : vector<1x60x8xbf16> to vector<60x8xbf16>
      %cst_51 = arith.constant dense<0.000000e+00> : vector<128x8xf32>
      %109 = tpu.matmul %106, %108, %cst_51 {dimension_numbers = #tpu.dot_dimension_numbers<[1], [0], [0], [1], [0, 0, 1, 1], [], []>} : vector<128x60xbf16>, vector<60x8xbf16>, vector<128x8xf32> -> vector<128x8xf32>
      %110 = arith.addf %104, %109 : vector<128x8xf32>
      %c128_i32 = arith.constant 128 : i32
      %111 = arith.muli %arg6, %c128_i32 : i32
      %112 = tpu.assume_multiple %111, 128 : i32
      %c0_52 = arith.constant 0 : index
      %113 = arith.index_cast %112 : i32 to index
      %c0_53 = arith.constant 0 : index
      %114 = vector.load %arg4[%c0_52, %113, %c0_53] : memref<1x256x8xf32, #tpu.memory_space<vmem>>, vector<1x128x8xf32>
      %115 = vector.shape_cast %114 : vector<1x128x8xf32> to vector<128x8xf32>
      %116 = vector.shape_cast %110 : vector<128x8xf32> to vector<1x128x8xf32>
      tpu.vector_store %arg4[%c0_52, %113, %c0_53], %116 {strides = array<i32>} : memref<1x256x8xf32, #tpu.memory_space<vmem>>, vector<1x128x8xf32>,
      %cst_54 = arith.constant dense<0.000000e+00> : vector<8xf32>
      %117 = vector.multi_reduction <add>, %110, %cst_54 [0] : vector<128x8xf32> to vector<8xf32>
      %118 = vector.shape_cast %117 : vector<8xf32> to vector<1x8xf32>
      %119 = arith.addf %arg7, %118 : vector<1x8xf32>
      %120 = arith.mulf %110, %110 : vector<128x8xf32>
      %cst_55 = arith.constant dense<0.000000e+00> : vector<8xf32>
      %121 = vector.multi_reduction <add>, %120, %cst_55 [0] : vector<128x8xf32> to vector<8xf32>
      %122 = vector.shape_cast %121 : vector<8xf32> to vector<1x8xf32>
      %123 = arith.addf %arg8, %122 : vector<1x8xf32>
      scf.yield %119, %123 : vector<1x8xf32>, vector<1x8xf32>
    }
    %c2_i32_0 = arith.constant 2 : i32
    %cst_1 = arith.constant 3.906250e-03 : f32
    %3 = vector.broadcast %cst_1 : f32 to vector<1x8xf32>
    %4 = arith.mulf %2#0, %3 : vector<1x8xf32>
    %cst_2 = arith.constant 3.906250e-03 : f32
    %5 = vector.broadcast %cst_2 : f32 to vector<1x8xf32>
    %6 = arith.mulf %2#1, %5 : vector<1x8xf32>
    %7 = arith.mulf %4, %4 : vector<1x8xf32>
    %8 = arith.subf %6, %7 : vector<1x8xf32>
    %cst_3 = arith.constant 0.000000e+00 : f32
    %9 = vector.broadcast %cst_3 : f32 to vector<1x8xf32>
    %10 = arith.maximumf %8, %9 : vector<1x8xf32>
    %cst_4 = arith.constant 9.99999974E-6 : f32
    %11 = vector.broadcast %cst_4 : f32 to vector<1x8xf32>
    %12 = arith.addf %10, %11 : vector<1x8xf32>
    %13 = math.rsqrt %12 : vector<1x8xf32>
    %c0_i32_5 = arith.constant 0 : i32
    %c2_i32_6 = arith.constant 2 : i32
    %14 = arith.addi %c0_i32_5, %c2_i32_6 : i32
    %c1_i32_7 = arith.constant 1 : i32
    scf.for %arg6 = %c0_i32_5 to %14 step %c1_i32_7  : i32 {
      %c128_i32 = arith.constant 128 : i32
      %15 = arith.muli %arg6, %c128_i32 : i32
      %16 = tpu.assume_multiple %15, 128 : i32
      %c0 = arith.constant 0 : index
      %17 = arith.index_cast %16 : i32 to index
      %c0_9 = arith.constant 0 : index
      %18 = vector.load %arg4[%c0, %17, %c0_9] : memref<1x256x8xf32, #tpu.memory_space<vmem>>, vector<1x128x8xf32>
      %19 = vector.shape_cast %18 : vector<1x128x8xf32> to vector<128x8xf32>
      %20 = vector.broadcast %4 : vector<1x8xf32> to vector<128x8xf32>
      %21 = arith.subf %19, %20 : vector<128x8xf32>
      %22 = vector.broadcast %13 : vector<1x8xf32> to vector<128x8xf32>
      %23 = arith.mulf %21, %22 : vector<128x8xf32>
      %24 = arith.negf %23 : vector<128x8xf32>
      %25 = math.exp %24 : vector<128x8xf32>
      %cst_10 = arith.constant 1.000000e+00 : f32
      %26 = vector.broadcast %cst_10 : f32 to vector<128x8xf32>
      %27 = arith.addf %26, %25 : vector<128x8xf32>
      %28 = arith.divf %26, %27 : vector<128x8xf32>
      %29 = arith.mulf %23, %28 : vector<128x8xf32>
      %c0_11 = arith.constant 0 : index
      %30 = arith.index_cast %16 : i32 to index
      %c0_12 = arith.constant 0 : index
      %31 = vector.load %arg4[%c0_11, %30, %c0_12] : memref<1x256x8xf32, #tpu.memory_space<vmem>>, vector<1x128x8xf32>
      %32 = vector.shape_cast %31 : vector<1x128x8xf32> to vector<128x8xf32>
      %33 = vector.shape_cast %29 : vector<128x8xf32> to vector<1x128x8xf32>
      tpu.vector_store %arg4[%c0_11, %30, %c0_12], %33 {strides = array<i32>} : memref<1x256x8xf32, #tpu.memory_space<vmem>>, vector<1x128x8xf32>,
    }
    %c2_i32_8 = arith.constant 2 : i32
    return
  }
  func.func @transform_0(%arg0: i32) -> i32 {
    %c0_i32 = arith.constant 0 : i32
    %c0_i32_0 = arith.constant 0 : i32
    return %c0_i32 : i32
  }
  func.func @transform_1(%arg0: i32) -> (i32, i32, i32, i32) {
    %c0_i32 = arith.constant 0 : i32
    %c0_i32_0 = arith.constant 0 : i32
    %c0_i32_1 = arith.constant 0 : i32
    %c0_i32_2 = arith.constant 0 : i32
    return %arg0, %c0_i32, %c0_i32_0, %c0_i32_1 : i32, i32, i32, i32
  }
  func.func @transform_2(%arg0: i32) -> (i32, i32, i32) {
    %c0_i32 = arith.constant 0 : i32
    %c0_i32_0 = arith.constant 0 : i32
    %c0_i32_1 = arith.constant 0 : i32
    %c0_i32_2 = arith.constant 0 : i32
    return %c0_i32, %c0_i32_0, %c0_i32_1 : i32, i32, i32
  }
  func.func @transform_3(%arg0: i32) -> (i32, i32, i32) {
    %c0_i32 = arith.constant 0 : i32
    %c0_i32_0 = arith.constant 0 : i32
    %c0_i32_1 = arith.constant 0 : i32
    return %arg0, %c0_i32, %c0_i32_0 : i32, i32, i32
  }
}

</mosaic_0001>

<llo_original>
// kernel: tpu_custom_call.1
$region0: #{tpu_custom_call.1}
  #allocation0 [shape = 'u32[]', space=smem, size = 0x4, offset = 0x4, fixed_abs, tag = 'smem constant byte address 0x4 - core index']
  #allocation1 [shape = 'u32[72,128]{1,0:T(1,128)}', space=vmem, size = 0x9000, scoped, tag = 'internal scratch']
  #allocation2 [shape = 'bf16[10,18,20]{2,1,0:T(8,128)(2,1)}', space=vmem, size = 0xf000, scoped, tag = 'scratch operand']
  %s0 = inlined_call_operand.vmem [shape: f32[2], index: 0, kind: input, shape index: {}]
  %s1 = inlined_call_operand.vmem [shape: f32[2,18,18,4], index: 1, kind: input, shape index: {}]
  %s2 = inlined_call_operand.vmem [shape: bf16[3,60,8], index: 2, kind: input, shape index: {}]
  %s3 = inlined_call_operand.vmem [shape: f32[2,256,8], index: 3, kind: output, shape index: {}]
  %s4 = sld [smem:[#allocation0]]
  $region63: #{tpu_custom_call.1} parent=0
    _
  %s6 = ssub.s32 1, %s4
  %s7 = scalar_select 0, %s6, %s4
  $region1: #{tpu_custom_call.1} parent=0
    #allocation3 [shape = 'u8[512]{0}', space=smem, size = 0x200, scoped, tag = 'input window, operand 0, single buffered']
    #allocation4 [shape = 's32[2]{0}', space=sflag, size = 0x8, scoped, tag = 'scoped memory for tpu_custom_call.1']
    %8 = vsyncpa [#allocation4], 0
    loop: start=0, step=1, limit=4
    $region2: #{tpu_custom_call.1} parent=1 // loop_pre_header
      _
    $region3: #{tpu_custom_call.1} parent=1 // loop_header
      %s10 = sphi 0, %s14
      %p11 = scmp.ge.s32.totalorder %s10, 4
      %s18 = sphi 0, %s18
      %s20 = sphi 0, %s18
      %s21 = sphi 0, %s20
      %s35 = sphi 0, %s21
      %s41 = sphi 0, %s43
      %s44 = sphi 0, %s41
      %s45 = sphi 0, %s44
      %s61 = sphi 0, %s45
      %s65 = sphi 0, %s65
      %s67 = sphi 0, %s65
      %s68 = sphi 0, %s67
      %s82 = sphi 0, %s68
      %s88 = sphi 0, %s90
      %s91 = sphi 0, %s88
      %s92 = sphi 0, %s91
      %s108 = sphi 0, %s92
    $region4: #{tpu_custom_call.1} parent=1 // loop_header_branch
      %13 = sbr.rel (%p11) target = $region8
    $region5: #{tpu_custom_call.1} parent=1 // loop_body
      %s15 = ssub.s32 %s10, 1
      %s16 = ssub.s32 %s10, 2
      %s17 = sadd.s32 %s10, 1
      %s19 = sadd.s32 %s18, 1
      %p22 = scmp.eq.s32.totalorder %s10, 1
      %p23 = scmp.ne.s32.totalorder %s18, %s20
      %p24 = scmp.eq.s32.totalorder %s10, 0
      %p25 = por %p23, %p24
      %p26 = scmp.ne.s32.totalorder %s18, %s20
      %p27 = scmp.eq.s32.totalorder %s15, 1
      %p28 = por %p26, %p27
      %p29 = scmp.ne.s32.totalorder %s20, %s21
      %p30 = scmp.eq.s32.totalorder %s15, 0
      %p31 = por %p29, %p30
      %p32 = scmp.ne.s32.totalorder %s20, %s21
      %p33 = scmp.eq.s32.totalorder %s16, 1
      %p34 = por %p32, %p33
      %p36 = scmp.ne.s32.totalorder %s21, %s35
      %p37 = scmp.eq.s32.totalorder %s16, 0
      %p38 = por %p36, %p37
      %s39 = ssub.s32 %s10, %s17
      %p40 = scmp.eq.s32.totalorder %s39, 0
      %s42 = sadd.s32 %s41, 1
      %s43 = scalar_select %p40, %s41, %s42
      %p46 = pneg %p40
      %p47 = scmp.eq.s32.totalorder %s10, 1
      %p48 = por %p46, %p47
      %p49 = scmp.ne.s32.totalorder %s41, %s44
      %p50 = scmp.eq.s32.totalorder %s10, 0
      %p51 = por %p49, %p50
      %p52 = scmp.ne.s32.totalorder %s41, %s44
      %p53 = scmp.eq.s32.totalorder %s15, 1
      %p54 = por %p52, %p53
      %p55 = scmp.ne.s32.totalorder %s44, %s45
      %p56 = scmp.eq.s32.totalorder %s15, 0
      %p57 = por %p55, %p56
      %p58 = scmp.ne.s32.totalorder %s44, %s45
      %p59 = scmp.eq.s32.totalorder %s16, 1
      %p60 = por %p58, %p59
      %p62 = scmp.ne.s32.totalorder %s45, %s61
      %p63 = scmp.eq.s32.totalorder %s16, 0
      %p64 = por %p62, %p63
      %s66 = sadd.s32 %s65, 1
      %p69 = scmp.eq.s32.totalorder %s10, 1
      %p70 = scmp.ne.s32.totalorder %s65, %s67
      %p71 = scmp.eq.s32.totalorder %s10, 0
      %p72 = por %p70, %p71
      %p73 = scmp.ne.s32.totalorder %s65, %s67
      %p74 = scmp.eq.s32.totalorder %s15, 1
      %p75 = por %p73, %p74
      %p76 = scmp.ne.s32.totalorder %s67, %s68
      %p77 = scmp.eq.s32.totalorder %s15, 0
      %p78 = por %p76, %p77
      %p79 = scmp.ne.s32.totalorder %s67, %s68
      %p80 = scmp.eq.s32.totalorder %s16, 1
      %p81 = por %p79, %p80
      %p83 = scmp.ne.s32.totalorder %s68, %s82
      %p84 = scmp.eq.s32.totalorder %s16, 0
      %p85 = por %p83, %p84
      %s86 = ssub.s32 %s10, %s17
      %p87 = scmp.eq.s32.totalorder %s86, 0
      %s89 = sadd.s32 %s88, 1
      %s90 = scalar_select %p87, %s88, %s89
      %p93 = pneg %p87
      %p94 = scmp.eq.s32.totalorder %s10, 1
      %p95 = por %p93, %p94
      %p96 = scmp.ne.s32.totalorder %s88, %s91
      %p97 = scmp.eq.s32.totalorder %s10, 0
      %p98 = por %p96, %p97
      %p99 = scmp.ne.s32.totalorder %s88, %s91
      %p100 = scmp.eq.s32.totalorder %s15, 1
      %p101 = por %p99, %p100
      %p102 = scmp.ne.s32.totalorder %s91, %s92
      %p103 = scmp.eq.s32.totalorder %s15, 0
      %p104 = por %p102, %p103
      %p105 = scmp.ne.s32.totalorder %s91, %s92
      %p106 = scmp.eq.s32.totalorder %s16, 1
      %p107 = por %p105, %p106
      %p109 = scmp.ne.s32.totalorder %s92, %s108
      %p110 = scmp.eq.s32.totalorder %s16, 0
      %p111 = por %p109, %p110
      %p112 = scmp.le.s32.totalorder 1, %s10
      %p113 = scmp.lt.s32.totalorder %s10, 3
      %p114 = pnand %p112, %p113
      %p115 = pneg %p114
      // Predicated region
      $region9: #{tpu_custom_call.1} parent=5 // pred_check
        _
      $region10: #{tpu_custom_call.1} parent=5 // pred_check_branch
        %117 = sbr.rel (%p114) target = $region12
      $region11: #{tpu_custom_call.1} parent=5 // pred_region
        %s118 = ssub.s32 %s10, 1
        // Predicated region
        $region13: #{tpu_custom_call.1} parent=11 // pred_check
          %p119 = pneg %p31
        $region14: #{tpu_custom_call.1} parent=11 // pred_check_branch
          %121 = sbr.rel (%p119) target = $region16
        $region15: #{tpu_custom_call.1} parent=11 // pred_region
          %123 = vsyncadd [#allocation4], 0
          %s125 = sshll.u32 %s0, 4
          %s126 = int_to_ptr.vmem [resolvable:$true] %s125
          %128 = dma.vmem_to_smem %s126, 16, [#allocation3], [#allocation4]
        $region16: #{tpu_custom_call.1} parent=11 // pred_fallthru
          _
        // Predicated region
        $region17: #{tpu_custom_call.1} parent=11 // pred_check
          %p129 = pneg %p78
        $region18: #{tpu_custom_call.1} parent=11 // pred_check_branch
          %131 = sbr.rel (%p129) target = $region20
        $region19: #{tpu_custom_call.1} parent=11 // pred_region
          _
        $region20: #{tpu_custom_call.1} parent=11 // pred_fallthru
          _
      $region12: #{tpu_custom_call.1} parent=5 // pred_fallthru
        _
      %p132 = scmp.lt.s32.totalorder %s10, 2
      // Predicated region
      $region21: #{tpu_custom_call.1} parent=5 // pred_check
        %p133 = pneg %p132
      $region22: #{tpu_custom_call.1} parent=5 // pred_check_branch
        %135 = sbr.rel (%p133) target = $region24
      $region23: #{tpu_custom_call.1} parent=5 // pred_region
        // Predicated region
        $region25: #{tpu_custom_call.1} parent=23 // pred_check
          %p136 = pneg %p51
        $region26: #{tpu_custom_call.1} parent=23 // pred_check_branch
          %138 = sbr.rel (%p136) target = $region28
        $region27: #{tpu_custom_call.1} parent=23 // pred_region
          %p139 = scmp.lt.s32.totalorder %s10, 1
          %s140 = scalar_select %p139, %s10, 1
          %s141 = smul.addr %s140, 54
          %s142 = smul.addr %s141, 8
          %s143 = scalar_lea.vmem %s1, %s142
        $region28: #{tpu_custom_call.1} parent=23 // pred_fallthru
          _
      $region24: #{tpu_custom_call.1} parent=5 // pred_fallthru
        _
      %p144 = scmp.le.s32.totalorder 1, %s10
      %p145 = scmp.lt.s32.totalorder %s10, 3
      %p146 = pnand %p144, %p145
      %p147 = pneg %p146
      // Predicated region
      $region29: #{tpu_custom_call.1} parent=5 // pred_check
        _
      $region30: #{tpu_custom_call.1} parent=5 // pred_check_branch
        %149 = sbr.rel (%p146) target = $region32
      $region31: #{tpu_custom_call.1} parent=5 // pred_region
        %s150 = ssub.s32 %s10, 1
        // Predicated region
        $region33: #{tpu_custom_call.1} parent=31 // pred_check
          %p151 = pneg %p31
        $region34: #{tpu_custom_call.1} parent=31 // pred_check_branch
          %153 = sbr.rel (%p151) target = $region36
        $region35: #{tpu_custom_call.1} parent=31 // pred_region
          %155 = dma.done [#allocation4], 16
        $region36: #{tpu_custom_call.1} parent=31 // pred_fallthru
          _
        %156 = sfence
        %p157 = pneg %p31
        %p158 = pneg %p28
        %p159 = scmp.lt.s32.totalorder %s15, 1
        %s160 = scalar_select %p159, %s15, 1
        %s161 = smul.addr %s160, 54
        %s162 = smul.addr %s161, 8
        %s163 = scalar_lea.vmem %s1, %s162
        %p164 = pneg %p57
        %p165 = pneg %p54
        %p166 = pneg %p78
        %p167 = pneg %p75
        %p168 = pneg %p104
        %p169 = pneg %p101
        %p170 = scmp.lt.s32.totalorder %s15, 1
        %s171 = scalar_select %p170, %s15, 1
        %s172 = smul.addr %s171, 32
        %s173 = smul.addr %s172, 8
        %s174 = scalar_lea.vmem %s3, %s173
        %p175 = scmp.lt.s32.totalorder %s15, 1
        %s176 = scalar_select %p175, %s15, 1
        %s177 = smul.addr %s176, 54
        %s178 = smul.addr %s177, 8
        %s179 = scalar_lea.vmem %s1, %s178
        %p180 = scmp.lt.s32.totalorder %s15, 1
        %s181 = scalar_select %p180, %s15, 1
        %s182 = smul.addr %s181, 32
        %s183 = smul.addr %s182, 8
        %s184 = scalar_lea.vmem %s3, %s183
        loop: start=0, step=1, limit=2
        $region37: #{tpu_custom_call.1} parent=31 // loop_pre_header
          _
        $region38: #{tpu_custom_call.1} parent=31 // loop_header
          %s187 = sphi 0, %s191
          %p188 = scmp.ge.s32.totalorder %s187, 2
          %v192 = vphi 0.0, %v5130
          %v193 = vphi 0.0, %v5184
        $region39: #{tpu_custom_call.1} parent=31 // loop_header_branch
          %190 = sbr.rel (%p188) target = $region43
        $region40: #{tpu_custom_call.1} parent=31 // loop_body
          %s194 = smul.u32 %s187, 8
          %s195 = smul.u32 %s194, 24
          %s196 = scalar_lea.vmem %s179, %s195
          %v197 = vld [vmem:[%s196] sm:$0xff]
          %v198 = vld [vmem:[%s196 + $0x8] sm:$0xff]
          %v199 = vld [vmem:[%s196 + $0x10] sm:$0x3]
          %v200 = vld [vmem:[%s196 + $0x18] sm:$0xff]
          %v201 = vld [vmem:[%s196 + $0x20] sm:$0xff]
          %v202 = vld [vmem:[%s196 + $0x28] sm:$0x3]
          %v203 = vld [vmem:[%s196 + $0x30] sm:$0xff]
          %v204 = vld [vmem:[%s196 + $0x38] sm:$0xff]
          %v205 = vld [vmem:[%s196 + $0x40] sm:$0x3]
          %v206 = vld [vmem:[%s196 + $0x48] sm:$0xff]
          %v207 = vld [vmem:[%s196 + $0x50] sm:$0xff]
          %v208 = vld [vmem:[%s196 + $0x58] sm:$0x3]
          %v209 = vld [vmem:[%s196 + $0x60] sm:$0xff]
          %v210 = vld [vmem:[%s196 + $0x68] sm:$0xff]
          %v211 = vld [vmem:[%s196 + $0x70] sm:$0x3]
          %v212 = vld [vmem:[%s196 + $0x78] sm:$0xff]
          %v213 = vld [vmem:[%s196 + $0x80] sm:$0xff]
          %v214 = vld [vmem:[%s196 + $0x88] sm:$0x3]
          %v215 = vld [vmem:[%s196 + $0x90] sm:$0xff]
          %v216 = vld [vmem:[%s196 + $0x98] sm:$0xff]
          %v217 = vld [vmem:[%s196 + $0xa0] sm:$0x3]
          %v218 = vld [vmem:[%s196 + $0xa8] sm:$0xff]
          %v219 = vld [vmem:[%s196 + $0xb0] sm:$0xff]
          %v220 = vld [vmem:[%s196 + $0xb8] sm:$0x3]
          %v221 = vld [vmem:[%s196 + $0xc0] sm:$0xff]
          %v222 = vld [vmem:[%s196 + $0xc8] sm:$0xff]
          %v223 = vld [vmem:[%s196 + $0xd0] sm:$0x3]
          %v224 = vld [vmem:[%s196 + $0xd8] sm:$0xff]
          %v225 = vld [vmem:[%s196 + $0xe0] sm:$0xff]
          %v226 = vld [vmem:[%s196 + $0xe8] sm:$0x3]
          %v227 = vstv %s194
          %v228 = vadd.s32 %v227, 1
          %v229 = vadd.s32 %v227, 2
          %v230 = vadd.s32 %v227, 3
          %v231 = vadd.s32 %v227, 4
          %v232 = vadd.s32 %v227, 5
          %v233 = vadd.s32 %v227, 6
          %v234 = vadd.s32 %v227, 7
          %v235 = vadd.s32 %v227, 8
          %v236 = vadd.s32 %v227, 9
          %v237 = vlaneseq
          %v238 = vshrl.u32 %v237, 7
          %v239 = vadd.s32 %v238, 8
          %v240 = vadd.s32 %v238, 16
          %vm241 = vcmp.ge.s32.totalorder %v227, 1
          %vm242 = vcmp.ge.s32.totalorder %v228, 1
          %vm243 = vcmp.ge.s32.totalorder %v229, 1
          %vm244 = vcmp.ge.s32.totalorder %v230, 1
          %vm245 = vcmp.ge.s32.totalorder %v231, 1
          %vm246 = vcmp.ge.s32.totalorder %v232, 1
          %vm247 = vcmp.ge.s32.totalorder %v233, 1
          %vm248 = vcmp.ge.s32.totalorder %v234, 1
          %vm249 = vcmp.ge.s32.totalorder %v235, 1
          %vm250 = vcmp.ge.s32.totalorder %v236, 1
          %vm251 = vcmp.lt.s32.totalorder %v227, 17
          %vm252 = vcmp.lt.s32.totalorder %v228, 17
          %vm253 = vcmp.lt.s32.totalorder %v229, 17
          %vm254 = vcmp.lt.s32.totalorder %v230, 17
          %vm255 = vcmp.lt.s32.totalorder %v231, 17
          %vm256 = vcmp.lt.s32.totalorder %v232, 17
          %vm257 = vcmp.lt.s32.totalorder %v233, 17
          %vm258 = vcmp.lt.s32.totalorder %v234, 17
          %vm259 = vcmp.lt.s32.totalorder %v235, 17
          %vm260 = vcmp.lt.s32.totalorder %v236, 17
          %vm261 = vmand %vm241, %vm251
          %vm262 = vmand %vm242, %vm252
          %vm263 = vmand %vm243, %vm253
          %vm264 = vmand %vm244, %vm254
          %vm265 = vmand %vm245, %vm255
          %vm266 = vmand %vm246, %vm256
          %vm267 = vmand %vm247, %vm257
          %vm268 = vmand %vm248, %vm258
          %vm269 = vmand %vm249, %vm259
          %vm270 = vmand %vm250, %vm260
          %vm271 = vcmp.ge.s32.totalorder %v238, 1
          %vm272 = vcmp.ge.s32.totalorder %v239, 1
          %vm273 = vcmp.ge.s32.totalorder %v240, 1
          %vm274 = vmand %vm261, %vm271
          %vm275 = vmand %vm261, %vm272
          %vm276 = vmand %vm261, %vm273
          %vm277 = vmand %vm262, %vm271
          %vm278 = vmand %vm262, %vm272
          %vm279 = vmand %vm262, %vm273
          %vm280 = vmand %vm263, %vm271
          %vm281 = vmand %vm263, %vm272
          %vm282 = vmand %vm263, %vm273
          %vm283 = vmand %vm264, %vm271
          %vm284 = vmand %vm264, %vm272
          %vm285 = vmand %vm264, %vm273
          %vm286 = vmand %vm265, %vm271
          %vm287 = vmand %vm265, %vm272
          %vm288 = vmand %vm265, %vm273
          %vm289 = vmand %vm266, %vm271
          %vm290 = vmand %vm266, %vm272
          %vm291 = vmand %vm266, %vm273
          %vm292 = vmand %vm267, %vm271
          %vm293 = vmand %vm267, %vm272
          %vm294 = vmand %vm267, %vm273
          %vm295 = vmand %vm268, %vm271
          %vm296 = vmand %vm268, %vm272
          %vm297 = vmand %vm268, %vm273
          %vm298 = vmand %vm269, %vm271
          %vm299 = vmand %vm269, %vm272
          %vm300 = vmand %vm269, %vm273
          %vm301 = vmand %vm270, %vm271
          %vm302 = vmand %vm270, %vm272
          %vm303 = vmand %vm270, %vm273
          %vm304 = vcmp.lt.s32.totalorder %v238, 17
          %vm305 = vcmp.lt.s32.totalorder %v239, 17
          %vm306 = vcmp.lt.s32.totalorder %v240, 17
          %vm307 = vmand %vm274, %vm304
          %vm308 = vmand %vm275, %vm305
          %vm309 = vmand %vm276, %vm306
          %vm310 = vmand %vm277, %vm304
          %vm311 = vmand %vm278, %vm305
          %vm312 = vmand %vm279, %vm306
          %vm313 = vmand %vm280, %vm304
          %vm314 = vmand %vm281, %vm305
          %vm315 = vmand %vm282, %vm306
          %vm316 = vmand %vm283, %vm304
          %vm317 = vmand %vm284, %vm305
          %vm318 = vmand %vm285, %vm306
          %vm319 = vmand %vm286, %vm304
          %vm320 = vmand %vm287, %vm305
          %vm321 = vmand %vm288, %vm306
          %vm322 = vmand %vm289, %vm304
          %vm323 = vmand %vm290, %vm305
          %vm324 = vmand %vm291, %vm306
          %vm325 = vmand %vm292, %vm304
          %vm326 = vmand %vm293, %vm305
          %vm327 = vmand %vm294, %vm306
          %vm328 = vmand %vm295, %vm304
          %vm329 = vmand %vm296, %vm305
          %vm330 = vmand %vm297, %vm306
          %vm331 = vmand %vm298, %vm304
          %vm332 = vmand %vm299, %vm305
          %vm333 = vmand %vm300, %vm306
          %vm334 = vmand %vm301, %vm304
          %vm335 = vmand %vm302, %vm305
          %vm336 = vmand %vm303, %vm306
          %v337 = vsel %vm307, 1, 0
          %v338 = vsel %vm308, 1, 0
          %v339 = vsel %vm309, 1, 0
          %v340 = vsel %vm310, 1, 0
          %v341 = vsel %vm311, 1, 0
          %v342 = vsel %vm312, 1, 0
          %v343 = vsel %vm313, 1, 0
          %v344 = vsel %vm314, 1, 0
          %v345 = vsel %vm315, 1, 0
          %v346 = vsel %vm316, 1, 0
          %v347 = vsel %vm317, 1, 0
          %v348 = vsel %vm318, 1, 0
          %v349 = vsel %vm319, 1, 0
          %v350 = vsel %vm320, 1, 0
          %v351 = vsel %vm321, 1, 0
          %v352 = vsel %vm322, 1, 0
          %v353 = vsel %vm323, 1, 0
          %v354 = vsel %vm324, 1, 0
          %v355 = vsel %vm325, 1, 0
          %v356 = vsel %vm326, 1, 0
          %v357 = vsel %vm327, 1, 0
          %v358 = vsel %vm328, 1, 0
          %v359 = vsel %vm329, 1, 0
          %v360 = vsel %vm330, 1, 0
          %v361 = vsel %vm331, 1, 0
          %v362 = vsel %vm332, 1, 0
          %v363 = vsel %vm333, 1, 0
          %v364 = vsel %vm334, 1, 0
          %v365 = vsel %vm335, 1, 0
          %v366 = vsel %vm336, 1, 0
          %v367 = vcvt.s32.f32 %v337
          %v368 = vcvt.s32.f32 %v338
          %v369 = vcvt.s32.f32 %v339
          %v370 = vcvt.s32.f32 %v340
          %v371 = vcvt.s32.f32 %v341
          %v372 = vcvt.s32.f32 %v342
          %v373 = vcvt.s32.f32 %v343
          %v374 = vcvt.s32.f32 %v344
          %v375 = vcvt.s32.f32 %v345
          %v376 = vcvt.s32.f32 %v346
          %v377 = vcvt.s32.f32 %v347
          %v378 = vcvt.s32.f32 %v348
          %v379 = vcvt.s32.f32 %v349
          %v380 = vcvt.s32.f32 %v350
          %v381 = vcvt.s32.f32 %v351
          %v382 = vcvt.s32.f32 %v352
          %v383 = vcvt.s32.f32 %v353
          %v384 = vcvt.s32.f32 %v354
          %v385 = vcvt.s32.f32 %v355
          %v386 = vcvt.s32.f32 %v356
          %v387 = vcvt.s32.f32 %v357
          %v388 = vcvt.s32.f32 %v358
          %v389 = vcvt.s32.f32 %v359
          %v390 = vcvt.s32.f32 %v360
          %v391 = vcvt.s32.f32 %v361
          %v392 = vcvt.s32.f32 %v362
          %v393 = vcvt.s32.f32 %v363
          %v394 = vcvt.s32.f32 %v364
          %v395 = vcvt.s32.f32 %v365
          %v396 = vcvt.s32.f32 %v366
          %v397 = vxor.u32 %v197, 2147483648
          %v398 = vxor.u32 %v198, 2147483648
          %v399 = vxor.u32 %v199, 2147483648
          %v400 = vxor.u32 %v200, 2147483648
          %v401 = vxor.u32 %v201, 2147483648
          %v402 = vxor.u32 %v202, 2147483648
          %v403 = vxor.u32 %v203, 2147483648
          %v404 = vxor.u32 %v204, 2147483648
          %v405 = vxor.u32 %v205, 2147483648
          %v406 = vxor.u32 %v206, 2147483648
          %v407 = vxor.u32 %v207, 2147483648
          %v408 = vxor.u32 %v208, 2147483648
          %v409 = vxor.u32 %v209, 2147483648
          %v410 = vxor.u32 %v210, 2147483648
          %v411 = vxor.u32 %v211, 2147483648
          %v412 = vxor.u32 %v212, 2147483648
          %v413 = vxor.u32 %v213, 2147483648
          %v414 = vxor.u32 %v214, 2147483648
          %v415 = vxor.u32 %v215, 2147483648
          %v416 = vxor.u32 %v216, 2147483648
          %v417 = vxor.u32 %v217, 2147483648
          %v418 = vxor.u32 %v218, 2147483648
          %v419 = vxor.u32 %v219, 2147483648
          %v420 = vxor.u32 %v220, 2147483648
          %v421 = vxor.u32 %v221, 2147483648
          %v422 = vxor.u32 %v222, 2147483648
          %v423 = vxor.u32 %v223, 2147483648
          %v424 = vxor.u32 %v224, 2147483648
          %v425 = vxor.u32 %v225, 2147483648
          %v426 = vxor.u32 %v226, 2147483648
          %v427 = vmul.f32 %v397, 1.442695
          %v428 = vpow.pop %v427
          %v429 = vmul.f32 %v398, 1.442695
          %v430 = vpow.pop %v429
          %v431 = vmul.f32 %v399, 1.442695
          %v432 = vpow.pop %v431
          %v433 = vmul.f32 %v400, 1.442695
          %v434 = vpow.pop %v433
          %v435 = vmul.f32 %v401, 1.442695
          %v436 = vpow.pop %v435
          %v437 = vmul.f32 %v402, 1.442695
          %v438 = vpow.pop %v437
          %v439 = vmul.f32 %v403, 1.442695
          %v440 = vpow.pop %v439
          %v441 = vmul.f32 %v404, 1.442695
          %v442 = vpow.pop %v441
          %v443 = vmul.f32 %v405, 1.442695
          %v444 = vpow.pop %v443
          %v445 = vmul.f32 %v406, 1.442695
          %v446 = vpow.pop %v445
          %v447 = vmul.f32 %v407, 1.442695
          %v448 = vpow.pop %v447
          %v449 = vmul.f32 %v408, 1.442695
          %v450 = vpow.pop %v449
          %v451 = vmul.f32 %v409, 1.442695
          %v452 = vpow.pop %v451
          %v453 = vmul.f32 %v410, 1.442695
          %v454 = vpow.pop %v453
          %v455 = vmul.f32 %v411, 1.442695
          %v456 = vpow.pop %v455
          %v457 = vmul.f32 %v412, 1.442695
          %v458 = vpow.pop %v457
          %v459 = vmul.f32 %v413, 1.442695
          %v460 = vpow.pop %v459
          %v461 = vmul.f32 %v414, 1.442695
          %v462 = vpow.pop %v461
          %v463 = vmul.f32 %v415, 1.442695
          %v464 = vpow.pop %v463
          %v465 = vmul.f32 %v416, 1.442695
          %v466 = vpow.pop %v465
          %v467 = vmul.f32 %v417, 1.442695
          %v468 = vpow.pop %v467
          %v469 = vmul.f32 %v418, 1.442695
          %v470 = vpow.pop %v469
          %v471 = vmul.f32 %v419, 1.442695
          %v472 = vpow.pop %v471
          %v473 = vmul.f32 %v420, 1.442695
          %v474 = vpow.pop %v473
          %v475 = vmul.f32 %v421, 1.442695
          %v476 = vpow.pop %v475
          %v477 = vmul.f32 %v422, 1.442695
          %v478 = vpow.pop %v477
          %v479 = vmul.f32 %v423, 1.442695
          %v480 = vpow.pop %v479
          %v481 = vmul.f32 %v424, 1.442695
          %v482 = vpow.pop %v481
          %v483 = vmul.f32 %v425, 1.442695
          %v484 = vpow.pop %v483
          %v485 = vmul.f32 %v426, 1.442695
          %v486 = vpow.pop %v485
          %v487 = vadd.f32 %v428, 1.0
          %v488 = vadd.f32 %v430, 1.0
          %v489 = vadd.f32 %v432, 1.0
          %v490 = vadd.f32 %v434, 1.0
          %v491 = vadd.f32 %v436, 1.0
          %v492 = vadd.f32 %v438, 1.0
          %v493 = vadd.f32 %v440, 1.0
          %v494 = vadd.f32 %v442, 1.0
          %v495 = vadd.f32 %v444, 1.0
          %v496 = vadd.f32 %v446, 1.0
          %v497 = vadd.f32 %v448, 1.0
          %v498 = vadd.f32 %v450, 1.0
          %v499 = vadd.f32 %v452, 1.0
          %v500 = vadd.f32 %v454, 1.0
          %v501 = vadd.f32 %v456, 1.0
          %v502 = vadd.f32 %v458, 1.0
          %v503 = vadd.f32 %v460, 1.0
          %v504 = vadd.f32 %v462, 1.0
          %v505 = vadd.f32 %v464, 1.0
          %v506 = vadd.f32 %v466, 1.0
          %v507 = vadd.f32 %v468, 1.0
          %v508 = vadd.f32 %v470, 1.0
          %v509 = vadd.f32 %v472, 1.0
          %v510 = vadd.f32 %v474, 1.0
          %v511 = vadd.f32 %v476, 1.0
          %v512 = vadd.f32 %v478, 1.0
          %v513 = vadd.f32 %v480, 1.0
          %v514 = vadd.f32 %v482, 1.0
          %v515 = vadd.f32 %v484, 1.0
          %v516 = vadd.f32 %v486, 1.0
          %v517 = vrcp.pop %v487
          %v518 = vmul.f32 %v487, %v517
          %v519 = vsub.f32 1.0, %v518
          %v520 = vmul.f32 %v517, %v519
          %v521 = vadd.f32 %v517, %v520
          %vm522 = vweird.f32 %v487
          %vm523 = vweird.f32 %v517
          %vm524 = vmor %vm522, %vm523
          %v525 = vsel %vm524, %v517, %v521
          %v526 = vand.u32 2147483647, %v487
          %vm527 = vcmp.eq.f32.partialorder %v526, 8.507059e+37
          %v528 = vand.u32 %v487, 2147483648
          %v529 = vor.u32 1.1754944e-38, %v528
          %v530 = vsel %vm527, %v529, %v525
          %v531 = vmul.f32 1.0, %v530
          %v532 = vrcp.pop %v488
          %v533 = vmul.f32 %v488, %v532
          %v534 = vsub.f32 1.0, %v533
          %v535 = vmul.f32 %v532, %v534
          %v536 = vadd.f32 %v532, %v535
          %vm537 = vweird.f32 %v488
          %vm538 = vweird.f32 %v532
          %vm539 = vmor %vm537, %vm538
          %v540 = vsel %vm539, %v532, %v536
          %v541 = vand.u32 2147483647, %v488
          %vm542 = vcmp.eq.f32.partialorder %v541, 8.507059e+37
          %v543 = vand.u32 %v488, 2147483648
          %v544 = vor.u32 1.1754944e-38, %v543
          %v545 = vsel %vm542, %v544, %v540
          %v546 = vmul.f32 1.0, %v545
          %v547 = vrcp.pop %v489
          %v548 = vmul.f32 %v489, %v547
          %v549 = vsub.f32 1.0, %v548
          %v550 = vmul.f32 %v547, %v549
          %v551 = vadd.f32 %v547, %v550
          %vm552 = vweird.f32 %v489
          %vm553 = vweird.f32 %v547
          %vm554 = vmor %vm552, %vm553
          %v555 = vsel %vm554, %v547, %v551
          %v556 = vand.u32 2147483647, %v489
          %vm557 = vcmp.eq.f32.partialorder %v556, 8.507059e+37
          %v558 = vand.u32 %v489, 2147483648
          %v559 = vor.u32 1.1754944e-38, %v558
          %v560 = vsel %vm557, %v559, %v555
          %v561 = vmul.f32 1.0, %v560
          %v562 = vrcp.pop %v490
          %v563 = vmul.f32 %v490, %v562
          %v564 = vsub.f32 1.0, %v563
          %v565 = vmul.f32 %v562, %v564
          %v566 = vadd.f32 %v562, %v565
          %vm567 = vweird.f32 %v490
          %vm568 = vweird.f32 %v562
          %vm569 = vmor %vm567, %vm568
          %v570 = vsel %vm569, %v562, %v566
          %v571 = vand.u32 2147483647, %v490
          %vm572 = vcmp.eq.f32.partialorder %v571, 8.507059e+37
          %v573 = vand.u32 %v490, 2147483648
          %v574 = vor.u32 1.1754944e-38, %v573
          %v575 = vsel %vm572, %v574, %v570
          %v576 = vmul.f32 1.0, %v575
          %v577 = vrcp.pop %v491
          %v578 = vmul.f32 %v491, %v577
          %v579 = vsub.f32 1.0, %v578
          %v580 = vmul.f32 %v577, %v579
          %v581 = vadd.f32 %v577, %v580
          %vm582 = vweird.f32 %v491
          %vm583 = vweird.f32 %v577
          %vm584 = vmor %vm582, %vm583
          %v585 = vsel %vm584, %v577, %v581
          %v586 = vand.u32 2147483647, %v491
          %vm587 = vcmp.eq.f32.partialorder %v586, 8.507059e+37
          %v588 = vand.u32 %v491, 2147483648
          %v589 = vor.u32 1.1754944e-38, %v588
          %v590 = vsel %vm587, %v589, %v585
          %v591 = vmul.f32 1.0, %v590
          %v592 = vrcp.pop %v492
          %v593 = vmul.f32 %v492, %v592
          %v594 = vsub.f32 1.0, %v593
          %v595 = vmul.f32 %v592, %v594
          %v596 = vadd.f32 %v592, %v595
          %vm597 = vweird.f32 %v492
          %vm598 = vweird.f32 %v592
          %vm599 = vmor %vm597, %vm598
          %v600 = vsel %vm599, %v592, %v596
          %v601 = vand.u32 2147483647, %v492
          %vm602 = vcmp.eq.f32.partialorder %v601, 8.507059e+37
          %v603 = vand.u32 %v492, 2147483648
          %v604 = vor.u32 1.1754944e-38, %v603
          %v605 = vsel %vm602, %v604, %v600
          %v606 = vmul.f32 1.0, %v605
          %v607 = vrcp.pop %v493
          %v608 = vmul.f32 %v493, %v607
          %v609 = vsub.f32 1.0, %v608
          %v610 = vmul.f32 %v607, %v609
          %v611 = vadd.f32 %v607, %v610
          %vm612 = vweird.f32 %v493
          %vm613 = vweird.f32 %v607
          %vm614 = vmor %vm612, %vm613
          %v615 = vsel %vm614, %v607, %v611
          %v616 = vand.u32 2147483647, %v493
          %vm617 = vcmp.eq.f32.partialorder %v616, 8.507059e+37
          %v618 = vand.u32 %v493, 2147483648
          %v619 = vor.u32 1.1754944e-38, %v618
          %v620 = vsel %vm617, %v619, %v615
          %v621 = vmul.f32 1.0, %v620
          %v622 = vrcp.pop %v494
          %v623 = vmul.f32 %v494, %v622
          %v624 = vsub.f32 1.0, %v623
          %v625 = vmul.f32 %v622, %v624
          %v626 = vadd.f32 %v622, %v625
          %vm627 = vweird.f32 %v494
          %vm628 = vweird.f32 %v622
          %vm629 = vmor %vm627, %vm628
          %v630 = vsel %vm629, %v622, %v626
          %v631 = vand.u32 2147483647, %v494
          %vm632 = vcmp.eq.f32.partialorder %v631, 8.507059e+37
          %v633 = vand.u32 %v494, 2147483648
          %v634 = vor.u32 1.1754944e-38, %v633
          %v635 = vsel %vm632, %v634, %v630
          %v636 = vmul.f32 1.0, %v635
          %v637 = vrcp.pop %v495
          %v638 = vmul.f32 %v495, %v637
          %v639 = vsub.f32 1.0, %v638
          %v640 = vmul.f32 %v637, %v639
          %v641 = vadd.f32 %v637, %v640
          %vm642 = vweird.f32 %v495
          %vm643 = vweird.f32 %v637
          %vm644 = vmor %vm642, %vm643
          %v645 = vsel %vm644, %v637, %v641
          %v646 = vand.u32 2147483647, %v495
          %vm647 = vcmp.eq.f32.partialorder %v646, 8.507059e+37
          %v648 = vand.u32 %v495, 2147483648
          %v649 = vor.u32 1.1754944e-38, %v648
          %v650 = vsel %vm647, %v649, %v645
          %v651 = vmul.f32 1.0, %v650
          %v652 = vrcp.pop %v496
          %v653 = vmul.f32 %v496, %v652
          %v654 = vsub.f32 1.0, %v653
          %v655 = vmul.f32 %v652, %v654
          %v656 = vadd.f32 %v652, %v655
          %vm657 = vweird.f32 %v496
          %vm658 = vweird.f32 %v652
          %vm659 = vmor %vm657, %vm658
          %v660 = vsel %vm659, %v652, %v656
          %v661 = vand.u32 2147483647, %v496
          %vm662 = vcmp.eq.f32.partialorder %v661, 8.507059e+37
          %v663 = vand.u32 %v496, 2147483648
          %v664 = vor.u32 1.1754944e-38, %v663
          %v665 = vsel %vm662, %v664, %v660
          %v666 = vmul.f32 1.0, %v665
          %v667 = vrcp.pop %v497
          %v668 = vmul.f32 %v497, %v667
          %v669 = vsub.f32 1.0, %v668
          %v670 = vmul.f32 %v667, %v669
          %v671 = vadd.f32 %v667, %v670
          %vm672 = vweird.f32 %v497
          %vm673 = vweird.f32 %v667
          %vm674 = vmor %vm672, %vm673
          %v675 = vsel %vm674, %v667, %v671
          %v676 = vand.u32 2147483647, %v497
          %vm677 = vcmp.eq.f32.partialorder %v676, 8.507059e+37
          %v678 = vand.u32 %v497, 2147483648
          %v679 = vor.u32 1.1754944e-38, %v678
          %v680 = vsel %vm677, %v679, %v675
          %v681 = vmul.f32 1.0, %v680
          %v682 = vrcp.pop %v498
          %v683 = vmul.f32 %v498, %v682
          %v684 = vsub.f32 1.0, %v683
          %v685 = vmul.f32 %v682, %v684
          %v686 = vadd.f32 %v682, %v685
          %vm687 = vweird.f32 %v498
          %vm688 = vweird.f32 %v682
          %vm689 = vmor %vm687, %vm688
          %v690 = vsel %vm689, %v682, %v686
          %v691 = vand.u32 2147483647, %v498
          %vm692 = vcmp.eq.f32.partialorder %v691, 8.507059e+37
          %v693 = vand.u32 %v498, 2147483648
          %v694 = vor.u32 1.1754944e-38, %v693
          %v695 = vsel %vm692, %v694, %v690
          %v696 = vmul.f32 1.0, %v695
          %v697 = vrcp.pop %v499
          %v698 = vmul.f32 %v499, %v697
          %v699 = vsub.f32 1.0, %v698
          %v700 = vmul.f32 %v697, %v699
          %v701 = vadd.f32 %v697, %v700
          %vm702 = vweird.f32 %v499
          %vm703 = vweird.f32 %v697
          %vm704 = vmor %vm702, %vm703
          %v705 = vsel %vm704, %v697, %v701
          %v706 = vand.u32 2147483647, %v499
          %vm707 = vcmp.eq.f32.partialorder %v706, 8.507059e+37
          %v708 = vand.u32 %v499, 2147483648
          %v709 = vor.u32 1.1754944e-38, %v708
          %v710 = vsel %vm707, %v709, %v705
          %v711 = vmul.f32 1.0, %v710
          %v712 = vrcp.pop %v500
          %v713 = vmul.f32 %v500, %v712
          %v714 = vsub.f32 1.0, %v713
          %v715 = vmul.f32 %v712, %v714
          %v716 = vadd.f32 %v712, %v715
          %vm717 = vweird.f32 %v500
          %vm718 = vweird.f32 %v712
          %vm719 = vmor %vm717, %vm718
          %v720 = vsel %vm719, %v712, %v716
          %v721 = vand.u32 2147483647, %v500
          %vm722 = vcmp.eq.f32.partialorder %v721, 8.507059e+37
          %v723 = vand.u32 %v500, 2147483648
          %v724 = vor.u32 1.1754944e-38, %v723
          %v725 = vsel %vm722, %v724, %v720
          %v726 = vmul.f32 1.0, %v725
          %v727 = vrcp.pop %v501
          %v728 = vmul.f32 %v501, %v727
          %v729 = vsub.f32 1.0, %v728
          %v730 = vmul.f32 %v727, %v729
          %v731 = vadd.f32 %v727, %v730
          %vm732 = vweird.f32 %v501
          %vm733 = vweird.f32 %v727
          %vm734 = vmor %vm732, %vm733
          %v735 = vsel %vm734, %v727, %v731
          %v736 = vand.u32 2147483647, %v501
          %vm737 = vcmp.eq.f32.partialorder %v736, 8.507059e+37
          %v738 = vand.u32 %v501, 2147483648
          %v739 = vor.u32 1.1754944e-38, %v738
          %v740 = vsel %vm737, %v739, %v735
          %v741 = vmul.f32 1.0, %v740
          %v742 = vrcp.pop %v502
          %v743 = vmul.f32 %v502, %v742
          %v744 = vsub.f32 1.0, %v743
          %v745 = vmul.f32 %v742, %v744
          %v746 = vadd.f32 %v742, %v745
          %vm747 = vweird.f32 %v502
          %vm748 = vweird.f32 %v742
          %vm749 = vmor %vm747, %vm748
          %v750 = vsel %vm749, %v742, %v746
          %v751 = vand.u32 2147483647, %v502
          %vm752 = vcmp.eq.f32.partialorder %v751, 8.507059e+37
          %v753 = vand.u32 %v502, 2147483648
          %v754 = vor.u32 1.1754944e-38, %v753
          %v755 = vsel %vm752, %v754, %v750
          %v756 = vmul.f32 1.0, %v755
          %v757 = vrcp.pop %v503
          %v758 = vmul.f32 %v503, %v757
          %v759 = vsub.f32 1.0, %v758
          %v760 = vmul.f32 %v757, %v759
          %v761 = vadd.f32 %v757, %v760
          %vm762 = vweird.f32 %v503
          %vm763 = vweird.f32 %v757
          %vm764 = vmor %vm762, %vm763
          %v765 = vsel %vm764, %v757, %v761
          %v766 = vand.u32 2147483647, %v503
          %vm767 = vcmp.eq.f32.partialorder %v766, 8.507059e+37
          %v768 = vand.u32 %v503, 2147483648
          %v769 = vor.u32 1.1754944e-38, %v768
          %v770 = vsel %vm767, %v769, %v765
          %v771 = vmul.f32 1.0, %v770
          %v772 = vrcp.pop %v504
          %v773 = vmul.f32 %v504, %v772
          %v774 = vsub.f32 1.0, %v773
          %v775 = vmul.f32 %v772, %v774
          %v776 = vadd.f32 %v772, %v775
          %vm777 = vweird.f32 %v504
          %vm778 = vweird.f32 %v772
          %vm779 = vmor %vm777, %vm778
          %v780 = vsel %vm779, %v772, %v776
          %v781 = vand.u32 2147483647, %v504
          %vm782 = vcmp.eq.f32.partialorder %v781, 8.507059e+37
          %v783 = vand.u32 %v504, 2147483648
          %v784 = vor.u32 1.1754944e-38, %v783
          %v785 = vsel %vm782, %v784, %v780
          %v786 = vmul.f32 1.0, %v785
          %v787 = vrcp.pop %v505
          %v788 = vmul.f32 %v505, %v787
          %v789 = vsub.f32 1.0, %v788
          %v790 = vmul.f32 %v787, %v789
          %v791 = vadd.f32 %v787, %v790
          %vm792 = vweird.f32 %v505
          %vm793 = vweird.f32 %v787
          %vm794 = vmor %vm792, %vm793
          %v795 = vsel %vm794, %v787, %v791
          %v796 = vand.u32 2147483647, %v505
          %vm797 = vcmp.eq.f32.partialorder %v796, 8.507059e+37
          %v798 = vand.u32 %v505, 2147483648
          %v799 = vor.u32 1.1754944e-38, %v798
          %v800 = vsel %vm797, %v799, %v795
          %v801 = vmul.f32 1.0, %v800
          %v802 = vrcp.pop %v506
          %v803 = vmul.f32 %v506, %v802
          %v804 = vsub.f32 1.0, %v803
          %v805 = vmul.f32 %v802, %v804
          %v806 = vadd.f32 %v802, %v805
          %vm807 = vweird.f32 %v506
          %vm808 = vweird.f32 %v802
          %vm809 = vmor %vm807, %vm808
          %v810 = vsel %vm809, %v802, %v806
          %v811 = vand.u32 2147483647, %v506
          %vm812 = vcmp.eq.f32.partialorder %v811, 8.507059e+37
          %v813 = vand.u32 %v506, 2147483648
          %v814 = vor.u32 1.1754944e-38, %v813
          %v815 = vsel %vm812, %v814, %v810
          %v816 = vmul.f32 1.0, %v815
          %v817 = vrcp.pop %v507
          %v818 = vmul.f32 %v507, %v817
          %v819 = vsub.f32 1.0, %v818
          %v820 = vmul.f32 %v817, %v819
          %v821 = vadd.f32 %v817, %v820
          %vm822 = vweird.f32 %v507
          %vm823 = vweird.f32 %v817
          %vm824 = vmor %vm822, %vm823
          %v825 = vsel %vm824, %v817, %v821
          %v826 = vand.u32 2147483647, %v507
          %vm827 = vcmp.eq.f32.partialorder %v826, 8.507059e+37
          %v828 = vand.u32 %v507, 2147483648
          %v829 = vor.u32 1.1754944e-38, %v828
          %v830 = vsel %vm827, %v829, %v825
          %v831 = vmul.f32 1.0, %v830
          %v832 = vrcp.pop %v508
          %v833 = vmul.f32 %v508, %v832
          %v834 = vsub.f32 1.0, %v833
          %v835 = vmul.f32 %v832, %v834
          %v836 = vadd.f32 %v832, %v835
          %vm837 = vweird.f32 %v508
          %vm838 = vweird.f32 %v832
          %vm839 = vmor %vm837, %vm838
          %v840 = vsel %vm839, %v832, %v836
          %v841 = vand.u32 2147483647, %v508
          %vm842 = vcmp.eq.f32.partialorder %v841, 8.507059e+37
          %v843 = vand.u32 %v508, 2147483648
          %v844 = vor.u32 1.1754944e-38, %v843
          %v845 = vsel %vm842, %v844, %v840
          %v846 = vmul.f32 1.0, %v845
          %v847 = vrcp.pop %v509
          %v848 = vmul.f32 %v509, %v847
          %v849 = vsub.f32 1.0, %v848
          %v850 = vmul.f32 %v847, %v849
          %v851 = vadd.f32 %v847, %v850
          %vm852 = vweird.f32 %v509
          %vm853 = vweird.f32 %v847
          %vm854 = vmor %vm852, %vm853
          %v855 = vsel %vm854, %v847, %v851
          %v856 = vand.u32 2147483647, %v509
          %vm857 = vcmp.eq.f32.partialorder %v856, 8.507059e+37
          %v858 = vand.u32 %v509, 2147483648
          %v859 = vor.u32 1.1754944e-38, %v858
          %v860 = vsel %vm857, %v859, %v855
          %v861 = vmul.f32 1.0, %v860
          %v862 = vrcp.pop %v510
          %v863 = vmul.f32 %v510, %v862
          %v864 = vsub.f32 1.0, %v863
          %v865 = vmul.f32 %v862, %v864
          %v866 = vadd.f32 %v862, %v865
          %vm867 = vweird.f32 %v510
          %vm868 = vweird.f32 %v862
          %vm869 = vmor %vm867, %vm868
          %v870 = vsel %vm869, %v862, %v866
          %v871 = vand.u32 2147483647, %v510
          %vm872 = vcmp.eq.f32.partialorder %v871, 8.507059e+37
          %v873 = vand.u32 %v510, 2147483648
          %v874 = vor.u32 1.1754944e-38, %v873
          %v875 = vsel %vm872, %v874, %v870
          %v876 = vmul.f32 1.0, %v875
          %v877 = vrcp.pop %v511
          %v878 = vmul.f32 %v511, %v877
          %v879 = vsub.f32 1.0, %v878
          %v880 = vmul.f32 %v877, %v879
          %v881 = vadd.f32 %v877, %v880
          %vm882 = vweird.f32 %v511
          %vm883 = vweird.f32 %v877
          %vm884 = vmor %vm882, %vm883
          %v885 = vsel %vm884, %v877, %v881
          %v886 = vand.u32 2147483647, %v511
          %vm887 = vcmp.eq.f32.partialorder %v886, 8.507059e+37
          %v888 = vand.u32 %v511, 2147483648
          %v889 = vor.u32 1.1754944e-38, %v888
          %v890 = vsel %vm887, %v889, %v885
          %v891 = vmul.f32 1.0, %v890
          %v892 = vrcp.pop %v512
          %v893 = vmul.f32 %v512, %v892
          %v894 = vsub.f32 1.0, %v893
          %v895 = vmul.f32 %v892, %v894
          %v896 = vadd.f32 %v892, %v895
          %vm897 = vweird.f32 %v512
          %vm898 = vweird.f32 %v892
          %vm899 = vmor %vm897, %vm898
          %v900 = vsel %vm899, %v892, %v896
          %v901 = vand.u32 2147483647, %v512
          %vm902 = vcmp.eq.f32.partialorder %v901, 8.507059e+37
          %v903 = vand.u32 %v512, 2147483648
          %v904 = vor.u32 1.1754944e-38, %v903
          %v905 = vsel %vm902, %v904, %v900
          %v906 = vmul.f32 1.0, %v905
          %v907 = vrcp.pop %v513
          %v908 = vmul.f32 %v513, %v907
          %v909 = vsub.f32 1.0, %v908
          %v910 = vmul.f32 %v907, %v909
          %v911 = vadd.f32 %v907, %v910
          %vm912 = vweird.f32 %v513
          %vm913 = vweird.f32 %v907
          %vm914 = vmor %vm912, %vm913
          %v915 = vsel %vm914, %v907, %v911
          %v916 = vand.u32 2147483647, %v513
          %vm917 = vcmp.eq.f32.partialorder %v916, 8.507059e+37
          %v918 = vand.u32 %v513, 2147483648
          %v919 = vor.u32 1.1754944e-38, %v918
          %v920 = vsel %vm917, %v919, %v915
          %v921 = vmul.f32 1.0, %v920
          %v922 = vrcp.pop %v514
          %v923 = vmul.f32 %v514, %v922
          %v924 = vsub.f32 1.0, %v923
          %v925 = vmul.f32 %v922, %v924
          %v926 = vadd.f32 %v922, %v925
          %vm927 = vweird.f32 %v514
          %vm928 = vweird.f32 %v922
          %vm929 = vmor %vm927, %vm928
          %v930 = vsel %vm929, %v922, %v926
          %v931 = vand.u32 2147483647, %v514
          %vm932 = vcmp.eq.f32.partialorder %v931, 8.507059e+37
          %v933 = vand.u32 %v514, 2147483648
          %v934 = vor.u32 1.1754944e-38, %v933
          %v935 = vsel %vm932, %v934, %v930
          %v936 = vmul.f32 1.0, %v935
          %v937 = vrcp.pop %v515
          %v938 = vmul.f32 %v515, %v937
          %v939 = vsub.f32 1.0, %v938
          %v940 = vmul.f32 %v937, %v939
          %v941 = vadd.f32 %v937, %v940
          %vm942 = vweird.f32 %v515
          %vm943 = vweird.f32 %v937
          %vm944 = vmor %vm942, %vm943
          %v945 = vsel %vm944, %v937, %v941
          %v946 = vand.u32 2147483647, %v515
          %vm947 = vcmp.eq.f32.partialorder %v946, 8.507059e+37
          %v948 = vand.u32 %v515, 2147483648
          %v949 = vor.u32 1.1754944e-38, %v948
          %v950 = vsel %vm947, %v949, %v945
          %v951 = vmul.f32 1.0, %v950
          %v952 = vrcp.pop %v516
          %v953 = vmul.f32 %v516, %v952
          %v954 = vsub.f32 1.0, %v953
          %v955 = vmul.f32 %v952, %v954
          %v956 = vadd.f32 %v952, %v955
          %vm957 = vweird.f32 %v516
          %vm958 = vweird.f32 %v952
          %vm959 = vmor %vm957, %vm958
          %v960 = vsel %vm959, %v952, %v956
          %v961 = vand.u32 2147483647, %v516
          %vm962 = vcmp.eq.f32.partialorder %v961, 8.507059e+37
          %v963 = vand.u32 %v516, 2147483648
          %v964 = vor.u32 1.1754944e-38, %v963
          %v965 = vsel %vm962, %v964, %v960
          %v966 = vmul.f32 1.0, %v965
          %v967 = vmul.f32 %v197, %v531
          %v968 = vmul.f32 %v198, %v546
          %v969 = vmul.f32 %v199, %v561
          %v970 = vmul.f32 %v200, %v576
          %v971 = vmul.f32 %v201, %v591
          %v972 = vmul.f32 %v202, %v606
          %v973 = vmul.f32 %v203, %v621
          %v974 = vmul.f32 %v204, %v636
          %v975 = vmul.f32 %v205, %v651
          %v976 = vmul.f32 %v206, %v666
          %v977 = vmul.f32 %v207, %v681
          %v978 = vmul.f32 %v208, %v696
          %v979 = vmul.f32 %v209, %v711
          %v980 = vmul.f32 %v210, %v726
          %v981 = vmul.f32 %v211, %v741
          %v982 = vmul.f32 %v212, %v756
          %v983 = vmul.f32 %v213, %v771
          %v984 = vmul.f32 %v214, %v786
          %v985 = vmul.f32 %v215, %v801
          %v986 = vmul.f32 %v216, %v816
          %v987 = vmul.f32 %v217, %v831
          %v988 = vmul.f32 %v218, %v846
          %v989 = vmul.f32 %v219, %v861
          %v990 = vmul.f32 %v220, %v876
          %v991 = vmul.f32 %v221, %v891
          %v992 = vmul.f32 %v222, %v906
          %v993 = vmul.f32 %v223, %v921
          %v994 = vmul.f32 %v224, %v936
          %v995 = vmul.f32 %v225, %v951
          %v996 = vmul.f32 %v226, %v966
          %v997 = vtanh.pop %v197
          %v998 = vtanh.pop %v198
          %v999 = vtanh.pop %v199
          %v1000 = vtanh.pop %v200
          %v1001 = vtanh.pop %v201
          %v1002 = vtanh.pop %v202
          %v1003 = vtanh.pop %v203
          %v1004 = vtanh.pop %v204
          %v1005 = vtanh.pop %v205
          %v1006 = vtanh.pop %v206
          %v1007 = vtanh.pop %v207
          %v1008 = vtanh.pop %v208
          %v1009 = vtanh.pop %v209
          %v1010 = vtanh.pop %v210
          %v1011 = vtanh.pop %v211
          %v1012 = vtanh.pop %v212
          %v1013 = vtanh.pop %v213
          %v1014 = vtanh.pop %v214
          %v1015 = vtanh.pop %v215
          %v1016 = vtanh.pop %v216
          %v1017 = vtanh.pop %v217
          %v1018 = vtanh.pop %v218
          %v1019 = vtanh.pop %v219
          %v1020 = vtanh.pop %v220
          %v1021 = vtanh.pop %v221
          %v1022 = vtanh.pop %v222
          %v1023 = vtanh.pop %v223
          %v1024 = vtanh.pop %v224
          %v1025 = vtanh.pop %v225
          %v1026 = vtanh.pop %v226
          %v1027 = vxor.u32 %v367, 2147483648
          %v1028 = vxor.u32 %v368, 2147483648
          %v1029 = vxor.u32 %v369, 2147483648
          %v1030 = vxor.u32 %v370, 2147483648
          %v1031 = vxor.u32 %v371, 2147483648
          %v1032 = vxor.u32 %v372, 2147483648
          %v1033 = vxor.u32 %v373, 2147483648
          %v1034 = vxor.u32 %v374, 2147483648
          %v1035 = vxor.u32 %v375, 2147483648
          %v1036 = vxor.u32 %v376, 2147483648
          %v1037 = vxor.u32 %v377, 2147483648
          %v1038 = vxor.u32 %v378, 2147483648
          %v1039 = vxor.u32 %v379, 2147483648
          %v1040 = vxor.u32 %v380, 2147483648
          %v1041 = vxor.u32 %v381, 2147483648
          %v1042 = vxor.u32 %v382, 2147483648
          %v1043 = vxor.u32 %v383, 2147483648
          %v1044 = vxor.u32 %v384, 2147483648
          %v1045 = vxor.u32 %v385, 2147483648
          %v1046 = vxor.u32 %v386, 2147483648
          %v1047 = vxor.u32 %v387, 2147483648
          %v1048 = vxor.u32 %v388, 2147483648
          %v1049 = vxor.u32 %v389, 2147483648
          %v1050 = vxor.u32 %v390, 2147483648
          %v1051 = vxor.u32 %v391, 2147483648
          %v1052 = vxor.u32 %v392, 2147483648
          %v1053 = vxor.u32 %v393, 2147483648
          %v1054 = vxor.u32 %v394, 2147483648
          %v1055 = vxor.u32 %v395, 2147483648
          %v1056 = vxor.u32 %v396, 2147483648
          %v1057 = vmul.f32 %v1027, 1.442695
          %v1058 = vpow.pop %v1057
          %v1059 = vmul.f32 %v1028, 1.442695
          %v1060 = vpow.pop %v1059
          %v1061 = vmul.f32 %v1029, 1.442695
          %v1062 = vpow.pop %v1061
          %v1063 = vmul.f32 %v1030, 1.442695
          %v1064 = vpow.pop %v1063
          %v1065 = vmul.f32 %v1031, 1.442695
          %v1066 = vpow.pop %v1065
          %v1067 = vmul.f32 %v1032, 1.442695
          %v1068 = vpow.pop %v1067
          %v1069 = vmul.f32 %v1033, 1.442695
          %v1070 = vpow.pop %v1069
          %v1071 = vmul.f32 %v1034, 1.442695
          %v1072 = vpow.pop %v1071
          %v1073 = vmul.f32 %v1035, 1.442695
          %v1074 = vpow.pop %v1073
          %v1075 = vmul.f32 %v1036, 1.442695
          %v1076 = vpow.pop %v1075
          %v1077 = vmul.f32 %v1037, 1.442695
          %v1078 = vpow.pop %v1077
          %v1079 = vmul.f32 %v1038, 1.442695
          %v1080 = vpow.pop %v1079
          %v1081 = vmul.f32 %v1039, 1.442695
          %v1082 = vpow.pop %v1081
          %v1083 = vmul.f32 %v1040, 1.442695
          %v1084 = vpow.pop %v1083
          %v1085 = vmul.f32 %v1041, 1.442695
          %v1086 = vpow.pop %v1085
          %v1087 = vmul.f32 %v1042, 1.442695
          %v1088 = vpow.pop %v1087
          %v1089 = vmul.f32 %v1043, 1.442695
          %v1090 = vpow.pop %v1089
          %v1091 = vmul.f32 %v1044, 1.442695
          %v1092 = vpow.pop %v1091
          %v1093 = vmul.f32 %v1045, 1.442695
          %v1094 = vpow.pop %v1093
          %v1095 = vmul.f32 %v1046, 1.442695
          %v1096 = vpow.pop %v1095
          %v1097 = vmul.f32 %v1047, 1.442695
          %v1098 = vpow.pop %v1097
          %v1099 = vmul.f32 %v1048, 1.442695
          %v1100 = vpow.pop %v1099
          %v1101 = vmul.f32 %v1049, 1.442695
          %v1102 = vpow.pop %v1101
          %v1103 = vmul.f32 %v1050, 1.442695
          %v1104 = vpow.pop %v1103
          %v1105 = vmul.f32 %v1051, 1.442695
          %v1106 = vpow.pop %v1105
          %v1107 = vmul.f32 %v1052, 1.442695
          %v1108 = vpow.pop %v1107
          %v1109 = vmul.f32 %v1053, 1.442695
          %v1110 = vpow.pop %v1109
          %v1111 = vmul.f32 %v1054, 1.442695
          %v1112 = vpow.pop %v1111
          %v1113 = vmul.f32 %v1055, 1.442695
          %v1114 = vpow.pop %v1113
          %v1115 = vmul.f32 %v1056, 1.442695
          %v1116 = vpow.pop %v1115
          %v1117 = vadd.f32 %v1058, 1.0
          %v1118 = vadd.f32 %v1060, 1.0
          %v1119 = vadd.f32 %v1062, 1.0
          %v1120 = vadd.f32 %v1064, 1.0
          %v1121 = vadd.f32 %v1066, 1.0
          %v1122 = vadd.f32 %v1068, 1.0
          %v1123 = vadd.f32 %v1070, 1.0
          %v1124 = vadd.f32 %v1072, 1.0
          %v1125 = vadd.f32 %v1074, 1.0
          %v1126 = vadd.f32 %v1076, 1.0
          %v1127 = vadd.f32 %v1078, 1.0
          %v1128 = vadd.f32 %v1080, 1.0
          %v1129 = vadd.f32 %v1082, 1.0
          %v1130 = vadd.f32 %v1084, 1.0
          %v1131 = vadd.f32 %v1086, 1.0
          %v1132 = vadd.f32 %v1088, 1.0
          %v1133 = vadd.f32 %v1090, 1.0
          %v1134 = vadd.f32 %v1092, 1.0
          %v1135 = vadd.f32 %v1094, 1.0
          %v1136 = vadd.f32 %v1096, 1.0
          %v1137 = vadd.f32 %v1098, 1.0
          %v1138 = vadd.f32 %v1100, 1.0
          %v1139 = vadd.f32 %v1102, 1.0
          %v1140 = vadd.f32 %v1104, 1.0
          %v1141 = vadd.f32 %v1106, 1.0
          %v1142 = vadd.f32 %v1108, 1.0
          %v1143 = vadd.f32 %v1110, 1.0
          %v1144 = vadd.f32 %v1112, 1.0
          %v1145 = vadd.f32 %v1114, 1.0
          %v1146 = vadd.f32 %v1116, 1.0
          %v1147 = vrcp.pop %v1117
          %v1148 = vmul.f32 %v1117, %v1147
          %v1149 = vsub.f32 1.0, %v1148
          %v1150 = vmul.f32 %v1147, %v1149
          %v1151 = vadd.f32 %v1147, %v1150
          %vm1152 = vweird.f32 %v1117
          %vm1153 = vweird.f32 %v1147
          %vm1154 = vmor %vm1152, %vm1153
          %v1155 = vsel %vm1154, %v1147, %v1151
          %v1156 = vand.u32 2147483647, %v1117
          %vm1157 = vcmp.eq.f32.partialorder %v1156, 8.507059e+37
          %v1158 = vand.u32 %v1117, 2147483648
          %v1159 = vor.u32 1.1754944e-38, %v1158
          %v1160 = vsel %vm1157, %v1159, %v1155
          %v1161 = vmul.f32 1.0, %v1160
          %v1162 = vrcp.pop %v1118
          %v1163 = vmul.f32 %v1118, %v1162
          %v1164 = vsub.f32 1.0, %v1163
          %v1165 = vmul.f32 %v1162, %v1164
          %v1166 = vadd.f32 %v1162, %v1165
          %vm1167 = vweird.f32 %v1118
          %vm1168 = vweird.f32 %v1162
          %vm1169 = vmor %vm1167, %vm1168
          %v1170 = vsel %vm1169, %v1162, %v1166
          %v1171 = vand.u32 2147483647, %v1118
          %vm1172 = vcmp.eq.f32.partialorder %v1171, 8.507059e+37
          %v1173 = vand.u32 %v1118, 2147483648
          %v1174 = vor.u32 1.1754944e-38, %v1173
          %v1175 = vsel %vm1172, %v1174, %v1170
          %v1176 = vmul.f32 1.0, %v1175
          %v1177 = vrcp.pop %v1119
          %v1178 = vmul.f32 %v1119, %v1177
          %v1179 = vsub.f32 1.0, %v1178
          %v1180 = vmul.f32 %v1177, %v1179
          %v1181 = vadd.f32 %v1177, %v1180
          %vm1182 = vweird.f32 %v1119
          %vm1183 = vweird.f32 %v1177
          %vm1184 = vmor %vm1182, %vm1183
          %v1185 = vsel %vm1184, %v1177, %v1181
          %v1186 = vand.u32 2147483647, %v1119
          %vm1187 = vcmp.eq.f32.partialorder %v1186, 8.507059e+37
          %v1188 = vand.u32 %v1119, 2147483648
          %v1189 = vor.u32 1.1754944e-38, %v1188
          %v1190 = vsel %vm1187, %v1189, %v1185
          %v1191 = vmul.f32 1.0, %v1190
          %v1192 = vrcp.pop %v1120
          %v1193 = vmul.f32 %v1120, %v1192
          %v1194 = vsub.f32 1.0, %v1193
          %v1195 = vmul.f32 %v1192, %v1194
          %v1196 = vadd.f32 %v1192, %v1195
          %vm1197 = vweird.f32 %v1120
          %vm1198 = vweird.f32 %v1192
          %vm1199 = vmor %vm1197, %vm1198
          %v1200 = vsel %vm1199, %v1192, %v1196
          %v1201 = vand.u32 2147483647, %v1120
          %vm1202 = vcmp.eq.f32.partialorder %v1201, 8.507059e+37
          %v1203 = vand.u32 %v1120, 2147483648
          %v1204 = vor.u32 1.1754944e-38, %v1203
          %v1205 = vsel %vm1202, %v1204, %v1200
          %v1206 = vmul.f32 1.0, %v1205
          %v1207 = vrcp.pop %v1121
          %v1208 = vmul.f32 %v1121, %v1207
          %v1209 = vsub.f32 1.0, %v1208
          %v1210 = vmul.f32 %v1207, %v1209
          %v1211 = vadd.f32 %v1207, %v1210
          %vm1212 = vweird.f32 %v1121
          %vm1213 = vweird.f32 %v1207
          %vm1214 = vmor %vm1212, %vm1213
          %v1215 = vsel %vm1214, %v1207, %v1211
          %v1216 = vand.u32 2147483647, %v1121
          %vm1217 = vcmp.eq.f32.partialorder %v1216, 8.507059e+37
          %v1218 = vand.u32 %v1121, 2147483648
          %v1219 = vor.u32 1.1754944e-38, %v1218
          %v1220 = vsel %vm1217, %v1219, %v1215
          %v1221 = vmul.f32 1.0, %v1220
          %v1222 = vrcp.pop %v1122
          %v1223 = vmul.f32 %v1122, %v1222
          %v1224 = vsub.f32 1.0, %v1223
          %v1225 = vmul.f32 %v1222, %v1224
          %v1226 = vadd.f32 %v1222, %v1225
          %vm1227 = vweird.f32 %v1122
          %vm1228 = vweird.f32 %v1222
          %vm1229 = vmor %vm1227, %vm1228
          %v1230 = vsel %vm1229, %v1222, %v1226
          %v1231 = vand.u32 2147483647, %v1122
          %vm1232 = vcmp.eq.f32.partialorder %v1231, 8.507059e+37
          %v1233 = vand.u32 %v1122, 2147483648
          %v1234 = vor.u32 1.1754944e-38, %v1233
          %v1235 = vsel %vm1232, %v1234, %v1230
          %v1236 = vmul.f32 1.0, %v1235
          %v1237 = vrcp.pop %v1123
          %v1238 = vmul.f32 %v1123, %v1237
          %v1239 = vsub.f32 1.0, %v1238
          %v1240 = vmul.f32 %v1237, %v1239
          %v1241 = vadd.f32 %v1237, %v1240
          %vm1242 = vweird.f32 %v1123
          %vm1243 = vweird.f32 %v1237
          %vm1244 = vmor %vm1242, %vm1243
          %v1245 = vsel %vm1244, %v1237, %v1241
          %v1246 = vand.u32 2147483647, %v1123
          %vm1247 = vcmp.eq.f32.partialorder %v1246, 8.507059e+37
          %v1248 = vand.u32 %v1123, 2147483648
          %v1249 = vor.u32 1.1754944e-38, %v1248
          %v1250 = vsel %vm1247, %v1249, %v1245
          %v1251 = vmul.f32 1.0, %v1250
          %v1252 = vrcp.pop %v1124
          %v1253 = vmul.f32 %v1124, %v1252
          %v1254 = vsub.f32 1.0, %v1253
          %v1255 = vmul.f32 %v1252, %v1254
          %v1256 = vadd.f32 %v1252, %v1255
          %vm1257 = vweird.f32 %v1124
          %vm1258 = vweird.f32 %v1252
          %vm1259 = vmor %vm1257, %vm1258
          %v1260 = vsel %vm1259, %v1252, %v1256
          %v1261 = vand.u32 2147483647, %v1124
          %vm1262 = vcmp.eq.f32.partialorder %v1261, 8.507059e+37
          %v1263 = vand.u32 %v1124, 2147483648
          %v1264 = vor.u32 1.1754944e-38, %v1263
          %v1265 = vsel %vm1262, %v1264, %v1260
          %v1266 = vmul.f32 1.0, %v1265
          %v1267 = vrcp.pop %v1125
          %v1268 = vmul.f32 %v1125, %v1267
          %v1269 = vsub.f32 1.0, %v1268
          %v1270 = vmul.f32 %v1267, %v1269
          %v1271 = vadd.f32 %v1267, %v1270
          %vm1272 = vweird.f32 %v1125
          %vm1273 = vweird.f32 %v1267
          %vm1274 = vmor %vm1272, %vm1273
          %v1275 = vsel %vm1274, %v1267, %v1271
          %v1276 = vand.u32 2147483647, %v1125
          %vm1277 = vcmp.eq.f32.partialorder %v1276, 8.507059e+37
          %v1278 = vand.u32 %v1125, 2147483648
          %v1279 = vor.u32 1.1754944e-38, %v1278
          %v1280 = vsel %vm1277, %v1279, %v1275
          %v1281 = vmul.f32 1.0, %v1280
          %v1282 = vrcp.pop %v1126
          %v1283 = vmul.f32 %v1126, %v1282
          %v1284 = vsub.f32 1.0, %v1283
          %v1285 = vmul.f32 %v1282, %v1284
          %v1286 = vadd.f32 %v1282, %v1285
          %vm1287 = vweird.f32 %v1126
          %vm1288 = vweird.f32 %v1282
          %vm1289 = vmor %vm1287, %vm1288
          %v1290 = vsel %vm1289, %v1282, %v1286
          %v1291 = vand.u32 2147483647, %v1126
          %vm1292 = vcmp.eq.f32.partialorder %v1291, 8.507059e+37
          %v1293 = vand.u32 %v1126, 2147483648
          %v1294 = vor.u32 1.1754944e-38, %v1293
          %v1295 = vsel %vm1292, %v1294, %v1290
          %v1296 = vmul.f32 1.0, %v1295
          %v1297 = vrcp.pop %v1127
          %v1298 = vmul.f32 %v1127, %v1297
          %v1299 = vsub.f32 1.0, %v1298
          %v1300 = vmul.f32 %v1297, %v1299
          %v1301 = vadd.f32 %v1297, %v1300
          %vm1302 = vweird.f32 %v1127
          %vm1303 = vweird.f32 %v1297
          %vm1304 = vmor %vm1302, %vm1303
          %v1305 = vsel %vm1304, %v1297, %v1301
          %v1306 = vand.u32 2147483647, %v1127
          %vm1307 = vcmp.eq.f32.partialorder %v1306, 8.507059e+37
          %v1308 = vand.u32 %v1127, 2147483648
          %v1309 = vor.u32 1.1754944e-38, %v1308
          %v1310 = vsel %vm1307, %v1309, %v1305
          %v1311 = vmul.f32 1.0, %v1310
          %v1312 = vrcp.pop %v1128
          %v1313 = vmul.f32 %v1128, %v1312
          %v1314 = vsub.f32 1.0, %v1313
          %v1315 = vmul.f32 %v1312, %v1314
          %v1316 = vadd.f32 %v1312, %v1315
          %vm1317 = vweird.f32 %v1128
          %vm1318 = vweird.f32 %v1312
          %vm1319 = vmor %vm1317, %vm1318
          %v1320 = vsel %vm1319, %v1312, %v1316
          %v1321 = vand.u32 2147483647, %v1128
          %vm1322 = vcmp.eq.f32.partialorder %v1321, 8.507059e+37
          %v1323 = vand.u32 %v1128, 2147483648
          %v1324 = vor.u32 1.1754944e-38, %v1323
          %v1325 = vsel %vm1322, %v1324, %v1320
          %v1326 = vmul.f32 1.0, %v1325
          %v1327 = vrcp.pop %v1129
          %v1328 = vmul.f32 %v1129, %v1327
          %v1329 = vsub.f32 1.0, %v1328
          %v1330 = vmul.f32 %v1327, %v1329
          %v1331 = vadd.f32 %v1327, %v1330
          %vm1332 = vweird.f32 %v1129
          %vm1333 = vweird.f32 %v1327
          %vm1334 = vmor %vm1332, %vm1333
          %v1335 = vsel %vm1334, %v1327, %v1331
          %v1336 = vand.u32 2147483647, %v1129
          %vm1337 = vcmp.eq.f32.partialorder %v1336, 8.507059e+37
          %v1338 = vand.u32 %v1129, 2147483648
          %v1339 = vor.u32 1.1754944e-38, %v1338
          %v1340 = vsel %vm1337, %v1339, %v1335
          %v1341 = vmul.f32 1.0, %v1340
          %v1342 = vrcp.pop %v1130
          %v1343 = vmul.f32 %v1130, %v1342
          %v1344 = vsub.f32 1.0, %v1343
          %v1345 = vmul.f32 %v1342, %v1344
          %v1346 = vadd.f32 %v1342, %v1345
          %vm1347 = vweird.f32 %v1130
          %vm1348 = vweird.f32 %v1342
          %vm1349 = vmor %vm1347, %vm1348
          %v1350 = vsel %vm1349, %v1342, %v1346
          %v1351 = vand.u32 2147483647, %v1130
          %vm1352 = vcmp.eq.f32.partialorder %v1351, 8.507059e+37
          %v1353 = vand.u32 %v1130, 2147483648
          %v1354 = vor.u32 1.1754944e-38, %v1353
          %v1355 = vsel %vm1352, %v1354, %v1350
          %v1356 = vmul.f32 1.0, %v1355
          %v1357 = vrcp.pop %v1131
          %v1358 = vmul.f32 %v1131, %v1357
          %v1359 = vsub.f32 1.0, %v1358
          %v1360 = vmul.f32 %v1357, %v1359
          %v1361 = vadd.f32 %v1357, %v1360
          %vm1362 = vweird.f32 %v1131
          %vm1363 = vweird.f32 %v1357
          %vm1364 = vmor %vm1362, %vm1363
          %v1365 = vsel %vm1364, %v1357, %v1361
          %v1366 = vand.u32 2147483647, %v1131
          %vm1367 = vcmp.eq.f32.partialorder %v1366, 8.507059e+37
          %v1368 = vand.u32 %v1131, 2147483648
          %v1369 = vor.u32 1.1754944e-38, %v1368
          %v1370 = vsel %vm1367, %v1369, %v1365
          %v1371 = vmul.f32 1.0, %v1370
          %v1372 = vrcp.pop %v1132
          %v1373 = vmul.f32 %v1132, %v1372
          %v1374 = vsub.f32 1.0, %v1373
          %v1375 = vmul.f32 %v1372, %v1374
          %v1376 = vadd.f32 %v1372, %v1375
          %vm1377 = vweird.f32 %v1132
          %vm1378 = vweird.f32 %v1372
          %vm1379 = vmor %vm1377, %vm1378
          %v1380 = vsel %vm1379, %v1372, %v1376
          %v1381 = vand.u32 2147483647, %v1132
          %vm1382 = vcmp.eq.f32.partialorder %v1381, 8.507059e+37
          %v1383 = vand.u32 %v1132, 2147483648
          %v1384 = vor.u32 1.1754944e-38, %v1383
          %v1385 = vsel %vm1382, %v1384, %v1380
          %v1386 = vmul.f32 1.0, %v1385
          %v1387 = vrcp.pop %v1133
          %v1388 = vmul.f32 %v1133, %v1387
          %v1389 = vsub.f32 1.0, %v1388
          %v1390 = vmul.f32 %v1387, %v1389
          %v1391 = vadd.f32 %v1387, %v1390
          %vm1392 = vweird.f32 %v1133
          %vm1393 = vweird.f32 %v1387
          %vm1394 = vmor %vm1392, %vm1393
          %v1395 = vsel %vm1394, %v1387, %v1391
          %v1396 = vand.u32 2147483647, %v1133
          %vm1397 = vcmp.eq.f32.partialorder %v1396, 8.507059e+37
          %v1398 = vand.u32 %v1133, 2147483648
          %v1399 = vor.u32 1.1754944e-38, %v1398
          %v1400 = vsel %vm1397, %v1399, %v1395
          %v1401 = vmul.f32 1.0, %v1400
          %v1402 = vrcp.pop %v1134
          %v1403 = vmul.f32 %v1134, %v1402
          %v1404 = vsub.f32 1.0, %v1403
          %v1405 = vmul.f32 %v1402, %v1404
          %v1406 = vadd.f32 %v1402, %v1405
          %vm1407 = vweird.f32 %v1134
          %vm1408 = vweird.f32 %v1402
          %vm1409 = vmor %vm1407, %vm1408
          %v1410 = vsel %vm1409, %v1402, %v1406
          %v1411 = vand.u32 2147483647, %v1134
          %vm1412 = vcmp.eq.f32.partialorder %v1411, 8.507059e+37
          %v1413 = vand.u32 %v1134, 2147483648
          %v1414 = vor.u32 1.1754944e-38, %v1413
          %v1415 = vsel %vm1412, %v1414, %v1410
          %v1416 = vmul.f32 1.0, %v1415
          %v1417 = vrcp.pop %v1135
          %v1418 = vmul.f32 %v1135, %v1417
          %v1419 = vsub.f32 1.0, %v1418
          %v1420 = vmul.f32 %v1417, %v1419
          %v1421 = vadd.f32 %v1417, %v1420
          %vm1422 = vweird.f32 %v1135
          %vm1423 = vweird.f32 %v1417
          %vm1424 = vmor %vm1422, %vm1423
          %v1425 = vsel %vm1424, %v1417, %v1421
          %v1426 = vand.u32 2147483647, %v1135
          %vm1427 = vcmp.eq.f32.partialorder %v1426, 8.507059e+37
          %v1428 = vand.u32 %v1135, 2147483648
          %v1429 = vor.u32 1.1754944e-38, %v1428
          %v1430 = vsel %vm1427, %v1429, %v1425
          %v1431 = vmul.f32 1.0, %v1430
          %v1432 = vrcp.pop %v1136
          %v1433 = vmul.f32 %v1136, %v1432
          %v1434 = vsub.f32 1.0, %v1433
          %v1435 = vmul.f32 %v1432, %v1434
          %v1436 = vadd.f32 %v1432, %v1435
          %vm1437 = vweird.f32 %v1136
          %vm1438 = vweird.f32 %v1432
          %vm1439 = vmor %vm1437, %vm1438
          %v1440 = vsel %vm1439, %v1432, %v1436
          %v1441 = vand.u32 2147483647, %v1136
          %vm1442 = vcmp.eq.f32.partialorder %v1441, 8.507059e+37
          %v1443 = vand.u32 %v1136, 2147483648
          %v1444 = vor.u32 1.1754944e-38, %v1443
          %v1445 = vsel %vm1442, %v1444, %v1440
          %v1446 = vmul.f32 1.0, %v1445
          %v1447 = vrcp.pop %v1137
          %v1448 = vmul.f32 %v1137, %v1447
          %v1449 = vsub.f32 1.0, %v1448
          %v1450 = vmul.f32 %v1447, %v1449
          %v1451 = vadd.f32 %v1447, %v1450
          %vm1452 = vweird.f32 %v1137
          %vm1453 = vweird.f32 %v1447
          %vm1454 = vmor %vm1452, %vm1453
          %v1455 = vsel %vm1454, %v1447, %v1451
          %v1456 = vand.u32 2147483647, %v1137
          %vm1457 = vcmp.eq.f32.partialorder %v1456, 8.507059e+37
          %v1458 = vand.u32 %v1137, 2147483648
          %v1459 = vor.u32 1.1754944e-38, %v1458
          %v1460 = vsel %vm1457, %v1459, %v1455
          %v1461 = vmul.f32 1.0, %v1460
          %v1462 = vrcp.pop %v1138
          %v1463 = vmul.f32 %v1138, %v1462
          %v1464 = vsub.f32 1.0, %v1463
          %v1465 = vmul.f32 %v1462, %v1464
          %v1466 = vadd.f32 %v1462, %v1465
          %vm1467 = vweird.f32 %v1138
          %vm1468 = vweird.f32 %v1462
          %vm1469 = vmor %vm1467, %vm1468
          %v1470 = vsel %vm1469, %v1462, %v1466
          %v1471 = vand.u32 2147483647, %v1138
          %vm1472 = vcmp.eq.f32.partialorder %v1471, 8.507059e+37
          %v1473 = vand.u32 %v1138, 2147483648
          %v1474 = vor.u32 1.1754944e-38, %v1473
          %v1475 = vsel %vm1472, %v1474, %v1470
          %v1476 = vmul.f32 1.0, %v1475
          %v1477 = vrcp.pop %v1139
          %v1478 = vmul.f32 %v1139, %v1477
          %v1479 = vsub.f32 1.0, %v1478
          %v1480 = vmul.f32 %v1477, %v1479
          %v1481 = vadd.f32 %v1477, %v1480
          %vm1482 = vweird.f32 %v1139
          %vm1483 = vweird.f32 %v1477
          %vm1484 = vmor %vm1482, %vm1483
          %v1485 = vsel %vm1484, %v1477, %v1481
          %v1486 = vand.u32 2147483647, %v1139
          %vm1487 = vcmp.eq.f32.partialorder %v1486, 8.507059e+37
          %v1488 = vand.u32 %v1139, 2147483648
          %v1489 = vor.u32 1.1754944e-38, %v1488
          %v1490 = vsel %vm1487, %v1489, %v1485
          %v1491 = vmul.f32 1.0, %v1490
          %v1492 = vrcp.pop %v1140
          %v1493 = vmul.f32 %v1140, %v1492
          %v1494 = vsub.f32 1.0, %v1493
          %v1495 = vmul.f32 %v1492, %v1494
          %v1496 = vadd.f32 %v1492, %v1495
          %vm1497 = vweird.f32 %v1140
          %vm1498 = vweird.f32 %v1492
          %vm1499 = vmor %vm1497, %vm1498
          %v1500 = vsel %vm1499, %v1492, %v1496
          %v1501 = vand.u32 2147483647, %v1140
          %vm1502 = vcmp.eq.f32.partialorder %v1501, 8.507059e+37
          %v1503 = vand.u32 %v1140, 2147483648
          %v1504 = vor.u32 1.1754944e-38, %v1503
          %v1505 = vsel %vm1502, %v1504, %v1500
          %v1506 = vmul.f32 1.0, %v1505
          %v1507 = vrcp.pop %v1141
          %v1508 = vmul.f32 %v1141, %v1507
          %v1509 = vsub.f32 1.0, %v1508
          %v1510 = vmul.f32 %v1507, %v1509
          %v1511 = vadd.f32 %v1507, %v1510
          %vm1512 = vweird.f32 %v1141
          %vm1513 = vweird.f32 %v1507
          %vm1514 = vmor %vm1512, %vm1513
          %v1515 = vsel %vm1514, %v1507, %v1511
          %v1516 = vand.u32 2147483647, %v1141
          %vm1517 = vcmp.eq.f32.partialorder %v1516, 8.507059e+37
          %v1518 = vand.u32 %v1141, 2147483648
          %v1519 = vor.u32 1.1754944e-38, %v1518
          %v1520 = vsel %vm1517, %v1519, %v1515
          %v1521 = vmul.f32 1.0, %v1520
          %v1522 = vrcp.pop %v1142
          %v1523 = vmul.f32 %v1142, %v1522
          %v1524 = vsub.f32 1.0, %v1523
          %v1525 = vmul.f32 %v1522, %v1524
          %v1526 = vadd.f32 %v1522, %v1525
          %vm1527 = vweird.f32 %v1142
          %vm1528 = vweird.f32 %v1522
          %vm1529 = vmor %vm1527, %vm1528
          %v1530 = vsel %vm1529, %v1522, %v1526
          %v1531 = vand.u32 2147483647, %v1142
          %vm1532 = vcmp.eq.f32.partialorder %v1531, 8.507059e+37
          %v1533 = vand.u32 %v1142, 2147483648
          %v1534 = vor.u32 1.1754944e-38, %v1533
          %v1535 = vsel %vm1532, %v1534, %v1530
          %v1536 = vmul.f32 1.0, %v1535
          %v1537 = vrcp.pop %v1143
          %v1538 = vmul.f32 %v1143, %v1537
          %v1539 = vsub.f32 1.0, %v1538
          %v1540 = vmul.f32 %v1537, %v1539
          %v1541 = vadd.f32 %v1537, %v1540
          %vm1542 = vweird.f32 %v1143
          %vm1543 = vweird.f32 %v1537
          %vm1544 = vmor %vm1542, %vm1543
          %v1545 = vsel %vm1544, %v1537, %v1541
          %v1546 = vand.u32 2147483647, %v1143
          %vm1547 = vcmp.eq.f32.partialorder %v1546, 8.507059e+37
          %v1548 = vand.u32 %v1143, 2147483648
          %v1549 = vor.u32 1.1754944e-38, %v1548
          %v1550 = vsel %vm1547, %v1549, %v1545
          %v1551 = vmul.f32 1.0, %v1550
          %v1552 = vrcp.pop %v1144
          %v1553 = vmul.f32 %v1144, %v1552
          %v1554 = vsub.f32 1.0, %v1553
          %v1555 = vmul.f32 %v1552, %v1554
          %v1556 = vadd.f32 %v1552, %v1555
          %vm1557 = vweird.f32 %v1144
          %vm1558 = vweird.f32 %v1552
          %vm1559 = vmor %vm1557, %vm1558
          %v1560 = vsel %vm1559, %v1552, %v1556
          %v1561 = vand.u32 2147483647, %v1144
          %vm1562 = vcmp.eq.f32.partialorder %v1561, 8.507059e+37
          %v1563 = vand.u32 %v1144, 2147483648
          %v1564 = vor.u32 1.1754944e-38, %v1563
          %v1565 = vsel %vm1562, %v1564, %v1560
          %v1566 = vmul.f32 1.0, %v1565
          %v1567 = vrcp.pop %v1145
          %v1568 = vmul.f32 %v1145, %v1567
          %v1569 = vsub.f32 1.0, %v1568
          %v1570 = vmul.f32 %v1567, %v1569
          %v1571 = vadd.f32 %v1567, %v1570
          %vm1572 = vweird.f32 %v1145
          %vm1573 = vweird.f32 %v1567
          %vm1574 = vmor %vm1572, %vm1573
          %v1575 = vsel %vm1574, %v1567, %v1571
          %v1576 = vand.u32 2147483647, %v1145
          %vm1577 = vcmp.eq.f32.partialorder %v1576, 8.507059e+37
          %v1578 = vand.u32 %v1145, 2147483648
          %v1579 = vor.u32 1.1754944e-38, %v1578
          %v1580 = vsel %vm1577, %v1579, %v1575
          %v1581 = vmul.f32 1.0, %v1580
          %v1582 = vrcp.pop %v1146
          %v1583 = vmul.f32 %v1146, %v1582
          %v1584 = vsub.f32 1.0, %v1583
          %v1585 = vmul.f32 %v1582, %v1584
          %v1586 = vadd.f32 %v1582, %v1585
          %vm1587 = vweird.f32 %v1146
          %vm1588 = vweird.f32 %v1582
          %vm1589 = vmor %vm1587, %vm1588
          %v1590 = vsel %vm1589, %v1582, %v1586
          %v1591 = vand.u32 2147483647, %v1146
          %vm1592 = vcmp.eq.f32.partialorder %v1591, 8.507059e+37
          %v1593 = vand.u32 %v1146, 2147483648
          %v1594 = vor.u32 1.1754944e-38, %v1593
          %v1595 = vsel %vm1592, %v1594, %v1590
          %v1596 = vmul.f32 1.0, %v1595
          %v1597 = vmul.f32 %v367, %v1161
          %v1598 = vmul.f32 %v368, %v1176
          %v1599 = vmul.f32 %v369, %v1191
          %v1600 = vmul.f32 %v370, %v1206
          %v1601 = vmul.f32 %v371, %v1221
          %v1602 = vmul.f32 %v372, %v1236
          %v1603 = vmul.f32 %v373, %v1251
          %v1604 = vmul.f32 %v374, %v1266
          %v1605 = vmul.f32 %v375, %v1281
          %v1606 = vmul.f32 %v376, %v1296
          %v1607 = vmul.f32 %v377, %v1311
          %v1608 = vmul.f32 %v378, %v1326
          %v1609 = vmul.f32 %v379, %v1341
          %v1610 = vmul.f32 %v380, %v1356
          %v1611 = vmul.f32 %v381, %v1371
          %v1612 = vmul.f32 %v382, %v1386
          %v1613 = vmul.f32 %v383, %v1401
          %v1614 = vmul.f32 %v384, %v1416
          %v1615 = vmul.f32 %v385, %v1431
          %v1616 = vmul.f32 %v386, %v1446
          %v1617 = vmul.f32 %v387, %v1461
          %v1618 = vmul.f32 %v388, %v1476
          %v1619 = vmul.f32 %v389, %v1491
          %v1620 = vmul.f32 %v390, %v1506
          %v1621 = vmul.f32 %v391, %v1521
          %v1622 = vmul.f32 %v392, %v1536
          %v1623 = vmul.f32 %v393, %v1551
          %v1624 = vmul.f32 %v394, %v1566
          %v1625 = vmul.f32 %v395, %v1581
          %v1626 = vmul.f32 %v396, %v1596
          %v1627 = vpack.c.bf16 %v1597, %v1597
          %v1628 = vpack.c.bf16 %v1598, %v1598
          %v1629 = vpack.c.bf16 %v1599, %v1599
          %v1630 = vpack.c.bf16 %v1600, %v1600
          %v1631 = vpack.c.bf16 %v1601, %v1601
          %v1632 = vpack.c.bf16 %v1602, %v1602
          %v1633 = vpack.c.bf16 %v1603, %v1603
          %v1634 = vpack.c.bf16 %v1604, %v1604
          %v1635 = vpack.c.bf16 %v1605, %v1605
          %v1636 = vpack.c.bf16 %v1606, %v1606
          %v1637 = vpack.c.bf16 %v1607, %v1607
          %v1638 = vpack.c.bf16 %v1608, %v1608
          %v1639 = vpack.c.bf16 %v1609, %v1609
          %v1640 = vpack.c.bf16 %v1610, %v1610
          %v1641 = vpack.c.bf16 %v1611, %v1611
          %v1642 = vpack.c.bf16 %v1612, %v1612
          %v1643 = vpack.c.bf16 %v1613, %v1613
          %v1644 = vpack.c.bf16 %v1614, %v1614
          %v1645 = vpack.c.bf16 %v1615, %v1615
          %v1646 = vpack.c.bf16 %v1616, %v1616
          %v1647 = vpack.c.bf16 %v1617, %v1617
          %v1648 = vpack.c.bf16 %v1618, %v1618
          %v1649 = vpack.c.bf16 %v1619, %v1619
          %v1650 = vpack.c.bf16 %v1620, %v1620
          %v1651 = vpack.c.bf16 %v1621, %v1621
          %v1652 = vpack.c.bf16 %v1622, %v1622
          %v1653 = vpack.c.bf16 %v1623, %v1623
          %v1654 = vpack.c.bf16 %v1624, %v1624
          %v1655 = vpack.c.bf16 %v1625, %v1625
          %v1656 = vpack.c.bf16 %v1626, %v1626
          %vm1657 = vcmask 27648
          %1658 = vst.msk [vmem:[#allocation2] sm:$0xf] %vm1657, %v1627
          %1659 = vst.msk [vmem:[#allocation2 + $0x4] sm:$0xf] %vm1657, %v1628
          %vm1660 = vcmask 24576
          %1661 = vst.msk [vmem:[#allocation2 + $0x8] sm:$0x1] %vm1660, %v1629
          %1662 = vst.msk [vmem:[#allocation2 + $0xc] sm:$0xf] %vm1657, %v1630
          %1663 = vst.msk [vmem:[#allocation2 + $0x10] sm:$0xf] %vm1657, %v1631
          %1664 = vst.msk [vmem:[#allocation2 + $0x14] sm:$0x1] %vm1660, %v1632
          %1665 = vst.msk [vmem:[#allocation2 + $0x18] sm:$0xf] %vm1657, %v1633
          %1666 = vst.msk [vmem:[#allocation2 + $0x1c] sm:$0xf] %vm1657, %v1634
          %1667 = vst.msk [vmem:[#allocation2 + $0x20] sm:$0x1] %vm1660, %v1635
          %1668 = vst.msk [vmem:[#allocation2 + $0x24] sm:$0xf] %vm1657, %v1636
          %1669 = vst.msk [vmem:[#allocation2 + $0x28] sm:$0xf] %vm1657, %v1637
          %1670 = vst.msk [vmem:[#allocation2 + $0x2c] sm:$0x1] %vm1660, %v1638
          %1671 = vst.msk [vmem:[#allocation2 + $0x30] sm:$0xf] %vm1657, %v1639
          %1672 = vst.msk [vmem:[#allocation2 + $0x34] sm:$0xf] %vm1657, %v1640
          %1673 = vst.msk [vmem:[#allocation2 + $0x38] sm:$0x1] %vm1660, %v1641
          %1674 = vst.msk [vmem:[#allocation2 + $0x3c] sm:$0xf] %vm1657, %v1642
          %1675 = vst.msk [vmem:[#allocation2 + $0x40] sm:$0xf] %vm1657, %v1643
          %1676 = vst.msk [vmem:[#allocation2 + $0x44] sm:$0x1] %vm1660, %v1644
          %1677 = vst.msk [vmem:[#allocation2 + $0x48] sm:$0xf] %vm1657, %v1645
          %1678 = vst.msk [vmem:[#allocation2 + $0x4c] sm:$0xf] %vm1657, %v1646
          %1679 = vst.msk [vmem:[#allocation2 + $0x50] sm:$0x1] %vm1660, %v1647
          %1680 = vst.msk [vmem:[#allocation2 + $0x54] sm:$0xf] %vm1657, %v1648
          %1681 = vst.msk [vmem:[#allocation2 + $0x58] sm:$0xf] %vm1657, %v1649
          %1682 = vst.msk [vmem:[#allocation2 + $0x5c] sm:$0x1] %vm1660, %v1650
          %1683 = vst.msk [vmem:[#allocation2 + $0x60] sm:$0xf] %vm1657, %v1651
          %1684 = vst.msk [vmem:[#allocation2 + $0x64] sm:$0xf] %vm1657, %v1652
          %1685 = vst.msk [vmem:[#allocation2 + $0x68] sm:$0x1] %vm1660, %v1653
          %1686 = vst.msk [vmem:[#allocation2 + $0x6c] sm:$0xf] %vm1657, %v1654
          %1687 = vst.msk [vmem:[#allocation2 + $0x70] sm:$0xf] %vm1657, %v1655
          %1688 = vst.msk [vmem:[#allocation2 + $0x74] sm:$0x1] %vm1660, %v1656
          %v1689 = vpack.c.bf16 %v967, %v967
          %v1690 = vpack.c.bf16 %v968, %v968
          %v1691 = vpack.c.bf16 %v969, %v969
          %v1692 = vpack.c.bf16 %v970, %v970
          %v1693 = vpack.c.bf16 %v971, %v971
          %v1694 = vpack.c.bf16 %v972, %v972
          %v1695 = vpack.c.bf16 %v973, %v973
          %v1696 = vpack.c.bf16 %v974, %v974
          %v1697 = vpack.c.bf16 %v975, %v975
          %v1698 = vpack.c.bf16 %v976, %v976
          %v1699 = vpack.c.bf16 %v977, %v977
          %v1700 = vpack.c.bf16 %v978, %v978
          %v1701 = vpack.c.bf16 %v979, %v979
          %v1702 = vpack.c.bf16 %v980, %v980
          %v1703 = vpack.c.bf16 %v981, %v981
          %v1704 = vpack.c.bf16 %v982, %v982
          %v1705 = vpack.c.bf16 %v983, %v983
          %v1706 = vpack.c.bf16 %v984, %v984
          %v1707 = vpack.c.bf16 %v985, %v985
          %v1708 = vpack.c.bf16 %v986, %v986
          %v1709 = vpack.c.bf16 %v987, %v987
          %v1710 = vpack.c.bf16 %v988, %v988
          %v1711 = vpack.c.bf16 %v989, %v989
          %v1712 = vpack.c.bf16 %v990, %v990
          %v1713 = vpack.c.bf16 %v991, %v991
          %v1714 = vpack.c.bf16 %v992, %v992
          %v1715 = vpack.c.bf16 %v993, %v993
          %v1716 = vpack.c.bf16 %v994, %v994
          %v1717 = vpack.c.bf16 %v995, %v995
          %v1718 = vpack.c.bf16 %v996, %v996
          %1749 = vrot.lane.b32.xlu0 %v1689, 16
          %v1750 = vpop.permute.xlu0 %1749
          %1751 = vrot.lane.b32.xlu0 %v1690, 16
          %v1752 = vpop.permute.xlu0 %1751
          %1753 = vrot.lane.b32.xlu0 %v1691, 16
          %v1754 = vpop.permute.xlu0 %1753
          %1755 = vrot.lane.b32.xlu0 %v1692, 16
          %v1756 = vpop.permute.xlu0 %1755
          %1757 = vrot.lane.b32.xlu0 %v1693, 16
          %v1758 = vpop.permute.xlu0 %1757
          %1759 = vrot.lane.b32.xlu0 %v1694, 16
          %v1760 = vpop.permute.xlu0 %1759
          %1761 = vrot.lane.b32.xlu0 %v1695, 16
          %v1762 = vpop.permute.xlu0 %1761
          %1763 = vrot.lane.b32.xlu0 %v1696, 16
          %v1764 = vpop.permute.xlu0 %1763
          %1765 = vrot.lane.b32.xlu0 %v1697, 16
          %v1766 = vpop.permute.xlu0 %1765
          %1767 = vrot.lane.b32.xlu0 %v1698, 16
          %v1768 = vpop.permute.xlu0 %1767
          %1769 = vrot.lane.b32.xlu0 %v1699, 16
          %v1770 = vpop.permute.xlu0 %1769
          %1771 = vrot.lane.b32.xlu0 %v1700, 16
          %v1772 = vpop.permute.xlu0 %1771
          %1773 = vrot.lane.b32.xlu0 %v1701, 16
          %v1774 = vpop.permute.xlu0 %1773
          %1775 = vrot.lane.b32.xlu0 %v1702, 16
          %v1776 = vpop.permute.xlu0 %1775
          %1777 = vrot.lane.b32.xlu0 %v1703, 16
          %v1778 = vpop.permute.xlu0 %1777
          %1779 = vrot.lane.b32.xlu0 %v1704, 16
          %v1780 = vpop.permute.xlu0 %1779
          %1781 = vrot.lane.b32.xlu0 %v1705, 16
          %v1782 = vpop.permute.xlu0 %1781
          %1783 = vrot.lane.b32.xlu0 %v1706, 16
          %v1784 = vpop.permute.xlu0 %1783
          %1785 = vrot.lane.b32.xlu0 %v1707, 16
          %v1786 = vpop.permute.xlu0 %1785
          %1787 = vrot.lane.b32.xlu0 %v1708, 16
          %v1788 = vpop.permute.xlu0 %1787
          %1789 = vrot.lane.b32.xlu0 %v1709, 16
          %v1790 = vpop.permute.xlu0 %1789
          %1791 = vrot.lane.b32.xlu0 %v1710, 16
          %v1792 = vpop.permute.xlu0 %1791
          %1793 = vrot.lane.b32.xlu0 %v1711, 16
          %v1794 = vpop.permute.xlu0 %1793
          %1795 = vrot.lane.b32.xlu0 %v1712, 16
          %v1796 = vpop.permute.xlu0 %1795
          %1797 = vrot.lane.b32.xlu0 %v1713, 16
          %v1798 = vpop.permute.xlu0 %1797
          %1799 = vrot.lane.b32.xlu0 %v1714, 16
          %v1800 = vpop.permute.xlu0 %1799
          %1801 = vrot.lane.b32.xlu0 %v1715, 16
          %v1802 = vpop.permute.xlu0 %1801
          %1803 = vrot.lane.b32.xlu0 %v1716, 16
          %v1804 = vpop.permute.xlu0 %1803
          %1805 = vrot.lane.b32.xlu0 %v1717, 16
          %v1806 = vpop.permute.xlu0 %1805
          %1807 = vrot.lane.b32.xlu0 %v1718, 16
          %v1808 = vpop.permute.xlu0 %1807
          %vm1839 = vcmask 158848
          %1840 = vst.msk [vmem:[#allocation2] sm:$0xf] %vm1839, %v1750
          %1841 = vst.msk [vmem:[#allocation2 + $0x4] sm:$0xf] %vm1839, %v1752
          %vm1842 = vcmask 155776
          %1843 = vst.msk [vmem:[#allocation2 + $0x8] sm:$0x1] %vm1842, %v1754
          %1844 = vst.msk [vmem:[#allocation2 + $0xc] sm:$0xf] %vm1839, %v1756
          %1845 = vst.msk [vmem:[#allocation2 + $0x10] sm:$0xf] %vm1839, %v1758
          %1846 = vst.msk [vmem:[#allocation2 + $0x14] sm:$0x1] %vm1842, %v1760
          %1847 = vst.msk [vmem:[#allocation2 + $0x18] sm:$0xf] %vm1839, %v1762
          %1848 = vst.msk [vmem:[#allocation2 + $0x1c] sm:$0xf] %vm1839, %v1764
          %1849 = vst.msk [vmem:[#allocation2 + $0x20] sm:$0x1] %vm1842, %v1766
          %1850 = vst.msk [vmem:[#allocation2 + $0x24] sm:$0xf] %vm1839, %v1768
          %1851 = vst.msk [vmem:[#allocation2 + $0x28] sm:$0xf] %vm1839, %v1770
          %1852 = vst.msk [vmem:[#allocation2 + $0x2c] sm:$0x1] %vm1842, %v1772
          %1853 = vst.msk [vmem:[#allocation2 + $0x30] sm:$0xf] %vm1839, %v1774
          %1854 = vst.msk [vmem:[#allocation2 + $0x34] sm:$0xf] %vm1839, %v1776
          %1855 = vst.msk [vmem:[#allocation2 + $0x38] sm:$0x1] %vm1842, %v1778
          %1856 = vst.msk [vmem:[#allocation2 + $0x3c] sm:$0xf] %vm1839, %v1780
          %1857 = vst.msk [vmem:[#allocation2 + $0x40] sm:$0xf] %vm1839, %v1782
          %1858 = vst.msk [vmem:[#allocation2 + $0x44] sm:$0x1] %vm1842, %v1784
          %1859 = vst.msk [vmem:[#allocation2 + $0x48] sm:$0xf] %vm1839, %v1786
          %1860 = vst.msk [vmem:[#allocation2 + $0x4c] sm:$0xf] %vm1839, %v1788
          %1861 = vst.msk [vmem:[#allocation2 + $0x50] sm:$0x1] %vm1842, %v1790
          %1862 = vst.msk [vmem:[#allocation2 + $0x54] sm:$0xf] %vm1839, %v1792
          %1863 = vst.msk [vmem:[#allocation2 + $0x58] sm:$0xf] %vm1839, %v1794
          %1864 = vst.msk [vmem:[#allocation2 + $0x5c] sm:$0x1] %vm1842, %v1796
          %1865 = vst.msk [vmem:[#allocation2 + $0x60] sm:$0xf] %vm1839, %v1798
          %1866 = vst.msk [vmem:[#allocation2 + $0x64] sm:$0xf] %vm1839, %v1800
          %1867 = vst.msk [vmem:[#allocation2 + $0x68] sm:$0x1] %vm1842, %v1802
          %1868 = vst.msk [vmem:[#allocation2 + $0x6c] sm:$0xf] %vm1839, %v1804
          %1869 = vst.msk [vmem:[#allocation2 + $0x70] sm:$0xf] %vm1839, %v1806
          %1870 = vst.msk [vmem:[#allocation2 + $0x74] sm:$0x1] %vm1842, %v1808
          %v1871 = vxor.u32 %v997, 2147483648
          %v1872 = vxor.u32 %v998, 2147483648
          %v1873 = vxor.u32 %v999, 2147483648
          %v1874 = vxor.u32 %v1000, 2147483648
          %v1875 = vxor.u32 %v1001, 2147483648
          %v1876 = vxor.u32 %v1002, 2147483648
          %v1877 = vxor.u32 %v1003, 2147483648
          %v1878 = vxor.u32 %v1004, 2147483648
          %v1879 = vxor.u32 %v1005, 2147483648
          %v1880 = vxor.u32 %v1006, 2147483648
          %v1881 = vxor.u32 %v1007, 2147483648
          %v1882 = vxor.u32 %v1008, 2147483648
          %v1883 = vxor.u32 %v1009, 2147483648
          %v1884 = vxor.u32 %v1010, 2147483648
          %v1885 = vxor.u32 %v1011, 2147483648
          %v1886 = vxor.u32 %v1012, 2147483648
          %v1887 = vxor.u32 %v1013, 2147483648
          %v1888 = vxor.u32 %v1014, 2147483648
          %v1889 = vxor.u32 %v1015, 2147483648
          %v1890 = vxor.u32 %v1016, 2147483648
          %v1891 = vxor.u32 %v1017, 2147483648
          %v1892 = vxor.u32 %v1018, 2147483648
          %v1893 = vxor.u32 %v1019, 2147483648
          %v1894 = vxor.u32 %v1020, 2147483648
          %v1895 = vxor.u32 %v1021, 2147483648
          %v1896 = vxor.u32 %v1022, 2147483648
          %v1897 = vxor.u32 %v1023, 2147483648
          %v1898 = vxor.u32 %v1024, 2147483648
          %v1899 = vxor.u32 %v1025, 2147483648
          %v1900 = vxor.u32 %v1026, 2147483648
          %v1901 = vmul.f32 %v1871, 1.442695
          %v1902 = vpow.pop %v1901
          %v1903 = vmul.f32 %v1872, 1.442695
          %v1904 = vpow.pop %v1903
          %v1905 = vmul.f32 %v1873, 1.442695
          %v1906 = vpow.pop %v1905
          %v1907 = vmul.f32 %v1874, 1.442695
          %v1908 = vpow.pop %v1907
          %v1909 = vmul.f32 %v1875, 1.442695
          %v1910 = vpow.pop %v1909
          %v1911 = vmul.f32 %v1876, 1.442695
          %v1912 = vpow.pop %v1911
          %v1913 = vmul.f32 %v1877, 1.442695
          %v1914 = vpow.pop %v1913
          %v1915 = vmul.f32 %v1878, 1.442695
          %v1916 = vpow.pop %v1915
          %v1917 = vmul.f32 %v1879, 1.442695
          %v1918 = vpow.pop %v1917
          %v1919 = vmul.f32 %v1880, 1.442695
          %v1920 = vpow.pop %v1919
          %v1921 = vmul.f32 %v1881, 1.442695
          %v1922 = vpow.pop %v1921
          %v1923 = vmul.f32 %v1882, 1.442695
          %v1924 = vpow.pop %v1923
          %v1925 = vmul.f32 %v1883, 1.442695
          %v1926 = vpow.pop %v1925
          %v1927 = vmul.f32 %v1884, 1.442695
          %v1928 = vpow.pop %v1927
          %v1929 = vmul.f32 %v1885, 1.442695
          %v1930 = vpow.pop %v1929
          %v1931 = vmul.f32 %v1886, 1.442695
          %v1932 = vpow.pop %v1931
          %v1933 = vmul.f32 %v1887, 1.442695
          %v1934 = vpow.pop %v1933
          %v1935 = vmul.f32 %v1888, 1.442695
          %v1936 = vpow.pop %v1935
          %v1937 = vmul.f32 %v1889, 1.442695
          %v1938 = vpow.pop %v1937
          %v1939 = vmul.f32 %v1890, 1.442695
          %v1940 = vpow.pop %v1939
          %v1941 = vmul.f32 %v1891, 1.442695
          %v1942 = vpow.pop %v1941
          %v1943 = vmul.f32 %v1892, 1.442695
          %v1944 = vpow.pop %v1943
          %v1945 = vmul.f32 %v1893, 1.442695
          %v1946 = vpow.pop %v1945
          %v1947 = vmul.f32 %v1894, 1.442695
          %v1948 = vpow.pop %v1947
          %v1949 = vmul.f32 %v1895, 1.442695
          %v1950 = vpow.pop %v1949
          %v1951 = vmul.f32 %v1896, 1.442695
          %v1952 = vpow.pop %v1951
          %v1953 = vmul.f32 %v1897, 1.442695
          %v1954 = vpow.pop %v1953
          %v1955 = vmul.f32 %v1898, 1.442695
          %v1956 = vpow.pop %v1955
          %v1957 = vmul.f32 %v1899, 1.442695
          %v1958 = vpow.pop %v1957
          %v1959 = vmul.f32 %v1900, 1.442695
          %v1960 = vpow.pop %v1959
          %v1961 = vadd.f32 %v1902, 1.0
          %v1962 = vadd.f32 %v1904, 1.0
          %v1963 = vadd.f32 %v1906, 1.0
          %v1964 = vadd.f32 %v1908, 1.0
          %v1965 = vadd.f32 %v1910, 1.0
          %v1966 = vadd.f32 %v1912, 1.0
          %v1967 = vadd.f32 %v1914, 1.0
          %v1968 = vadd.f32 %v1916, 1.0
          %v1969 = vadd.f32 %v1918, 1.0
          %v1970 = vadd.f32 %v1920, 1.0
          %v1971 = vadd.f32 %v1922, 1.0
          %v1972 = vadd.f32 %v1924, 1.0
          %v1973 = vadd.f32 %v1926, 1.0
          %v1974 = vadd.f32 %v1928, 1.0
          %v1975 = vadd.f32 %v1930, 1.0
          %v1976 = vadd.f32 %v1932, 1.0
          %v1977 = vadd.f32 %v1934, 1.0
          %v1978 = vadd.f32 %v1936, 1.0
          %v1979 = vadd.f32 %v1938, 1.0
          %v1980 = vadd.f32 %v1940, 1.0
          %v1981 = vadd.f32 %v1942, 1.0
          %v1982 = vadd.f32 %v1944, 1.0
          %v1983 = vadd.f32 %v1946, 1.0
          %v1984 = vadd.f32 %v1948, 1.0
          %v1985 = vadd.f32 %v1950, 1.0
          %v1986 = vadd.f32 %v1952, 1.0
          %v1987 = vadd.f32 %v1954, 1.0
          %v1988 = vadd.f32 %v1956, 1.0
          %v1989 = vadd.f32 %v1958, 1.0
          %v1990 = vadd.f32 %v1960, 1.0
          %v1991 = vrcp.pop %v1961
          %v1992 = vmul.f32 %v1961, %v1991
          %v1993 = vsub.f32 1.0, %v1992
          %v1994 = vmul.f32 %v1991, %v1993
          %v1995 = vadd.f32 %v1991, %v1994
          %vm1996 = vweird.f32 %v1961
          %vm1997 = vweird.f32 %v1991
          %vm1998 = vmor %vm1996, %vm1997
          %v1999 = vsel %vm1998, %v1991, %v1995
          %v2000 = vand.u32 2147483647, %v1961
          %vm2001 = vcmp.eq.f32.partialorder %v2000, 8.507059e+37
          %v2002 = vand.u32 %v1961, 2147483648
          %v2003 = vor.u32 1.1754944e-38, %v2002
          %v2004 = vsel %vm2001, %v2003, %v1999
          %v2005 = vmul.f32 1.0, %v2004
          %v2006 = vrcp.pop %v1962
          %v2007 = vmul.f32 %v1962, %v2006
          %v2008 = vsub.f32 1.0, %v2007
          %v2009 = vmul.f32 %v2006, %v2008
          %v2010 = vadd.f32 %v2006, %v2009
          %vm2011 = vweird.f32 %v1962
          %vm2012 = vweird.f32 %v2006
          %vm2013 = vmor %vm2011, %vm2012
          %v2014 = vsel %vm2013, %v2006, %v2010
          %v2015 = vand.u32 2147483647, %v1962
          %vm2016 = vcmp.eq.f32.partialorder %v2015, 8.507059e+37
          %v2017 = vand.u32 %v1962, 2147483648
          %v2018 = vor.u32 1.1754944e-38, %v2017
          %v2019 = vsel %vm2016, %v2018, %v2014
          %v2020 = vmul.f32 1.0, %v2019
          %v2021 = vrcp.pop %v1963
          %v2022 = vmul.f32 %v1963, %v2021
          %v2023 = vsub.f32 1.0, %v2022
          %v2024 = vmul.f32 %v2021, %v2023
          %v2025 = vadd.f32 %v2021, %v2024
          %vm2026 = vweird.f32 %v1963
          %vm2027 = vweird.f32 %v2021
          %vm2028 = vmor %vm2026, %vm2027
          %v2029 = vsel %vm2028, %v2021, %v2025
          %v2030 = vand.u32 2147483647, %v1963
          %vm2031 = vcmp.eq.f32.partialorder %v2030, 8.507059e+37
          %v2032 = vand.u32 %v1963, 2147483648
          %v2033 = vor.u32 1.1754944e-38, %v2032
          %v2034 = vsel %vm2031, %v2033, %v2029
          %v2035 = vmul.f32 1.0, %v2034
          %v2036 = vrcp.pop %v1964
          %v2037 = vmul.f32 %v1964, %v2036
          %v2038 = vsub.f32 1.0, %v2037
          %v2039 = vmul.f32 %v2036, %v2038
          %v2040 = vadd.f32 %v2036, %v2039
          %vm2041 = vweird.f32 %v1964
          %vm2042 = vweird.f32 %v2036
          %vm2043 = vmor %vm2041, %vm2042
          %v2044 = vsel %vm2043, %v2036, %v2040
          %v2045 = vand.u32 2147483647, %v1964
          %vm2046 = vcmp.eq.f32.partialorder %v2045, 8.507059e+37
          %v2047 = vand.u32 %v1964, 2147483648
          %v2048 = vor.u32 1.1754944e-38, %v2047
          %v2049 = vsel %vm2046, %v2048, %v2044
          %v2050 = vmul.f32 1.0, %v2049
          %v2051 = vrcp.pop %v1965
          %v2052 = vmul.f32 %v1965, %v2051
          %v2053 = vsub.f32 1.0, %v2052
          %v2054 = vmul.f32 %v2051, %v2053
          %v2055 = vadd.f32 %v2051, %v2054
          %vm2056 = vweird.f32 %v1965
          %vm2057 = vweird.f32 %v2051
          %vm2058 = vmor %vm2056, %vm2057
          %v2059 = vsel %vm2058, %v2051, %v2055
          %v2060 = vand.u32 2147483647, %v1965
          %vm2061 = vcmp.eq.f32.partialorder %v2060, 8.507059e+37
          %v2062 = vand.u32 %v1965, 2147483648
          %v2063 = vor.u32 1.1754944e-38, %v2062
          %v2064 = vsel %vm2061, %v2063, %v2059
          %v2065 = vmul.f32 1.0, %v2064
          %v2066 = vrcp.pop %v1966
          %v2067 = vmul.f32 %v1966, %v2066
          %v2068 = vsub.f32 1.0, %v2067
          %v2069 = vmul.f32 %v2066, %v2068
          %v2070 = vadd.f32 %v2066, %v2069
          %vm2071 = vweird.f32 %v1966
          %vm2072 = vweird.f32 %v2066
          %vm2073 = vmor %vm2071, %vm2072
          %v2074 = vsel %vm2073, %v2066, %v2070
          %v2075 = vand.u32 2147483647, %v1966
          %vm2076 = vcmp.eq.f32.partialorder %v2075, 8.507059e+37
          %v2077 = vand.u32 %v1966, 2147483648
          %v2078 = vor.u32 1.1754944e-38, %v2077
          %v2079 = vsel %vm2076, %v2078, %v2074
          %v2080 = vmul.f32 1.0, %v2079
          %v2081 = vrcp.pop %v1967
          %v2082 = vmul.f32 %v1967, %v2081
          %v2083 = vsub.f32 1.0, %v2082
          %v2084 = vmul.f32 %v2081, %v2083
          %v2085 = vadd.f32 %v2081, %v2084
          %vm2086 = vweird.f32 %v1967
          %vm2087 = vweird.f32 %v2081
          %vm2088 = vmor %vm2086, %vm2087
          %v2089 = vsel %vm2088, %v2081, %v2085
          %v2090 = vand.u32 2147483647, %v1967
          %vm2091 = vcmp.eq.f32.partialorder %v2090, 8.507059e+37
          %v2092 = vand.u32 %v1967, 2147483648
          %v2093 = vor.u32 1.1754944e-38, %v2092
          %v2094 = vsel %vm2091, %v2093, %v2089
          %v2095 = vmul.f32 1.0, %v2094
          %v2096 = vrcp.pop %v1968
          %v2097 = vmul.f32 %v1968, %v2096
          %v2098 = vsub.f32 1.0, %v2097
          %v2099 = vmul.f32 %v2096, %v2098
          %v2100 = vadd.f32 %v2096, %v2099
          %vm2101 = vweird.f32 %v1968
          %vm2102 = vweird.f32 %v2096
          %vm2103 = vmor %vm2101, %vm2102
          %v2104 = vsel %vm2103, %v2096, %v2100
          %v2105 = vand.u32 2147483647, %v1968
          %vm2106 = vcmp.eq.f32.partialorder %v2105, 8.507059e+37
          %v2107 = vand.u32 %v1968, 2147483648
          %v2108 = vor.u32 1.1754944e-38, %v2107
          %v2109 = vsel %vm2106, %v2108, %v2104
          %v2110 = vmul.f32 1.0, %v2109
          %v2111 = vrcp.pop %v1969
          %v2112 = vmul.f32 %v1969, %v2111
          %v2113 = vsub.f32 1.0, %v2112
          %v2114 = vmul.f32 %v2111, %v2113
          %v2115 = vadd.f32 %v2111, %v2114
          %vm2116 = vweird.f32 %v1969
          %vm2117 = vweird.f32 %v2111
          %vm2118 = vmor %vm2116, %vm2117
          %v2119 = vsel %vm2118, %v2111, %v2115
          %v2120 = vand.u32 2147483647, %v1969
          %vm2121 = vcmp.eq.f32.partialorder %v2120, 8.507059e+37
          %v2122 = vand.u32 %v1969, 2147483648
          %v2123 = vor.u32 1.1754944e-38, %v2122
          %v2124 = vsel %vm2121, %v2123, %v2119
          %v2125 = vmul.f32 1.0, %v2124
          %v2126 = vrcp.pop %v1970
          %v2127 = vmul.f32 %v1970, %v2126
          %v2128 = vsub.f32 1.0, %v2127
          %v2129 = vmul.f32 %v2126, %v2128
          %v2130 = vadd.f32 %v2126, %v2129
          %vm2131 = vweird.f32 %v1970
          %vm2132 = vweird.f32 %v2126
          %vm2133 = vmor %vm2131, %vm2132
          %v2134 = vsel %vm2133, %v2126, %v2130
          %v2135 = vand.u32 2147483647, %v1970
          %vm2136 = vcmp.eq.f32.partialorder %v2135, 8.507059e+37
          %v2137 = vand.u32 %v1970, 2147483648
          %v2138 = vor.u32 1.1754944e-38, %v2137
          %v2139 = vsel %vm2136, %v2138, %v2134
          %v2140 = vmul.f32 1.0, %v2139
          %v2141 = vrcp.pop %v1971
          %v2142 = vmul.f32 %v1971, %v2141
          %v2143 = vsub.f32 1.0, %v2142
          %v2144 = vmul.f32 %v2141, %v2143
          %v2145 = vadd.f32 %v2141, %v2144
          %vm2146 = vweird.f32 %v1971
          %vm2147 = vweird.f32 %v2141
          %vm2148 = vmor %vm2146, %vm2147
          %v2149 = vsel %vm2148, %v2141, %v2145
          %v2150 = vand.u32 2147483647, %v1971
          %vm2151 = vcmp.eq.f32.partialorder %v2150, 8.507059e+37
          %v2152 = vand.u32 %v1971, 2147483648
          %v2153 = vor.u32 1.1754944e-38, %v2152
          %v2154 = vsel %vm2151, %v2153, %v2149
          %v2155 = vmul.f32 1.0, %v2154
          %v2156 = vrcp.pop %v1972
          %v2157 = vmul.f32 %v1972, %v2156
          %v2158 = vsub.f32 1.0, %v2157
          %v2159 = vmul.f32 %v2156, %v2158
          %v2160 = vadd.f32 %v2156, %v2159
          %vm2161 = vweird.f32 %v1972
          %vm2162 = vweird.f32 %v2156
          %vm2163 = vmor %vm2161, %vm2162
          %v2164 = vsel %vm2163, %v2156, %v2160
          %v2165 = vand.u32 2147483647, %v1972
          %vm2166 = vcmp.eq.f32.partialorder %v2165, 8.507059e+37
          %v2167 = vand.u32 %v1972, 2147483648
          %v2168 = vor.u32 1.1754944e-38, %v2167
          %v2169 = vsel %vm2166, %v2168, %v2164
          %v2170 = vmul.f32 1.0, %v2169
          %v2171 = vrcp.pop %v1973
          %v2172 = vmul.f32 %v1973, %v2171
          %v2173 = vsub.f32 1.0, %v2172
          %v2174 = vmul.f32 %v2171, %v2173
          %v2175 = vadd.f32 %v2171, %v2174
          %vm2176 = vweird.f32 %v1973
          %vm2177 = vweird.f32 %v2171
          %vm2178 = vmor %vm2176, %vm2177
          %v2179 = vsel %vm2178, %v2171, %v2175
          %v2180 = vand.u32 2147483647, %v1973
          %vm2181 = vcmp.eq.f32.partialorder %v2180, 8.507059e+37
          %v2182 = vand.u32 %v1973, 2147483648
          %v2183 = vor.u32 1.1754944e-38, %v2182
          %v2184 = vsel %vm2181, %v2183, %v2179
          %v2185 = vmul.f32 1.0, %v2184
          %v2186 = vrcp.pop %v1974
          %v2187 = vmul.f32 %v1974, %v2186
          %v2188 = vsub.f32 1.0, %v2187
          %v2189 = vmul.f32 %v2186, %v2188
          %v2190 = vadd.f32 %v2186, %v2189
          %vm2191 = vweird.f32 %v1974
          %vm2192 = vweird.f32 %v2186
          %vm2193 = vmor %vm2191, %vm2192
          %v2194 = vsel %vm2193, %v2186, %v2190
          %v2195 = vand.u32 2147483647, %v1974
          %vm2196 = vcmp.eq.f32.partialorder %v2195, 8.507059e+37
          %v2197 = vand.u32 %v1974, 2147483648
          %v2198 = vor.u32 1.1754944e-38, %v2197
          %v2199 = vsel %vm2196, %v2198, %v2194
          %v2200 = vmul.f32 1.0, %v2199
          %v2201 = vrcp.pop %v1975
          %v2202 = vmul.f32 %v1975, %v2201
          %v2203 = vsub.f32 1.0, %v2202
          %v2204 = vmul.f32 %v2201, %v2203
          %v2205 = vadd.f32 %v2201, %v2204
          %vm2206 = vweird.f32 %v1975
          %vm2207 = vweird.f32 %v2201
          %vm2208 = vmor %vm2206, %vm2207
          %v2209 = vsel %vm2208, %v2201, %v2205
          %v2210 = vand.u32 2147483647, %v1975
          %vm2211 = vcmp.eq.f32.partialorder %v2210, 8.507059e+37
          %v2212 = vand.u32 %v1975, 2147483648
          %v2213 = vor.u32 1.1754944e-38, %v2212
          %v2214 = vsel %vm2211, %v2213, %v2209
          %v2215 = vmul.f32 1.0, %v2214
          %v2216 = vrcp.pop %v1976
          %v2217 = vmul.f32 %v1976, %v2216
          %v2218 = vsub.f32 1.0, %v2217
          %v2219 = vmul.f32 %v2216, %v2218
          %v2220 = vadd.f32 %v2216, %v2219
          %vm2221 = vweird.f32 %v1976
          %vm2222 = vweird.f32 %v2216
          %vm2223 = vmor %vm2221, %vm2222
          %v2224 = vsel %vm2223, %v2216, %v2220
          %v2225 = vand.u32 2147483647, %v1976
          %vm2226 = vcmp.eq.f32.partialorder %v2225, 8.507059e+37
          %v2227 = vand.u32 %v1976, 2147483648
          %v2228 = vor.u32 1.1754944e-38, %v2227
          %v2229 = vsel %vm2226, %v2228, %v2224
          %v2230 = vmul.f32 1.0, %v2229
          %v2231 = vrcp.pop %v1977
          %v2232 = vmul.f32 %v1977, %v2231
          %v2233 = vsub.f32 1.0, %v2232
          %v2234 = vmul.f32 %v2231, %v2233
          %v2235 = vadd.f32 %v2231, %v2234
          %vm2236 = vweird.f32 %v1977
          %vm2237 = vweird.f32 %v2231
          %vm2238 = vmor %vm2236, %vm2237
          %v2239 = vsel %vm2238, %v2231, %v2235
          %v2240 = vand.u32 2147483647, %v1977
          %vm2241 = vcmp.eq.f32.partialorder %v2240, 8.507059e+37
          %v2242 = vand.u32 %v1977, 2147483648
          %v2243 = vor.u32 1.1754944e-38, %v2242
          %v2244 = vsel %vm2241, %v2243, %v2239
          %v2245 = vmul.f32 1.0, %v2244
          %v2246 = vrcp.pop %v1978
          %v2247 = vmul.f32 %v1978, %v2246
          %v2248 = vsub.f32 1.0, %v2247
          %v2249 = vmul.f32 %v2246, %v2248
          %v2250 = vadd.f32 %v2246, %v2249
          %vm2251 = vweird.f32 %v1978
          %vm2252 = vweird.f32 %v2246
          %vm2253 = vmor %vm2251, %vm2252
          %v2254 = vsel %vm2253, %v2246, %v2250
          %v2255 = vand.u32 2147483647, %v1978
          %vm2256 = vcmp.eq.f32.partialorder %v2255, 8.507059e+37
          %v2257 = vand.u32 %v1978, 2147483648
          %v2258 = vor.u32 1.1754944e-38, %v2257
          %v2259 = vsel %vm2256, %v2258, %v2254
          %v2260 = vmul.f32 1.0, %v2259
          %v2261 = vrcp.pop %v1979
          %v2262 = vmul.f32 %v1979, %v2261
          %v2263 = vsub.f32 1.0, %v2262
          %v2264 = vmul.f32 %v2261, %v2263
          %v2265 = vadd.f32 %v2261, %v2264
          %vm2266 = vweird.f32 %v1979
          %vm2267 = vweird.f32 %v2261
          %vm2268 = vmor %vm2266, %vm2267
          %v2269 = vsel %vm2268, %v2261, %v2265
          %v2270 = vand.u32 2147483647, %v1979
          %vm2271 = vcmp.eq.f32.partialorder %v2270, 8.507059e+37
          %v2272 = vand.u32 %v1979, 2147483648
          %v2273 = vor.u32 1.1754944e-38, %v2272
          %v2274 = vsel %vm2271, %v2273, %v2269
          %v2275 = vmul.f32 1.0, %v2274
          %v2276 = vrcp.pop %v1980
          %v2277 = vmul.f32 %v1980, %v2276
          %v2278 = vsub.f32 1.0, %v2277
          %v2279 = vmul.f32 %v2276, %v2278
          %v2280 = vadd.f32 %v2276, %v2279
          %vm2281 = vweird.f32 %v1980
          %vm2282 = vweird.f32 %v2276
          %vm2283 = vmor %vm2281, %vm2282
          %v2284 = vsel %vm2283, %v2276, %v2280
          %v2285 = vand.u32 2147483647, %v1980
          %vm2286 = vcmp.eq.f32.partialorder %v2285, 8.507059e+37
          %v2287 = vand.u32 %v1980, 2147483648
          %v2288 = vor.u32 1.1754944e-38, %v2287
          %v2289 = vsel %vm2286, %v2288, %v2284
          %v2290 = vmul.f32 1.0, %v2289
          %v2291 = vrcp.pop %v1981
          %v2292 = vmul.f32 %v1981, %v2291
          %v2293 = vsub.f32 1.0, %v2292
          %v2294 = vmul.f32 %v2291, %v2293
          %v2295 = vadd.f32 %v2291, %v2294
          %vm2296 = vweird.f32 %v1981
          %vm2297 = vweird.f32 %v2291
          %vm2298 = vmor %vm2296, %vm2297
          %v2299 = vsel %vm2298, %v2291, %v2295
          %v2300 = vand.u32 2147483647, %v1981
          %vm2301 = vcmp.eq.f32.partialorder %v2300, 8.507059e+37
          %v2302 = vand.u32 %v1981, 2147483648
          %v2303 = vor.u32 1.1754944e-38, %v2302
          %v2304 = vsel %vm2301, %v2303, %v2299
          %v2305 = vmul.f32 1.0, %v2304
          %v2306 = vrcp.pop %v1982
          %v2307 = vmul.f32 %v1982, %v2306
          %v2308 = vsub.f32 1.0, %v2307
          %v2309 = vmul.f32 %v2306, %v2308
          %v2310 = vadd.f32 %v2306, %v2309
          %vm2311 = vweird.f32 %v1982
          %vm2312 = vweird.f32 %v2306
          %vm2313 = vmor %vm2311, %vm2312
          %v2314 = vsel %vm2313, %v2306, %v2310
          %v2315 = vand.u32 2147483647, %v1982
          %vm2316 = vcmp.eq.f32.partialorder %v2315, 8.507059e+37
          %v2317 = vand.u32 %v1982, 2147483648
          %v2318 = vor.u32 1.1754944e-38, %v2317
          %v2319 = vsel %vm2316, %v2318, %v2314
          %v2320 = vmul.f32 1.0, %v2319
          %v2321 = vrcp.pop %v1983
          %v2322 = vmul.f32 %v1983, %v2321
          %v2323 = vsub.f32 1.0, %v2322
          %v2324 = vmul.f32 %v2321, %v2323
          %v2325 = vadd.f32 %v2321, %v2324
          %vm2326 = vweird.f32 %v1983
          %vm2327 = vweird.f32 %v2321
          %vm2328 = vmor %vm2326, %vm2327
          %v2329 = vsel %vm2328, %v2321, %v2325
          %v2330 = vand.u32 2147483647, %v1983
          %vm2331 = vcmp.eq.f32.partialorder %v2330, 8.507059e+37
          %v2332 = vand.u32 %v1983, 2147483648
          %v2333 = vor.u32 1.1754944e-38, %v2332
          %v2334 = vsel %vm2331, %v2333, %v2329
          %v2335 = vmul.f32 1.0, %v2334
          %v2336 = vrcp.pop %v1984
          %v2337 = vmul.f32 %v1984, %v2336
          %v2338 = vsub.f32 1.0, %v2337
          %v2339 = vmul.f32 %v2336, %v2338
          %v2340 = vadd.f32 %v2336, %v2339
          %vm2341 = vweird.f32 %v1984
          %vm2342 = vweird.f32 %v2336
          %vm2343 = vmor %vm2341, %vm2342
          %v2344 = vsel %vm2343, %v2336, %v2340
          %v2345 = vand.u32 2147483647, %v1984
          %vm2346 = vcmp.eq.f32.partialorder %v2345, 8.507059e+37
          %v2347 = vand.u32 %v1984, 2147483648
          %v2348 = vor.u32 1.1754944e-38, %v2347
          %v2349 = vsel %vm2346, %v2348, %v2344
          %v2350 = vmul.f32 1.0, %v2349
          %v2351 = vrcp.pop %v1985
          %v2352 = vmul.f32 %v1985, %v2351
          %v2353 = vsub.f32 1.0, %v2352
          %v2354 = vmul.f32 %v2351, %v2353
          %v2355 = vadd.f32 %v2351, %v2354
          %vm2356 = vweird.f32 %v1985
          %vm2357 = vweird.f32 %v2351
          %vm2358 = vmor %vm2356, %vm2357
          %v2359 = vsel %vm2358, %v2351, %v2355
          %v2360 = vand.u32 2147483647, %v1985
          %vm2361 = vcmp.eq.f32.partialorder %v2360, 8.507059e+37
          %v2362 = vand.u32 %v1985, 2147483648
          %v2363 = vor.u32 1.1754944e-38, %v2362
          %v2364 = vsel %vm2361, %v2363, %v2359
          %v2365 = vmul.f32 1.0, %v2364
          %v2366 = vrcp.pop %v1986
          %v2367 = vmul.f32 %v1986, %v2366
          %v2368 = vsub.f32 1.0, %v2367
          %v2369 = vmul.f32 %v2366, %v2368
          %v2370 = vadd.f32 %v2366, %v2369
          %vm2371 = vweird.f32 %v1986
          %vm2372 = vweird.f32 %v2366
          %vm2373 = vmor %vm2371, %vm2372
          %v2374 = vsel %vm2373, %v2366, %v2370
          %v2375 = vand.u32 2147483647, %v1986
          %vm2376 = vcmp.eq.f32.partialorder %v2375, 8.507059e+37
          %v2377 = vand.u32 %v1986, 2147483648
          %v2378 = vor.u32 1.1754944e-38, %v2377
          %v2379 = vsel %vm2376, %v2378, %v2374
          %v2380 = vmul.f32 1.0, %v2379
          %v2381 = vrcp.pop %v1987
          %v2382 = vmul.f32 %v1987, %v2381
          %v2383 = vsub.f32 1.0, %v2382
          %v2384 = vmul.f32 %v2381, %v2383
          %v2385 = vadd.f32 %v2381, %v2384
          %vm2386 = vweird.f32 %v1987
          %vm2387 = vweird.f32 %v2381
          %vm2388 = vmor %vm2386, %vm2387
          %v2389 = vsel %vm2388, %v2381, %v2385
          %v2390 = vand.u32 2147483647, %v1987
          %vm2391 = vcmp.eq.f32.partialorder %v2390, 8.507059e+37
          %v2392 = vand.u32 %v1987, 2147483648
          %v2393 = vor.u32 1.1754944e-38, %v2392
          %v2394 = vsel %vm2391, %v2393, %v2389
          %v2395 = vmul.f32 1.0, %v2394
          %v2396 = vrcp.pop %v1988
          %v2397 = vmul.f32 %v1988, %v2396
          %v2398 = vsub.f32 1.0, %v2397
          %v2399 = vmul.f32 %v2396, %v2398
          %v2400 = vadd.f32 %v2396, %v2399
          %vm2401 = vweird.f32 %v1988
          %vm2402 = vweird.f32 %v2396
          %vm2403 = vmor %vm2401, %vm2402
          %v2404 = vsel %vm2403, %v2396, %v2400
          %v2405 = vand.u32 2147483647, %v1988
          %vm2406 = vcmp.eq.f32.partialorder %v2405, 8.507059e+37
          %v2407 = vand.u32 %v1988, 2147483648
          %v2408 = vor.u32 1.1754944e-38, %v2407
          %v2409 = vsel %vm2406, %v2408, %v2404
          %v2410 = vmul.f32 1.0, %v2409
          %v2411 = vrcp.pop %v1989
          %v2412 = vmul.f32 %v1989, %v2411
          %v2413 = vsub.f32 1.0, %v2412
          %v2414 = vmul.f32 %v2411, %v2413
          %v2415 = vadd.f32 %v2411, %v2414
          %vm2416 = vweird.f32 %v1989
          %vm2417 = vweird.f32 %v2411
          %vm2418 = vmor %vm2416, %vm2417
          %v2419 = vsel %vm2418, %v2411, %v2415
          %v2420 = vand.u32 2147483647, %v1989
          %vm2421 = vcmp.eq.f32.partialorder %v2420, 8.507059e+37
          %v2422 = vand.u32 %v1989, 2147483648
          %v2423 = vor.u32 1.1754944e-38, %v2422
          %v2424 = vsel %vm2421, %v2423, %v2419
          %v2425 = vmul.f32 1.0, %v2424
          %v2426 = vrcp.pop %v1990
          %v2427 = vmul.f32 %v1990, %v2426
          %v2428 = vsub.f32 1.0, %v2427
          %v2429 = vmul.f32 %v2426, %v2428
          %v2430 = vadd.f32 %v2426, %v2429
          %vm2431 = vweird.f32 %v1990
          %vm2432 = vweird.f32 %v2426
          %vm2433 = vmor %vm2431, %vm2432
          %v2434 = vsel %vm2433, %v2426, %v2430
          %v2435 = vand.u32 2147483647, %v1990
          %vm2436 = vcmp.eq.f32.partialorder %v2435, 8.507059e+37
          %v2437 = vand.u32 %v1990, 2147483648
          %v2438 = vor.u32 1.1754944e-38, %v2437
          %v2439 = vsel %vm2436, %v2438, %v2434
          %v2440 = vmul.f32 1.0, %v2439
          %v2441 = vmul.f32 %v997, %v2005
          %v2442 = vmul.f32 %v998, %v2020
          %v2443 = vmul.f32 %v999, %v2035
          %v2444 = vmul.f32 %v1000, %v2050
          %v2445 = vmul.f32 %v1001, %v2065
          %v2446 = vmul.f32 %v1002, %v2080
          %v2447 = vmul.f32 %v1003, %v2095
          %v2448 = vmul.f32 %v1004, %v2110
          %v2449 = vmul.f32 %v1005, %v2125
          %v2450 = vmul.f32 %v1006, %v2140
          %v2451 = vmul.f32 %v1007, %v2155
          %v2452 = vmul.f32 %v1008, %v2170
          %v2453 = vmul.f32 %v1009, %v2185
          %v2454 = vmul.f32 %v1010, %v2200
          %v2455 = vmul.f32 %v1011, %v2215
          %v2456 = vmul.f32 %v1012, %v2230
          %v2457 = vmul.f32 %v1013, %v2245
          %v2458 = vmul.f32 %v1014, %v2260
          %v2459 = vmul.f32 %v1015, %v2275
          %v2460 = vmul.f32 %v1016, %v2290
          %v2461 = vmul.f32 %v1017, %v2305
          %v2462 = vmul.f32 %v1018, %v2320
          %v2463 = vmul.f32 %v1019, %v2335
          %v2464 = vmul.f32 %v1020, %v2350
          %v2465 = vmul.f32 %v1021, %v2365
          %v2466 = vmul.f32 %v1022, %v2380
          %v2467 = vmul.f32 %v1023, %v2395
          %v2468 = vmul.f32 %v1024, %v2410
          %v2469 = vmul.f32 %v1025, %v2425
          %v2470 = vmul.f32 %v1026, %v2440
          %v2471 = vpack.c.bf16 %v2441, %v2441
          %v2472 = vpack.c.bf16 %v2442, %v2442
          %v2473 = vpack.c.bf16 %v2443, %v2443
          %v2474 = vpack.c.bf16 %v2444, %v2444
          %v2475 = vpack.c.bf16 %v2445, %v2445
          %v2476 = vpack.c.bf16 %v2446, %v2446
          %v2477 = vpack.c.bf16 %v2447, %v2447
          %v2478 = vpack.c.bf16 %v2448, %v2448
          %v2479 = vpack.c.bf16 %v2449, %v2449
          %v2480 = vpack.c.bf16 %v2450, %v2450
          %v2481 = vpack.c.bf16 %v2451, %v2451
          %v2482 = vpack.c.bf16 %v2452, %v2452
          %v2483 = vpack.c.bf16 %v2453, %v2453
          %v2484 = vpack.c.bf16 %v2454, %v2454
          %v2485 = vpack.c.bf16 %v2455, %v2455
          %v2486 = vpack.c.bf16 %v2456, %v2456
          %v2487 = vpack.c.bf16 %v2457, %v2457
          %v2488 = vpack.c.bf16 %v2458, %v2458
          %v2489 = vpack.c.bf16 %v2459, %v2459
          %v2490 = vpack.c.bf16 %v2460, %v2460
          %v2491 = vpack.c.bf16 %v2461, %v2461
          %v2492 = vpack.c.bf16 %v2462, %v2462
          %v2493 = vpack.c.bf16 %v2463, %v2463
          %v2494 = vpack.c.bf16 %v2464, %v2464
          %v2495 = vpack.c.bf16 %v2465, %v2465
          %v2496 = vpack.c.bf16 %v2466, %v2466
          %v2497 = vpack.c.bf16 %v2467, %v2467
          %v2498 = vpack.c.bf16 %v2468, %v2468
          %v2499 = vpack.c.bf16 %v2469, %v2469
          %v2500 = vpack.c.bf16 %v2470, %v2470
          %2531 = vrot.lane.b32.xlu0 %v2471, 4
          %v2532 = vpop.permute.xlu0 %2531
          %2533 = vrot.lane.b32.xlu0 %v2472, 4
          %v2534 = vpop.permute.xlu0 %2533
          %2535 = vrot.lane.b32.xlu0 %v2473, 4
          %v2536 = vpop.permute.xlu0 %2535
          %2537 = vrot.lane.b32.xlu0 %v2474, 4
          %v2538 = vpop.permute.xlu0 %2537
          %2539 = vrot.lane.b32.xlu0 %v2475, 4
          %v2540 = vpop.permute.xlu0 %2539
          %2541 = vrot.lane.b32.xlu0 %v2476, 4
          %v2542 = vpop.permute.xlu0 %2541
          %2543 = vrot.lane.b32.xlu0 %v2477, 4
          %v2544 = vpop.permute.xlu0 %2543
          %2545 = vrot.lane.b32.xlu0 %v2478, 4
          %v2546 = vpop.permute.xlu0 %2545
          %2547 = vrot.lane.b32.xlu0 %v2479, 4
          %v2548 = vpop.permute.xlu0 %2547
          %2549 = vrot.lane.b32.xlu0 %v2480, 4
          %v2550 = vpop.permute.xlu0 %2549
          %2551 = vrot.lane.b32.xlu0 %v2481, 4
          %v2552 = vpop.permute.xlu0 %2551
          %2553 = vrot.lane.b32.xlu0 %v2482, 4
          %v2554 = vpop.permute.xlu0 %2553
          %2555 = vrot.lane.b32.xlu0 %v2483, 4
          %v2556 = vpop.permute.xlu0 %2555
          %2557 = vrot.lane.b32.xlu0 %v2484, 4
          %v2558 = vpop.permute.xlu0 %2557
          %2559 = vrot.lane.b32.xlu0 %v2485, 4
          %v2560 = vpop.permute.xlu0 %2559
          %2561 = vrot.lane.b32.xlu0 %v2486, 4
          %v2562 = vpop.permute.xlu0 %2561
          %2563 = vrot.lane.b32.xlu0 %v2487, 4
          %v2564 = vpop.permute.xlu0 %2563
          %2565 = vrot.lane.b32.xlu0 %v2488, 4
          %v2566 = vpop.permute.xlu0 %2565
          %2567 = vrot.lane.b32.xlu0 %v2489, 4
          %v2568 = vpop.permute.xlu0 %2567
          %2569 = vrot.lane.b32.xlu0 %v2490, 4
          %v2570 = vpop.permute.xlu0 %2569
          %2571 = vrot.lane.b32.xlu0 %v2491, 4
          %v2572 = vpop.permute.xlu0 %2571
          %2573 = vrot.lane.b32.xlu0 %v2492, 4
          %v2574 = vpop.permute.xlu0 %2573
          %2575 = vrot.lane.b32.xlu0 %v2493, 4
          %v2576 = vpop.permute.xlu0 %2575
          %2577 = vrot.lane.b32.xlu0 %v2494, 4
          %v2578 = vpop.permute.xlu0 %2577
          %2579 = vrot.lane.b32.xlu0 %v2495, 4
          %v2580 = vpop.permute.xlu0 %2579
          %2581 = vrot.lane.b32.xlu0 %v2496, 4
          %v2582 = vpop.permute.xlu0 %2581
          %2583 = vrot.lane.b32.xlu0 %v2497, 4
          %v2584 = vpop.permute.xlu0 %2583
          %2585 = vrot.lane.b32.xlu0 %v2498, 4
          %v2586 = vpop.permute.xlu0 %2585
          %2587 = vrot.lane.b32.xlu0 %v2499, 4
          %v2588 = vpop.permute.xlu0 %2587
          %2589 = vrot.lane.b32.xlu0 %v2500, 4
          %v2590 = vpop.permute.xlu0 %2589
          %vm2621 = vcmask 60448
          %2622 = vst.msk [vmem:[#allocation2] sm:$0xf] %vm2621, %v2532
          %2623 = vst.msk [vmem:[#allocation2 + $0x4] sm:$0xf] %vm2621, %v2534
          %vm2624 = vcmask 57376
          %2625 = vst.msk [vmem:[#allocation2 + $0x8] sm:$0x1] %vm2624, %v2536
          %2626 = vst.msk [vmem:[#allocation2 + $0xc] sm:$0xf] %vm2621, %v2538
          %2627 = vst.msk [vmem:[#allocation2 + $0x10] sm:$0xf] %vm2621, %v2540
          %2628 = vst.msk [vmem:[#allocation2 + $0x14] sm:$0x1] %vm2624, %v2542
          %2629 = vst.msk [vmem:[#allocation2 + $0x18] sm:$0xf] %vm2621, %v2544
          %2630 = vst.msk [vmem:[#allocation2 + $0x1c] sm:$0xf] %vm2621, %v2546
          %2631 = vst.msk [vmem:[#allocation2 + $0x20] sm:$0x1] %vm2624, %v2548
          %2632 = vst.msk [vmem:[#allocation2 + $0x24] sm:$0xf] %vm2621, %v2550
          %2633 = vst.msk [vmem:[#allocation2 + $0x28] sm:$0xf] %vm2621, %v2552
          %2634 = vst.msk [vmem:[#allocation2 + $0x2c] sm:$0x1] %vm2624, %v2554
          %2635 = vst.msk [vmem:[#allocation2 + $0x30] sm:$0xf] %vm2621, %v2556
          %2636 = vst.msk [vmem:[#allocation2 + $0x34] sm:$0xf] %vm2621, %v2558
          %2637 = vst.msk [vmem:[#allocation2 + $0x38] sm:$0x1] %vm2624, %v2560
          %2638 = vst.msk [vmem:[#allocation2 + $0x3c] sm:$0xf] %vm2621, %v2562
          %2639 = vst.msk [vmem:[#allocation2 + $0x40] sm:$0xf] %vm2621, %v2564
          %2640 = vst.msk [vmem:[#allocation2 + $0x44] sm:$0x1] %vm2624, %v2566
          %2641 = vst.msk [vmem:[#allocation2 + $0x48] sm:$0xf] %vm2621, %v2568
          %2642 = vst.msk [vmem:[#allocation2 + $0x4c] sm:$0xf] %vm2621, %v2570
          %2643 = vst.msk [vmem:[#allocation2 + $0x50] sm:$0x1] %vm2624, %v2572
          %2644 = vst.msk [vmem:[#allocation2 + $0x54] sm:$0xf] %vm2621, %v2574
          %2645 = vst.msk [vmem:[#allocation2 + $0x58] sm:$0xf] %vm2621, %v2576
          %2646 = vst.msk [vmem:[#allocation2 + $0x5c] sm:$0x1] %vm2624, %v2578
          %2647 = vst.msk [vmem:[#allocation2 + $0x60] sm:$0xf] %vm2621, %v2580
          %2648 = vst.msk [vmem:[#allocation2 + $0x64] sm:$0xf] %vm2621, %v2582
          %2649 = vst.msk [vmem:[#allocation2 + $0x68] sm:$0x1] %vm2624, %v2584
          %2650 = vst.msk [vmem:[#allocation2 + $0x6c] sm:$0xf] %vm2621, %v2586
          %2651 = vst.msk [vmem:[#allocation2 + $0x70] sm:$0xf] %vm2621, %v2588
          %2652 = vst.msk [vmem:[#allocation2 + $0x74] sm:$0x1] %vm2624, %v2590
          %v2653 = vmul.f32 %v997, %v997
          %v2654 = vmul.f32 %v998, %v998
          %v2655 = vmul.f32 %v999, %v999
          %v2656 = vmul.f32 %v1000, %v1000
          %v2657 = vmul.f32 %v1001, %v1001
          %v2658 = vmul.f32 %v1002, %v1002
          %v2659 = vmul.f32 %v1003, %v1003
          %v2660 = vmul.f32 %v1004, %v1004
          %v2661 = vmul.f32 %v1005, %v1005
          %v2662 = vmul.f32 %v1006, %v1006
          %v2663 = vmul.f32 %v1007, %v1007
          %v2664 = vmul.f32 %v1008, %v1008
          %v2665 = vmul.f32 %v1009, %v1009
          %v2666 = vmul.f32 %v1010, %v1010
          %v2667 = vmul.f32 %v1011, %v1011
          %v2668 = vmul.f32 %v1012, %v1012
          %v2669 = vmul.f32 %v1013, %v1013
          %v2670 = vmul.f32 %v1014, %v1014
          %v2671 = vmul.f32 %v1015, %v1015
          %v2672 = vmul.f32 %v1016, %v1016
          %v2673 = vmul.f32 %v1017, %v1017
          %v2674 = vmul.f32 %v1018, %v1018
          %v2675 = vmul.f32 %v1019, %v1019
          %v2676 = vmul.f32 %v1020, %v1020
          %v2677 = vmul.f32 %v1021, %v1021
          %v2678 = vmul.f32 %v1022, %v1022
          %v2679 = vmul.f32 %v1023, %v1023
          %v2680 = vmul.f32 %v1024, %v1024
          %v2681 = vmul.f32 %v1025, %v1025
          %v2682 = vmul.f32 %v1026, %v1026
          %s2683 = sld [smem:[#allocation3]]
          %v2684 = vstv %s2683
          %v2685 = vmul.f32 %v2684, %v367
          %v2686 = vmul.f32 %v2684, %v368
          %v2687 = vmul.f32 %v2684, %v369
          %v2688 = vmul.f32 %v2684, %v370
          %v2689 = vmul.f32 %v2684, %v371
          %v2690 = vmul.f32 %v2684, %v372
          %v2691 = vmul.f32 %v2684, %v373
          %v2692 = vmul.f32 %v2684, %v374
          %v2693 = vmul.f32 %v2684, %v375
          %v2694 = vmul.f32 %v2684, %v376
          %v2695 = vmul.f32 %v2684, %v377
          %v2696 = vmul.f32 %v2684, %v378
          %v2697 = vmul.f32 %v2684, %v379
          %v2698 = vmul.f32 %v2684, %v380
          %v2699 = vmul.f32 %v2684, %v381
          %v2700 = vmul.f32 %v2684, %v382
          %v2701 = vmul.f32 %v2684, %v383
          %v2702 = vmul.f32 %v2684, %v384
          %v2703 = vmul.f32 %v2684, %v385
          %v2704 = vmul.f32 %v2684, %v386
          %v2705 = vmul.f32 %v2684, %v387
          %v2706 = vmul.f32 %v2684, %v388
          %v2707 = vmul.f32 %v2684, %v389
          %v2708 = vmul.f32 %v2684, %v390
          %v2709 = vmul.f32 %v2684, %v391
          %v2710 = vmul.f32 %v2684, %v392
          %v2711 = vmul.f32 %v2684, %v393
          %v2712 = vmul.f32 %v2684, %v394
          %v2713 = vmul.f32 %v2684, %v395
          %v2714 = vmul.f32 %v2684, %v396
          %v2715 = vsub.f32 %v2653, %v2685
          %v2716 = vsub.f32 %v2654, %v2686
          %v2717 = vsub.f32 %v2655, %v2687
          %v2718 = vsub.f32 %v2656, %v2688
          %v2719 = vsub.f32 %v2657, %v2689
          %v2720 = vsub.f32 %v2658, %v2690
          %v2721 = vsub.f32 %v2659, %v2691
          %v2722 = vsub.f32 %v2660, %v2692
          %v2723 = vsub.f32 %v2661, %v2693
          %v2724 = vsub.f32 %v2662, %v2694
          %v2725 = vsub.f32 %v2663, %v2695
          %v2726 = vsub.f32 %v2664, %v2696
          %v2727 = vsub.f32 %v2665, %v2697
          %v2728 = vsub.f32 %v2666, %v2698
          %v2729 = vsub.f32 %v2667, %v2699
          %v2730 = vsub.f32 %v2668, %v2700
          %v2731 = vsub.f32 %v2669, %v2701
          %v2732 = vsub.f32 %v2670, %v2702
          %v2733 = vsub.f32 %v2671, %v2703
          %v2734 = vsub.f32 %v2672, %v2704
          %v2735 = vsub.f32 %v2673, %v2705
          %v2736 = vsub.f32 %v2674, %v2706
          %v2737 = vsub.f32 %v2675, %v2707
          %v2738 = vsub.f32 %v2676, %v2708
          %v2739 = vsub.f32 %v2677, %v2709
          %v2740 = vsub.f32 %v2678, %v2710
          %v2741 = vsub.f32 %v2679, %v2711
          %v2742 = vsub.f32 %v2680, %v2712
          %v2743 = vsub.f32 %v2681, %v2713
          %v2744 = vsub.f32 %v2682, %v2714
          %v2745 = vxor.u32 %v2715, 2147483648
          %v2746 = vxor.u32 %v2716, 2147483648
          %v2747 = vxor.u32 %v2717, 2147483648
          %v2748 = vxor.u32 %v2718, 2147483648
          %v2749 = vxor.u32 %v2719, 2147483648
          %v2750 = vxor.u32 %v2720, 2147483648
          %v2751 = vxor.u32 %v2721, 2147483648
          %v2752 = vxor.u32 %v2722, 2147483648
          %v2753 = vxor.u32 %v2723, 2147483648
          %v2754 = vxor.u32 %v2724, 2147483648
          %v2755 = vxor.u32 %v2725, 2147483648
          %v2756 = vxor.u32 %v2726, 2147483648
          %v2757 = vxor.u32 %v2727, 2147483648
          %v2758 = vxor.u32 %v2728, 2147483648
          %v2759 = vxor.u32 %v2729, 2147483648
          %v2760 = vxor.u32 %v2730, 2147483648
          %v2761 = vxor.u32 %v2731, 2147483648
          %v2762 = vxor.u32 %v2732, 2147483648
          %v2763 = vxor.u32 %v2733, 2147483648
          %v2764 = vxor.u32 %v2734, 2147483648
          %v2765 = vxor.u32 %v2735, 2147483648
          %v2766 = vxor.u32 %v2736, 2147483648
          %v2767 = vxor.u32 %v2737, 2147483648
          %v2768 = vxor.u32 %v2738, 2147483648
          %v2769 = vxor.u32 %v2739, 2147483648
          %v2770 = vxor.u32 %v2740, 2147483648
          %v2771 = vxor.u32 %v2741, 2147483648
          %v2772 = vxor.u32 %v2742, 2147483648
          %v2773 = vxor.u32 %v2743, 2147483648
          %v2774 = vxor.u32 %v2744, 2147483648
          %v2775 = vmul.f32 %v2745, 1.442695
          %v2776 = vpow.pop %v2775
          %v2777 = vmul.f32 %v2746, 1.442695
          %v2778 = vpow.pop %v2777
          %v2779 = vmul.f32 %v2747, 1.442695
          %v2780 = vpow.pop %v2779
          %v2781 = vmul.f32 %v2748, 1.442695
          %v2782 = vpow.pop %v2781
          %v2783 = vmul.f32 %v2749, 1.442695
          %v2784 = vpow.pop %v2783
          %v2785 = vmul.f32 %v2750, 1.442695
          %v2786 = vpow.pop %v2785
          %v2787 = vmul.f32 %v2751, 1.442695
          %v2788 = vpow.pop %v2787
          %v2789 = vmul.f32 %v2752, 1.442695
          %v2790 = vpow.pop %v2789
          %v2791 = vmul.f32 %v2753, 1.442695
          %v2792 = vpow.pop %v2791
          %v2793 = vmul.f32 %v2754, 1.442695
          %v2794 = vpow.pop %v2793
          %v2795 = vmul.f32 %v2755, 1.442695
          %v2796 = vpow.pop %v2795
          %v2797 = vmul.f32 %v2756, 1.442695
          %v2798 = vpow.pop %v2797
          %v2799 = vmul.f32 %v2757, 1.442695
          %v2800 = vpow.pop %v2799
          %v2801 = vmul.f32 %v2758, 1.442695
          %v2802 = vpow.pop %v2801
          %v2803 = vmul.f32 %v2759, 1.442695
          %v2804 = vpow.pop %v2803
          %v2805 = vmul.f32 %v2760, 1.442695
          %v2806 = vpow.pop %v2805
          %v2807 = vmul.f32 %v2761, 1.442695
          %v2808 = vpow.pop %v2807
          %v2809 = vmul.f32 %v2762, 1.442695
          %v2810 = vpow.pop %v2809
          %v2811 = vmul.f32 %v2763, 1.442695
          %v2812 = vpow.pop %v2811
          %v2813 = vmul.f32 %v2764, 1.442695
          %v2814 = vpow.pop %v2813
          %v2815 = vmul.f32 %v2765, 1.442695
          %v2816 = vpow.pop %v2815
          %v2817 = vmul.f32 %v2766, 1.442695
          %v2818 = vpow.pop %v2817
          %v2819 = vmul.f32 %v2767, 1.442695
          %v2820 = vpow.pop %v2819
          %v2821 = vmul.f32 %v2768, 1.442695
          %v2822 = vpow.pop %v2821
          %v2823 = vmul.f32 %v2769, 1.442695
          %v2824 = vpow.pop %v2823
          %v2825 = vmul.f32 %v2770, 1.442695
          %v2826 = vpow.pop %v2825
          %v2827 = vmul.f32 %v2771, 1.442695
          %v2828 = vpow.pop %v2827
          %v2829 = vmul.f32 %v2772, 1.442695
          %v2830 = vpow.pop %v2829
          %v2831 = vmul.f32 %v2773, 1.442695
          %v2832 = vpow.pop %v2831
          %v2833 = vmul.f32 %v2774, 1.442695
          %v2834 = vpow.pop %v2833
          %v2835 = vadd.f32 %v2776, 1.0
          %v2836 = vadd.f32 %v2778, 1.0
          %v2837 = vadd.f32 %v2780, 1.0
          %v2838 = vadd.f32 %v2782, 1.0
          %v2839 = vadd.f32 %v2784, 1.0
          %v2840 = vadd.f32 %v2786, 1.0
          %v2841 = vadd.f32 %v2788, 1.0
          %v2842 = vadd.f32 %v2790, 1.0
          %v2843 = vadd.f32 %v2792, 1.0
          %v2844 = vadd.f32 %v2794, 1.0
          %v2845 = vadd.f32 %v2796, 1.0
          %v2846 = vadd.f32 %v2798, 1.0
          %v2847 = vadd.f32 %v2800, 1.0
          %v2848 = vadd.f32 %v2802, 1.0
          %v2849 = vadd.f32 %v2804, 1.0
          %v2850 = vadd.f32 %v2806, 1.0
          %v2851 = vadd.f32 %v2808, 1.0
          %v2852 = vadd.f32 %v2810, 1.0
          %v2853 = vadd.f32 %v2812, 1.0
          %v2854 = vadd.f32 %v2814, 1.0
          %v2855 = vadd.f32 %v2816, 1.0
          %v2856 = vadd.f32 %v2818, 1.0
          %v2857 = vadd.f32 %v2820, 1.0
          %v2858 = vadd.f32 %v2822, 1.0
          %v2859 = vadd.f32 %v2824, 1.0
          %v2860 = vadd.f32 %v2826, 1.0
          %v2861 = vadd.f32 %v2828, 1.0
          %v2862 = vadd.f32 %v2830, 1.0
          %v2863 = vadd.f32 %v2832, 1.0
          %v2864 = vadd.f32 %v2834, 1.0
          %v2865 = vrcp.pop %v2835
          %v2866 = vmul.f32 %v2835, %v2865
          %v2867 = vsub.f32 1.0, %v2866
          %v2868 = vmul.f32 %v2865, %v2867
          %v2869 = vadd.f32 %v2865, %v2868
          %vm2870 = vweird.f32 %v2835
          %vm2871 = vweird.f32 %v2865
          %vm2872 = vmor %vm2870, %vm2871
          %v2873 = vsel %vm2872, %v2865, %v2869
          %v2874 = vand.u32 2147483647, %v2835
          %vm2875 = vcmp.eq.f32.partialorder %v2874, 8.507059e+37
          %v2876 = vand.u32 %v2835, 2147483648
          %v2877 = vor.u32 1.1754944e-38, %v2876
          %v2878 = vsel %vm2875, %v2877, %v2873
          %v2879 = vmul.f32 1.0, %v2878
          %v2880 = vrcp.pop %v2836
          %v2881 = vmul.f32 %v2836, %v2880
          %v2882 = vsub.f32 1.0, %v2881
          %v2883 = vmul.f32 %v2880, %v2882
          %v2884 = vadd.f32 %v2880, %v2883
          %vm2885 = vweird.f32 %v2836
          %vm2886 = vweird.f32 %v2880
          %vm2887 = vmor %vm2885, %vm2886
          %v2888 = vsel %vm2887, %v2880, %v2884
          %v2889 = vand.u32 2147483647, %v2836
          %vm2890 = vcmp.eq.f32.partialorder %v2889, 8.507059e+37
          %v2891 = vand.u32 %v2836, 2147483648
          %v2892 = vor.u32 1.1754944e-38, %v2891
          %v2893 = vsel %vm2890, %v2892, %v2888
          %v2894 = vmul.f32 1.0, %v2893
          %v2895 = vrcp.pop %v2837
          %v2896 = vmul.f32 %v2837, %v2895
          %v2897 = vsub.f32 1.0, %v2896
          %v2898 = vmul.f32 %v2895, %v2897
          %v2899 = vadd.f32 %v2895, %v2898
          %vm2900 = vweird.f32 %v2837
          %vm2901 = vweird.f32 %v2895
          %vm2902 = vmor %vm2900, %vm2901
          %v2903 = vsel %vm2902, %v2895, %v2899
          %v2904 = vand.u32 2147483647, %v2837
          %vm2905 = vcmp.eq.f32.partialorder %v2904, 8.507059e+37
          %v2906 = vand.u32 %v2837, 2147483648
          %v2907 = vor.u32 1.1754944e-38, %v2906
          %v2908 = vsel %vm2905, %v2907, %v2903
          %v2909 = vmul.f32 1.0, %v2908
          %v2910 = vrcp.pop %v2838
          %v2911 = vmul.f32 %v2838, %v2910
          %v2912 = vsub.f32 1.0, %v2911
          %v2913 = vmul.f32 %v2910, %v2912
          %v2914 = vadd.f32 %v2910, %v2913
          %vm2915 = vweird.f32 %v2838
          %vm2916 = vweird.f32 %v2910
          %vm2917 = vmor %vm2915, %vm2916
          %v2918 = vsel %vm2917, %v2910, %v2914
          %v2919 = vand.u32 2147483647, %v2838
          %vm2920 = vcmp.eq.f32.partialorder %v2919, 8.507059e+37
          %v2921 = vand.u32 %v2838, 2147483648
          %v2922 = vor.u32 1.1754944e-38, %v2921
          %v2923 = vsel %vm2920, %v2922, %v2918
          %v2924 = vmul.f32 1.0, %v2923
          %v2925 = vrcp.pop %v2839
          %v2926 = vmul.f32 %v2839, %v2925
          %v2927 = vsub.f32 1.0, %v2926
          %v2928 = vmul.f32 %v2925, %v2927
          %v2929 = vadd.f32 %v2925, %v2928
          %vm2930 = vweird.f32 %v2839
          %vm2931 = vweird.f32 %v2925
          %vm2932 = vmor %vm2930, %vm2931
          %v2933 = vsel %vm2932, %v2925, %v2929
          %v2934 = vand.u32 2147483647, %v2839
          %vm2935 = vcmp.eq.f32.partialorder %v2934, 8.507059e+37
          %v2936 = vand.u32 %v2839, 2147483648
          %v2937 = vor.u32 1.1754944e-38, %v2936
          %v2938 = vsel %vm2935, %v2937, %v2933
          %v2939 = vmul.f32 1.0, %v2938
          %v2940 = vrcp.pop %v2840
          %v2941 = vmul.f32 %v2840, %v2940
          %v2942 = vsub.f32 1.0, %v2941
          %v2943 = vmul.f32 %v2940, %v2942
          %v2944 = vadd.f32 %v2940, %v2943
          %vm2945 = vweird.f32 %v2840
          %vm2946 = vweird.f32 %v2940
          %vm2947 = vmor %vm2945, %vm2946
          %v2948 = vsel %vm2947, %v2940, %v2944
          %v2949 = vand.u32 2147483647, %v2840
          %vm2950 = vcmp.eq.f32.partialorder %v2949, 8.507059e+37
          %v2951 = vand.u32 %v2840, 2147483648
          %v2952 = vor.u32 1.1754944e-38, %v2951
          %v2953 = vsel %vm2950, %v2952, %v2948
          %v2954 = vmul.f32 1.0, %v2953
          %v2955 = vrcp.pop %v2841
          %v2956 = vmul.f32 %v2841, %v2955
          %v2957 = vsub.f32 1.0, %v2956
          %v2958 = vmul.f32 %v2955, %v2957
          %v2959 = vadd.f32 %v2955, %v2958
          %vm2960 = vweird.f32 %v2841
          %vm2961 = vweird.f32 %v2955
          %vm2962 = vmor %vm2960, %vm2961
          %v2963 = vsel %vm2962, %v2955, %v2959
          %v2964 = vand.u32 2147483647, %v2841
          %vm2965 = vcmp.eq.f32.partialorder %v2964, 8.507059e+37
          %v2966 = vand.u32 %v2841, 2147483648
          %v2967 = vor.u32 1.1754944e-38, %v2966
          %v2968 = vsel %vm2965, %v2967, %v2963
          %v2969 = vmul.f32 1.0, %v2968
          %v2970 = vrcp.pop %v2842
          %v2971 = vmul.f32 %v2842, %v2970
          %v2972 = vsub.f32 1.0, %v2971
          %v2973 = vmul.f32 %v2970, %v2972
          %v2974 = vadd.f32 %v2970, %v2973
          %vm2975 = vweird.f32 %v2842
          %vm2976 = vweird.f32 %v2970
          %vm2977 = vmor %vm2975, %vm2976
          %v2978 = vsel %vm2977, %v2970, %v2974
          %v2979 = vand.u32 2147483647, %v2842
          %vm2980 = vcmp.eq.f32.partialorder %v2979, 8.507059e+37
          %v2981 = vand.u32 %v2842, 2147483648
          %v2982 = vor.u32 1.1754944e-38, %v2981
          %v2983 = vsel %vm2980, %v2982, %v2978
          %v2984 = vmul.f32 1.0, %v2983
          %v2985 = vrcp.pop %v2843
          %v2986 = vmul.f32 %v2843, %v2985
          %v2987 = vsub.f32 1.0, %v2986
          %v2988 = vmul.f32 %v2985, %v2987
          %v2989 = vadd.f32 %v2985, %v2988
          %vm2990 = vweird.f32 %v2843
          %vm2991 = vweird.f32 %v2985
          %vm2992 = vmor %vm2990, %vm2991
          %v2993 = vsel %vm2992, %v2985, %v2989
          %v2994 = vand.u32 2147483647, %v2843
          %vm2995 = vcmp.eq.f32.partialorder %v2994, 8.507059e+37
          %v2996 = vand.u32 %v2843, 2147483648
          %v2997 = vor.u32 1.1754944e-38, %v2996
          %v2998 = vsel %vm2995, %v2997, %v2993
          %v2999 = vmul.f32 1.0, %v2998
          %v3000 = vrcp.pop %v2844
          %v3001 = vmul.f32 %v2844, %v3000
          %v3002 = vsub.f32 1.0, %v3001
          %v3003 = vmul.f32 %v3000, %v3002
          %v3004 = vadd.f32 %v3000, %v3003
          %vm3005 = vweird.f32 %v2844
          %vm3006 = vweird.f32 %v3000
          %vm3007 = vmor %vm3005, %vm3006
          %v3008 = vsel %vm3007, %v3000, %v3004
          %v3009 = vand.u32 2147483647, %v2844
          %vm3010 = vcmp.eq.f32.partialorder %v3009, 8.507059e+37
          %v3011 = vand.u32 %v2844, 2147483648
          %v3012 = vor.u32 1.1754944e-38, %v3011
          %v3013 = vsel %vm3010, %v3012, %v3008
          %v3014 = vmul.f32 1.0, %v3013
          %v3015 = vrcp.pop %v2845
          %v3016 = vmul.f32 %v2845, %v3015
          %v3017 = vsub.f32 1.0, %v3016
          %v3018 = vmul.f32 %v3015, %v3017
          %v3019 = vadd.f32 %v3015, %v3018
          %vm3020 = vweird.f32 %v2845
          %vm3021 = vweird.f32 %v3015
          %vm3022 = vmor %vm3020, %vm3021
          %v3023 = vsel %vm3022, %v3015, %v3019
          %v3024 = vand.u32 2147483647, %v2845
          %vm3025 = vcmp.eq.f32.partialorder %v3024, 8.507059e+37
          %v3026 = vand.u32 %v2845, 2147483648
          %v3027 = vor.u32 1.1754944e-38, %v3026
          %v3028 = vsel %vm3025, %v3027, %v3023
          %v3029 = vmul.f32 1.0, %v3028
          %v3030 = vrcp.pop %v2846
          %v3031 = vmul.f32 %v2846, %v3030
          %v3032 = vsub.f32 1.0, %v3031
          %v3033 = vmul.f32 %v3030, %v3032
          %v3034 = vadd.f32 %v3030, %v3033
          %vm3035 = vweird.f32 %v2846
          %vm3036 = vweird.f32 %v3030
          %vm3037 = vmor %vm3035, %vm3036
          %v3038 = vsel %vm3037, %v3030, %v3034
          %v3039 = vand.u32 2147483647, %v2846
          %vm3040 = vcmp.eq.f32.partialorder %v3039, 8.507059e+37
          %v3041 = vand.u32 %v2846, 2147483648
          %v3042 = vor.u32 1.1754944e-38, %v3041
          %v3043 = vsel %vm3040, %v3042, %v3038
          %v3044 = vmul.f32 1.0, %v3043
          %v3045 = vrcp.pop %v2847
          %v3046 = vmul.f32 %v2847, %v3045
          %v3047 = vsub.f32 1.0, %v3046
          %v3048 = vmul.f32 %v3045, %v3047
          %v3049 = vadd.f32 %v3045, %v3048
          %vm3050 = vweird.f32 %v2847
          %vm3051 = vweird.f32 %v3045
          %vm3052 = vmor %vm3050, %vm3051
          %v3053 = vsel %vm3052, %v3045, %v3049
          %v3054 = vand.u32 2147483647, %v2847
          %vm3055 = vcmp.eq.f32.partialorder %v3054, 8.507059e+37
          %v3056 = vand.u32 %v2847, 2147483648
          %v3057 = vor.u32 1.1754944e-38, %v3056
          %v3058 = vsel %vm3055, %v3057, %v3053
          %v3059 = vmul.f32 1.0, %v3058
          %v3060 = vrcp.pop %v2848
          %v3061 = vmul.f32 %v2848, %v3060
          %v3062 = vsub.f32 1.0, %v3061
          %v3063 = vmul.f32 %v3060, %v3062
          %v3064 = vadd.f32 %v3060, %v3063
          %vm3065 = vweird.f32 %v2848
          %vm3066 = vweird.f32 %v3060
          %vm3067 = vmor %vm3065, %vm3066
          %v3068 = vsel %vm3067, %v3060, %v3064
          %v3069 = vand.u32 2147483647, %v2848
          %vm3070 = vcmp.eq.f32.partialorder %v3069, 8.507059e+37
          %v3071 = vand.u32 %v2848, 2147483648
          %v3072 = vor.u32 1.1754944e-38, %v3071
          %v3073 = vsel %vm3070, %v3072, %v3068
          %v3074 = vmul.f32 1.0, %v3073
          %v3075 = vrcp.pop %v2849
          %v3076 = vmul.f32 %v2849, %v3075
          %v3077 = vsub.f32 1.0, %v3076
          %v3078 = vmul.f32 %v3075, %v3077
          %v3079 = vadd.f32 %v3075, %v3078
          %vm3080 = vweird.f32 %v2849
          %vm3081 = vweird.f32 %v3075
          %vm3082 = vmor %vm3080, %vm3081
          %v3083 = vsel %vm3082, %v3075, %v3079
          %v3084 = vand.u32 2147483647, %v2849
          %vm3085 = vcmp.eq.f32.partialorder %v3084, 8.507059e+37
          %v3086 = vand.u32 %v2849, 2147483648
          %v3087 = vor.u32 1.1754944e-38, %v3086
          %v3088 = vsel %vm3085, %v3087, %v3083
          %v3089 = vmul.f32 1.0, %v3088
          %v3090 = vrcp.pop %v2850
          %v3091 = vmul.f32 %v2850, %v3090
          %v3092 = vsub.f32 1.0, %v3091
          %v3093 = vmul.f32 %v3090, %v3092
          %v3094 = vadd.f32 %v3090, %v3093
          %vm3095 = vweird.f32 %v2850
          %vm3096 = vweird.f32 %v3090
          %vm3097 = vmor %vm3095, %vm3096
          %v3098 = vsel %vm3097, %v3090, %v3094
          %v3099 = vand.u32 2147483647, %v2850
          %vm3100 = vcmp.eq.f32.partialorder %v3099, 8.507059e+37
          %v3101 = vand.u32 %v2850, 2147483648
          %v3102 = vor.u32 1.1754944e-38, %v3101
          %v3103 = vsel %vm3100, %v3102, %v3098
          %v3104 = vmul.f32 1.0, %v3103
          %v3105 = vrcp.pop %v2851
          %v3106 = vmul.f32 %v2851, %v3105
          %v3107 = vsub.f32 1.0, %v3106
          %v3108 = vmul.f32 %v3105, %v3107
          %v3109 = vadd.f32 %v3105, %v3108
          %vm3110 = vweird.f32 %v2851
          %vm3111 = vweird.f32 %v3105
          %vm3112 = vmor %vm3110, %vm3111
          %v3113 = vsel %vm3112, %v3105, %v3109
          %v3114 = vand.u32 2147483647, %v2851
          %vm3115 = vcmp.eq.f32.partialorder %v3114, 8.507059e+37
          %v3116 = vand.u32 %v2851, 2147483648
          %v3117 = vor.u32 1.1754944e-38, %v3116
          %v3118 = vsel %vm3115, %v3117, %v3113
          %v3119 = vmul.f32 1.0, %v3118
          %v3120 = vrcp.pop %v2852
          %v3121 = vmul.f32 %v2852, %v3120
          %v3122 = vsub.f32 1.0, %v3121
          %v3123 = vmul.f32 %v3120, %v3122
          %v3124 = vadd.f32 %v3120, %v3123
          %vm3125 = vweird.f32 %v2852
          %vm3126 = vweird.f32 %v3120
          %vm3127 = vmor %vm3125, %vm3126
          %v3128 = vsel %vm3127, %v3120, %v3124
          %v3129 = vand.u32 2147483647, %v2852
          %vm3130 = vcmp.eq.f32.partialorder %v3129, 8.507059e+37
          %v3131 = vand.u32 %v2852, 2147483648
          %v3132 = vor.u32 1.1754944e-38, %v3131
          %v3133 = vsel %vm3130, %v3132, %v3128
          %v3134 = vmul.f32 1.0, %v3133
          %v3135 = vrcp.pop %v2853
          %v3136 = vmul.f32 %v2853, %v3135
          %v3137 = vsub.f32 1.0, %v3136
          %v3138 = vmul.f32 %v3135, %v3137
          %v3139 = vadd.f32 %v3135, %v3138
          %vm3140 = vweird.f32 %v2853
          %vm3141 = vweird.f32 %v3135
          %vm3142 = vmor %vm3140, %vm3141
          %v3143 = vsel %vm3142, %v3135, %v3139
          %v3144 = vand.u32 2147483647, %v2853
          %vm3145 = vcmp.eq.f32.partialorder %v3144, 8.507059e+37
          %v3146 = vand.u32 %v2853, 2147483648
          %v3147 = vor.u32 1.1754944e-38, %v3146
          %v3148 = vsel %vm3145, %v3147, %v3143
          %v3149 = vmul.f32 1.0, %v3148
          %v3150 = vrcp.pop %v2854
          %v3151 = vmul.f32 %v2854, %v3150
          %v3152 = vsub.f32 1.0, %v3151
          %v3153 = vmul.f32 %v3150, %v3152
          %v3154 = vadd.f32 %v3150, %v3153
          %vm3155 = vweird.f32 %v2854
          %vm3156 = vweird.f32 %v3150
          %vm3157 = vmor %vm3155, %vm3156
          %v3158 = vsel %vm3157, %v3150, %v3154
          %v3159 = vand.u32 2147483647, %v2854
          %vm3160 = vcmp.eq.f32.partialorder %v3159, 8.507059e+37
          %v3161 = vand.u32 %v2854, 2147483648
          %v3162 = vor.u32 1.1754944e-38, %v3161
          %v3163 = vsel %vm3160, %v3162, %v3158
          %v3164 = vmul.f32 1.0, %v3163
          %v3165 = vrcp.pop %v2855
          %v3166 = vmul.f32 %v2855, %v3165
          %v3167 = vsub.f32 1.0, %v3166
          %v3168 = vmul.f32 %v3165, %v3167
          %v3169 = vadd.f32 %v3165, %v3168
          %vm3170 = vweird.f32 %v2855
          %vm3171 = vweird.f32 %v3165
          %vm3172 = vmor %vm3170, %vm3171
          %v3173 = vsel %vm3172, %v3165, %v3169
          %v3174 = vand.u32 2147483647, %v2855
          %vm3175 = vcmp.eq.f32.partialorder %v3174, 8.507059e+37
          %v3176 = vand.u32 %v2855, 2147483648
          %v3177 = vor.u32 1.1754944e-38, %v3176
          %v3178 = vsel %vm3175, %v3177, %v3173
          %v3179 = vmul.f32 1.0, %v3178
          %v3180 = vrcp.pop %v2856
          %v3181 = vmul.f32 %v2856, %v3180
          %v3182 = vsub.f32 1.0, %v3181
          %v3183 = vmul.f32 %v3180, %v3182
          %v3184 = vadd.f32 %v3180, %v3183
          %vm3185 = vweird.f32 %v2856
          %vm3186 = vweird.f32 %v3180
          %vm3187 = vmor %vm3185, %vm3186
          %v3188 = vsel %vm3187, %v3180, %v3184
          %v3189 = vand.u32 2147483647, %v2856
          %vm3190 = vcmp.eq.f32.partialorder %v3189, 8.507059e+37
          %v3191 = vand.u32 %v2856, 2147483648
          %v3192 = vor.u32 1.1754944e-38, %v3191
          %v3193 = vsel %vm3190, %v3192, %v3188
          %v3194 = vmul.f32 1.0, %v3193
          %v3195 = vrcp.pop %v2857
          %v3196 = vmul.f32 %v2857, %v3195
          %v3197 = vsub.f32 1.0, %v3196
          %v3198 = vmul.f32 %v3195, %v3197
          %v3199 = vadd.f32 %v3195, %v3198
          %vm3200 = vweird.f32 %v2857
          %vm3201 = vweird.f32 %v3195
          %vm3202 = vmor %vm3200, %vm3201
          %v3203 = vsel %vm3202, %v3195, %v3199
          %v3204 = vand.u32 2147483647, %v2857
          %vm3205 = vcmp.eq.f32.partialorder %v3204, 8.507059e+37
          %v3206 = vand.u32 %v2857, 2147483648
          %v3207 = vor.u32 1.1754944e-38, %v3206
          %v3208 = vsel %vm3205, %v3207, %v3203
          %v3209 = vmul.f32 1.0, %v3208
          %v3210 = vrcp.pop %v2858
          %v3211 = vmul.f32 %v2858, %v3210
          %v3212 = vsub.f32 1.0, %v3211
          %v3213 = vmul.f32 %v3210, %v3212
          %v3214 = vadd.f32 %v3210, %v3213
          %vm3215 = vweird.f32 %v2858
          %vm3216 = vweird.f32 %v3210
          %vm3217 = vmor %vm3215, %vm3216
          %v3218 = vsel %vm3217, %v3210, %v3214
          %v3219 = vand.u32 2147483647, %v2858
          %vm3220 = vcmp.eq.f32.partialorder %v3219, 8.507059e+37
          %v3221 = vand.u32 %v2858, 2147483648
          %v3222 = vor.u32 1.1754944e-38, %v3221
          %v3223 = vsel %vm3220, %v3222, %v3218
          %v3224 = vmul.f32 1.0, %v3223
          %v3225 = vrcp.pop %v2859
          %v3226 = vmul.f32 %v2859, %v3225
          %v3227 = vsub.f32 1.0, %v3226
          %v3228 = vmul.f32 %v3225, %v3227
          %v3229 = vadd.f32 %v3225, %v3228
          %vm3230 = vweird.f32 %v2859
          %vm3231 = vweird.f32 %v3225
          %vm3232 = vmor %vm3230, %vm3231
          %v3233 = vsel %vm3232, %v3225, %v3229
          %v3234 = vand.u32 2147483647, %v2859
          %vm3235 = vcmp.eq.f32.partialorder %v3234, 8.507059e+37
          %v3236 = vand.u32 %v2859, 2147483648
          %v3237 = vor.u32 1.1754944e-38, %v3236
          %v3238 = vsel %vm3235, %v3237, %v3233
          %v3239 = vmul.f32 1.0, %v3238
          %v3240 = vrcp.pop %v2860
          %v3241 = vmul.f32 %v2860, %v3240
          %v3242 = vsub.f32 1.0, %v3241
          %v3243 = vmul.f32 %v3240, %v3242
          %v3244 = vadd.f32 %v3240, %v3243
          %vm3245 = vweird.f32 %v2860
          %vm3246 = vweird.f32 %v3240
          %vm3247 = vmor %vm3245, %vm3246
          %v3248 = vsel %vm3247, %v3240, %v3244
          %v3249 = vand.u32 2147483647, %v2860
          %vm3250 = vcmp.eq.f32.partialorder %v3249, 8.507059e+37
          %v3251 = vand.u32 %v2860, 2147483648
          %v3252 = vor.u32 1.1754944e-38, %v3251
          %v3253 = vsel %vm3250, %v3252, %v3248
          %v3254 = vmul.f32 1.0, %v3253
          %v3255 = vrcp.pop %v2861
          %v3256 = vmul.f32 %v2861, %v3255
          %v3257 = vsub.f32 1.0, %v3256
          %v3258 = vmul.f32 %v3255, %v3257
          %v3259 = vadd.f32 %v3255, %v3258
          %vm3260 = vweird.f32 %v2861
          %vm3261 = vweird.f32 %v3255
          %vm3262 = vmor %vm3260, %vm3261
          %v3263 = vsel %vm3262, %v3255, %v3259
          %v3264 = vand.u32 2147483647, %v2861
          %vm3265 = vcmp.eq.f32.partialorder %v3264, 8.507059e+37
          %v3266 = vand.u32 %v2861, 2147483648
          %v3267 = vor.u32 1.1754944e-38, %v3266
          %v3268 = vsel %vm3265, %v3267, %v3263
          %v3269 = vmul.f32 1.0, %v3268
          %v3270 = vrcp.pop %v2862
          %v3271 = vmul.f32 %v2862, %v3270
          %v3272 = vsub.f32 1.0, %v3271
          %v3273 = vmul.f32 %v3270, %v3272
          %v3274 = vadd.f32 %v3270, %v3273
          %vm3275 = vweird.f32 %v2862
          %vm3276 = vweird.f32 %v3270
          %vm3277 = vmor %vm3275, %vm3276
          %v3278 = vsel %vm3277, %v3270, %v3274
          %v3279 = vand.u32 2147483647, %v2862
          %vm3280 = vcmp.eq.f32.partialorder %v3279, 8.507059e+37
          %v3281 = vand.u32 %v2862, 2147483648
          %v3282 = vor.u32 1.1754944e-38, %v3281
          %v3283 = vsel %vm3280, %v3282, %v3278
          %v3284 = vmul.f32 1.0, %v3283
          %v3285 = vrcp.pop %v2863
          %v3286 = vmul.f32 %v2863, %v3285
          %v3287 = vsub.f32 1.0, %v3286
          %v3288 = vmul.f32 %v3285, %v3287
          %v3289 = vadd.f32 %v3285, %v3288
          %vm3290 = vweird.f32 %v2863
          %vm3291 = vweird.f32 %v3285
          %vm3292 = vmor %vm3290, %vm3291
          %v3293 = vsel %vm3292, %v3285, %v3289
          %v3294 = vand.u32 2147483647, %v2863
          %vm3295 = vcmp.eq.f32.partialorder %v3294, 8.507059e+37
          %v3296 = vand.u32 %v2863, 2147483648
          %v3297 = vor.u32 1.1754944e-38, %v3296
          %v3298 = vsel %vm3295, %v3297, %v3293
          %v3299 = vmul.f32 1.0, %v3298
          %v3300 = vrcp.pop %v2864
          %v3301 = vmul.f32 %v2864, %v3300
          %v3302 = vsub.f32 1.0, %v3301
          %v3303 = vmul.f32 %v3300, %v3302
          %v3304 = vadd.f32 %v3300, %v3303
          %vm3305 = vweird.f32 %v2864
          %vm3306 = vweird.f32 %v3300
          %vm3307 = vmor %vm3305, %vm3306
          %v3308 = vsel %vm3307, %v3300, %v3304
          %v3309 = vand.u32 2147483647, %v2864
          %vm3310 = vcmp.eq.f32.partialorder %v3309, 8.507059e+37
          %v3311 = vand.u32 %v2864, 2147483648
          %v3312 = vor.u32 1.1754944e-38, %v3311
          %v3313 = vsel %vm3310, %v3312, %v3308
          %v3314 = vmul.f32 1.0, %v3313
          %v3315 = vmul.f32 %v2715, %v2879
          %v3316 = vmul.f32 %v2716, %v2894
          %v3317 = vmul.f32 %v2717, %v2909
          %v3318 = vmul.f32 %v2718, %v2924
          %v3319 = vmul.f32 %v2719, %v2939
          %v3320 = vmul.f32 %v2720, %v2954
          %v3321 = vmul.f32 %v2721, %v2969
          %v3322 = vmul.f32 %v2722, %v2984
          %v3323 = vmul.f32 %v2723, %v2999
          %v3324 = vmul.f32 %v2724, %v3014
          %v3325 = vmul.f32 %v2725, %v3029
          %v3326 = vmul.f32 %v2726, %v3044
          %v3327 = vmul.f32 %v2727, %v3059
          %v3328 = vmul.f32 %v2728, %v3074
          %v3329 = vmul.f32 %v2729, %v3089
          %v3330 = vmul.f32 %v2730, %v3104
          %v3331 = vmul.f32 %v2731, %v3119
          %v3332 = vmul.f32 %v2732, %v3134
          %v3333 = vmul.f32 %v2733, %v3149
          %v3334 = vmul.f32 %v2734, %v3164
          %v3335 = vmul.f32 %v2735, %v3179
          %v3336 = vmul.f32 %v2736, %v3194
          %v3337 = vmul.f32 %v2737, %v3209
          %v3338 = vmul.f32 %v2738, %v3224
          %v3339 = vmul.f32 %v2739, %v3239
          %v3340 = vmul.f32 %v2740, %v3254
          %v3341 = vmul.f32 %v2741, %v3269
          %v3342 = vmul.f32 %v2742, %v3284
          %v3343 = vmul.f32 %v2743, %v3299
          %v3344 = vmul.f32 %v2744, %v3314
          %v3345 = vpack.c.bf16 %v3315, %v3315
          %v3346 = vpack.c.bf16 %v3316, %v3316
          %v3347 = vpack.c.bf16 %v3317, %v3317
          %v3348 = vpack.c.bf16 %v3318, %v3318
          %v3349 = vpack.c.bf16 %v3319, %v3319
          %v3350 = vpack.c.bf16 %v3320, %v3320
          %v3351 = vpack.c.bf16 %v3321, %v3321
          %v3352 = vpack.c.bf16 %v3322, %v3322
          %v3353 = vpack.c.bf16 %v3323, %v3323
          %v3354 = vpack.c.bf16 %v3324, %v3324
          %v3355 = vpack.c.bf16 %v3325, %v3325
          %v3356 = vpack.c.bf16 %v3326, %v3326
          %v3357 = vpack.c.bf16 %v3327, %v3327
          %v3358 = vpack.c.bf16 %v3328, %v3328
          %v3359 = vpack.c.bf16 %v3329, %v3329
          %v3360 = vpack.c.bf16 %v3330, %v3330
          %v3361 = vpack.c.bf16 %v3331, %v3331
          %v3362 = vpack.c.bf16 %v3332, %v3332
          %v3363 = vpack.c.bf16 %v3333, %v3333
          %v3364 = vpack.c.bf16 %v3334, %v3334
          %v3365 = vpack.c.bf16 %v3335, %v3335
          %v3366 = vpack.c.bf16 %v3336, %v3336
          %v3367 = vpack.c.bf16 %v3337, %v3337
          %v3368 = vpack.c.bf16 %v3338, %v3338
          %v3369 = vpack.c.bf16 %v3339, %v3339
          %v3370 = vpack.c.bf16 %v3340, %v3340
          %v3371 = vpack.c.bf16 %v3341, %v3341
          %v3372 = vpack.c.bf16 %v3342, %v3342
          %v3373 = vpack.c.bf16 %v3343, %v3343
          %v3374 = vpack.c.bf16 %v3344, %v3344
          %3405 = vrot.lane.b32.xlu0 %v3345, 8
          %v3406 = vpop.permute.xlu0 %3405
          %3407 = vrot.lane.b32.xlu0 %v3346, 8
          %v3408 = vpop.permute.xlu0 %3407
          %3409 = vrot.lane.b32.xlu0 %v3347, 8
          %v3410 = vpop.permute.xlu0 %3409
          %3411 = vrot.lane.b32.xlu0 %v3348, 8
          %v3412 = vpop.permute.xlu0 %3411
          %3413 = vrot.lane.b32.xlu0 %v3349, 8
          %v3414 = vpop.permute.xlu0 %3413
          %3415 = vrot.lane.b32.xlu0 %v3350, 8
          %v3416 = vpop.permute.xlu0 %3415
          %3417 = vrot.lane.b32.xlu0 %v3351, 8
          %v3418 = vpop.permute.xlu0 %3417
          %3419 = vrot.lane.b32.xlu0 %v3352, 8
          %v3420 = vpop.permute.xlu0 %3419
          %3421 = vrot.lane.b32.xlu0 %v3353, 8
          %v3422 = vpop.permute.xlu0 %3421
          %3423 = vrot.lane.b32.xlu0 %v3354, 8
          %v3424 = vpop.permute.xlu0 %3423
          %3425 = vrot.lane.b32.xlu0 %v3355, 8
          %v3426 = vpop.permute.xlu0 %3425
          %3427 = vrot.lane.b32.xlu0 %v3356, 8
          %v3428 = vpop.permute.xlu0 %3427
          %3429 = vrot.lane.b32.xlu0 %v3357, 8
          %v3430 = vpop.permute.xlu0 %3429
          %3431 = vrot.lane.b32.xlu0 %v3358, 8
          %v3432 = vpop.permute.xlu0 %3431
          %3433 = vrot.lane.b32.xlu0 %v3359, 8
          %v3434 = vpop.permute.xlu0 %3433
          %3435 = vrot.lane.b32.xlu0 %v3360, 8
          %v3436 = vpop.permute.xlu0 %3435
          %3437 = vrot.lane.b32.xlu0 %v3361, 8
          %v3438 = vpop.permute.xlu0 %3437
          %3439 = vrot.lane.b32.xlu0 %v3362, 8
          %v3440 = vpop.permute.xlu0 %3439
          %3441 = vrot.lane.b32.xlu0 %v3363, 8
          %v3442 = vpop.permute.xlu0 %3441
          %3443 = vrot.lane.b32.xlu0 %v3364, 8
          %v3444 = vpop.permute.xlu0 %3443
          %3445 = vrot.lane.b32.xlu0 %v3365, 8
          %v3446 = vpop.permute.xlu0 %3445
          %3447 = vrot.lane.b32.xlu0 %v3366, 8
          %v3448 = vpop.permute.xlu0 %3447
          %3449 = vrot.lane.b32.xlu0 %v3367, 8
          %v3450 = vpop.permute.xlu0 %3449
          %3451 = vrot.lane.b32.xlu0 %v3368, 8
          %v3452 = vpop.permute.xlu0 %3451
          %3453 = vrot.lane.b32.xlu0 %v3369, 8
          %v3454 = vpop.permute.xlu0 %3453
          %3455 = vrot.lane.b32.xlu0 %v3370, 8
          %v3456 = vpop.permute.xlu0 %3455
          %3457 = vrot.lane.b32.xlu0 %v3371, 8
          %v3458 = vpop.permute.xlu0 %3457
          %3459 = vrot.lane.b32.xlu0 %v3372, 8
          %v3460 = vpop.permute.xlu0 %3459
          %3461 = vrot.lane.b32.xlu0 %v3373, 8
          %v3462 = vpop.permute.xlu0 %3461
          %3463 = vrot.lane.b32.xlu0 %v3374, 8
          %v3464 = vpop.permute.xlu0 %3463
          %vm3495 = vcmask 93248
          %3496 = vst.msk [vmem:[#allocation2] sm:$0xf] %vm3495, %v3406
          %3497 = vst.msk [vmem:[#allocation2 + $0x4] sm:$0xf] %vm3495, %v3408
          %vm3498 = vcmask 90176
          %3499 = vst.msk [vmem:[#allocation2 + $0x8] sm:$0x1] %vm3498, %v3410
          %3500 = vst.msk [vmem:[#allocation2 + $0xc] sm:$0xf] %vm3495, %v3412
          %3501 = vst.msk [vmem:[#allocation2 + $0x10] sm:$0xf] %vm3495, %v3414
          %3502 = vst.msk [vmem:[#allocation2 + $0x14] sm:$0x1] %vm3498, %v3416
          %3503 = vst.msk [vmem:[#allocation2 + $0x18] sm:$0xf] %vm3495, %v3418
          %3504 = vst.msk [vmem:[#allocation2 + $0x1c] sm:$0xf] %vm3495, %v3420
          %3505 = vst.msk [vmem:[#allocation2 + $0x20] sm:$0x1] %vm3498, %v3422
          %3506 = vst.msk [vmem:[#allocation2 + $0x24] sm:$0xf] %vm3495, %v3424
          %3507 = vst.msk [vmem:[#allocation2 + $0x28] sm:$0xf] %vm3495, %v3426
          %3508 = vst.msk [vmem:[#allocation2 + $0x2c] sm:$0x1] %vm3498, %v3428
          %3509 = vst.msk [vmem:[#allocation2 + $0x30] sm:$0xf] %vm3495, %v3430
          %3510 = vst.msk [vmem:[#allocation2 + $0x34] sm:$0xf] %vm3495, %v3432
          %3511 = vst.msk [vmem:[#allocation2 + $0x38] sm:$0x1] %vm3498, %v3434
          %3512 = vst.msk [vmem:[#allocation2 + $0x3c] sm:$0xf] %vm3495, %v3436
          %3513 = vst.msk [vmem:[#allocation2 + $0x40] sm:$0xf] %vm3495, %v3438
          %3514 = vst.msk [vmem:[#allocation2 + $0x44] sm:$0x1] %vm3498, %v3440
          %3515 = vst.msk [vmem:[#allocation2 + $0x48] sm:$0xf] %vm3495, %v3442
          %3516 = vst.msk [vmem:[#allocation2 + $0x4c] sm:$0xf] %vm3495, %v3444
          %3517 = vst.msk [vmem:[#allocation2 + $0x50] sm:$0x1] %vm3498, %v3446
          %3518 = vst.msk [vmem:[#allocation2 + $0x54] sm:$0xf] %vm3495, %v3448
          %3519 = vst.msk [vmem:[#allocation2 + $0x58] sm:$0xf] %vm3495, %v3450
          %3520 = vst.msk [vmem:[#allocation2 + $0x5c] sm:$0x1] %vm3498, %v3452
          %3521 = vst.msk [vmem:[#allocation2 + $0x60] sm:$0xf] %vm3495, %v3454
          %3522 = vst.msk [vmem:[#allocation2 + $0x64] sm:$0xf] %vm3495, %v3456
          %3523 = vst.msk [vmem:[#allocation2 + $0x68] sm:$0x1] %vm3498, %v3458
          %3524 = vst.msk [vmem:[#allocation2 + $0x6c] sm:$0xf] %vm3495, %v3460
          %3525 = vst.msk [vmem:[#allocation2 + $0x70] sm:$0xf] %vm3495, %v3462
          %3526 = vst.msk [vmem:[#allocation2 + $0x74] sm:$0x1] %vm3498, %v3464
          %v3527 = vmul.f32 %v997, %v2715
          %v3528 = vmul.f32 %v998, %v2716
          %v3529 = vmul.f32 %v999, %v2717
          %v3530 = vmul.f32 %v1000, %v2718
          %v3531 = vmul.f32 %v1001, %v2719
          %v3532 = vmul.f32 %v1002, %v2720
          %v3533 = vmul.f32 %v1003, %v2721
          %v3534 = vmul.f32 %v1004, %v2722
          %v3535 = vmul.f32 %v1005, %v2723
          %v3536 = vmul.f32 %v1006, %v2724
          %v3537 = vmul.f32 %v1007, %v2725
          %v3538 = vmul.f32 %v1008, %v2726
          %v3539 = vmul.f32 %v1009, %v2727
          %v3540 = vmul.f32 %v1010, %v2728
          %v3541 = vmul.f32 %v1011, %v2729
          %v3542 = vmul.f32 %v1012, %v2730
          %v3543 = vmul.f32 %v1013, %v2731
          %v3544 = vmul.f32 %v1014, %v2732
          %v3545 = vmul.f32 %v1015, %v2733
          %v3546 = vmul.f32 %v1016, %v2734
          %v3547 = vmul.f32 %v1017, %v2735
          %v3548 = vmul.f32 %v1018, %v2736
          %v3549 = vmul.f32 %v1019, %v2737
          %v3550 = vmul.f32 %v1020, %v2738
          %v3551 = vmul.f32 %v1021, %v2739
          %v3552 = vmul.f32 %v1022, %v2740
          %v3553 = vmul.f32 %v1023, %v2741
          %v3554 = vmul.f32 %v1024, %v2742
          %v3555 = vmul.f32 %v1025, %v2743
          %v3556 = vmul.f32 %v1026, %v2744
          %s3557 = sld [smem:[#allocation3 + $0x1]]
          %v3558 = vstv %s3557
          %v3559 = vmul.f32 %v3558, %v997
          %v3560 = vmul.f32 %v3558, %v998
          %v3561 = vmul.f32 %v3558, %v999
          %v3562 = vmul.f32 %v3558, %v1000
          %v3563 = vmul.f32 %v3558, %v1001
          %v3564 = vmul.f32 %v3558, %v1002
          %v3565 = vmul.f32 %v3558, %v1003
          %v3566 = vmul.f32 %v3558, %v1004
          %v3567 = vmul.f32 %v3558, %v1005
          %v3568 = vmul.f32 %v3558, %v1006
          %v3569 = vmul.f32 %v3558, %v1007
          %v3570 = vmul.f32 %v3558, %v1008
          %v3571 = vmul.f32 %v3558, %v1009
          %v3572 = vmul.f32 %v3558, %v1010
          %v3573 = vmul.f32 %v3558, %v1011
          %v3574 = vmul.f32 %v3558, %v1012
          %v3575 = vmul.f32 %v3558, %v1013
          %v3576 = vmul.f32 %v3558, %v1014
          %v3577 = vmul.f32 %v3558, %v1015
          %v3578 = vmul.f32 %v3558, %v1016
          %v3579 = vmul.f32 %v3558, %v1017
          %v3580 = vmul.f32 %v3558, %v1018
          %v3581 = vmul.f32 %v3558, %v1019
          %v3582 = vmul.f32 %v3558, %v1020
          %v3583 = vmul.f32 %v3558, %v1021
          %v3584 = vmul.f32 %v3558, %v1022
          %v3585 = vmul.f32 %v3558, %v1023
          %v3586 = vmul.f32 %v3558, %v1024
          %v3587 = vmul.f32 %v3558, %v1025
          %v3588 = vmul.f32 %v3558, %v1026
          %v3589 = vsub.f32 %v3527, %v3559
          %v3590 = vsub.f32 %v3528, %v3560
          %v3591 = vsub.f32 %v3529, %v3561
          %v3592 = vsub.f32 %v3530, %v3562
          %v3593 = vsub.f32 %v3531, %v3563
          %v3594 = vsub.f32 %v3532, %v3564
          %v3595 = vsub.f32 %v3533, %v3565
          %v3596 = vsub.f32 %v3534, %v3566
          %v3597 = vsub.f32 %v3535, %v3567
          %v3598 = vsub.f32 %v3536, %v3568
          %v3599 = vsub.f32 %v3537, %v3569
          %v3600 = vsub.f32 %v3538, %v3570
          %v3601 = vsub.f32 %v3539, %v3571
          %v3602 = vsub.f32 %v3540, %v3572
          %v3603 = vsub.f32 %v3541, %v3573
          %v3604 = vsub.f32 %v3542, %v3574
          %v3605 = vsub.f32 %v3543, %v3575
          %v3606 = vsub.f32 %v3544, %v3576
          %v3607 = vsub.f32 %v3545, %v3577
          %v3608 = vsub.f32 %v3546, %v3578
          %v3609 = vsub.f32 %v3547, %v3579
          %v3610 = vsub.f32 %v3548, %v3580
          %v3611 = vsub.f32 %v3549, %v3581
          %v3612 = vsub.f32 %v3550, %v3582
          %v3613 = vsub.f32 %v3551, %v3583
          %v3614 = vsub.f32 %v3552, %v3584
          %v3615 = vsub.f32 %v3553, %v3585
          %v3616 = vsub.f32 %v3554, %v3586
          %v3617 = vsub.f32 %v3555, %v3587
          %v3618 = vsub.f32 %v3556, %v3588
          %v3619 = vxor.u32 %v3589, 2147483648
          %v3620 = vxor.u32 %v3590, 2147483648
          %v3621 = vxor.u32 %v3591, 2147483648
          %v3622 = vxor.u32 %v3592, 2147483648
          %v3623 = vxor.u32 %v3593, 2147483648
          %v3624 = vxor.u32 %v3594, 2147483648
          %v3625 = vxor.u32 %v3595, 2147483648
          %v3626 = vxor.u32 %v3596, 2147483648
          %v3627 = vxor.u32 %v3597, 2147483648
          %v3628 = vxor.u32 %v3598, 2147483648
          %v3629 = vxor.u32 %v3599, 2147483648
          %v3630 = vxor.u32 %v3600, 2147483648
          %v3631 = vxor.u32 %v3601, 2147483648
          %v3632 = vxor.u32 %v3602, 2147483648
          %v3633 = vxor.u32 %v3603, 2147483648
          %v3634 = vxor.u32 %v3604, 2147483648
          %v3635 = vxor.u32 %v3605, 2147483648
          %v3636 = vxor.u32 %v3606, 2147483648
          %v3637 = vxor.u32 %v3607, 2147483648
          %v3638 = vxor.u32 %v3608, 2147483648
          %v3639 = vxor.u32 %v3609, 2147483648
          %v3640 = vxor.u32 %v3610, 2147483648
          %v3641 = vxor.u32 %v3611, 2147483648
          %v3642 = vxor.u32 %v3612, 2147483648
          %v3643 = vxor.u32 %v3613, 2147483648
          %v3644 = vxor.u32 %v3614, 2147483648
          %v3645 = vxor.u32 %v3615, 2147483648
          %v3646 = vxor.u32 %v3616, 2147483648
          %v3647 = vxor.u32 %v3617, 2147483648
          %v3648 = vxor.u32 %v3618, 2147483648
          %v3649 = vmul.f32 %v3619, 1.442695
          %v3650 = vpow.pop %v3649
          %v3651 = vmul.f32 %v3620, 1.442695
          %v3652 = vpow.pop %v3651
          %v3653 = vmul.f32 %v3621, 1.442695
          %v3654 = vpow.pop %v3653
          %v3655 = vmul.f32 %v3622, 1.442695
          %v3656 = vpow.pop %v3655
          %v3657 = vmul.f32 %v3623, 1.442695
          %v3658 = vpow.pop %v3657
          %v3659 = vmul.f32 %v3624, 1.442695
          %v3660 = vpow.pop %v3659
          %v3661 = vmul.f32 %v3625, 1.442695
          %v3662 = vpow.pop %v3661
          %v3663 = vmul.f32 %v3626, 1.442695
          %v3664 = vpow.pop %v3663
          %v3665 = vmul.f32 %v3627, 1.442695
          %v3666 = vpow.pop %v3665
          %v3667 = vmul.f32 %v3628, 1.442695
          %v3668 = vpow.pop %v3667
          %v3669 = vmul.f32 %v3629, 1.442695
          %v3670 = vpow.pop %v3669
          %v3671 = vmul.f32 %v3630, 1.442695
          %v3672 = vpow.pop %v3671
          %v3673 = vmul.f32 %v3631, 1.442695
          %v3674 = vpow.pop %v3673
          %v3675 = vmul.f32 %v3632, 1.442695
          %v3676 = vpow.pop %v3675
          %v3677 = vmul.f32 %v3633, 1.442695
          %v3678 = vpow.pop %v3677
          %v3679 = vmul.f32 %v3634, 1.442695
          %v3680 = vpow.pop %v3679
          %v3681 = vmul.f32 %v3635, 1.442695
          %v3682 = vpow.pop %v3681
          %v3683 = vmul.f32 %v3636, 1.442695
          %v3684 = vpow.pop %v3683
          %v3685 = vmul.f32 %v3637, 1.442695
          %v3686 = vpow.pop %v3685
          %v3687 = vmul.f32 %v3638, 1.442695
          %v3688 = vpow.pop %v3687
          %v3689 = vmul.f32 %v3639, 1.442695
          %v3690 = vpow.pop %v3689
          %v3691 = vmul.f32 %v3640, 1.442695
          %v3692 = vpow.pop %v3691
          %v3693 = vmul.f32 %v3641, 1.442695
          %v3694 = vpow.pop %v3693
          %v3695 = vmul.f32 %v3642, 1.442695
          %v3696 = vpow.pop %v3695
          %v3697 = vmul.f32 %v3643, 1.442695
          %v3698 = vpow.pop %v3697
          %v3699 = vmul.f32 %v3644, 1.442695
          %v3700 = vpow.pop %v3699
          %v3701 = vmul.f32 %v3645, 1.442695
          %v3702 = vpow.pop %v3701
          %v3703 = vmul.f32 %v3646, 1.442695
          %v3704 = vpow.pop %v3703
          %v3705 = vmul.f32 %v3647, 1.442695
          %v3706 = vpow.pop %v3705
          %v3707 = vmul.f32 %v3648, 1.442695
          %v3708 = vpow.pop %v3707
          %v3709 = vadd.f32 %v3650, 1.0
          %v3710 = vadd.f32 %v3652, 1.0
          %v3711 = vadd.f32 %v3654, 1.0
          %v3712 = vadd.f32 %v3656, 1.0
          %v3713 = vadd.f32 %v3658, 1.0
          %v3714 = vadd.f32 %v3660, 1.0
          %v3715 = vadd.f32 %v3662, 1.0
          %v3716 = vadd.f32 %v3664, 1.0
          %v3717 = vadd.f32 %v3666, 1.0
          %v3718 = vadd.f32 %v3668, 1.0
          %v3719 = vadd.f32 %v3670, 1.0
          %v3720 = vadd.f32 %v3672, 1.0
          %v3721 = vadd.f32 %v3674, 1.0
          %v3722 = vadd.f32 %v3676, 1.0
          %v3723 = vadd.f32 %v3678, 1.0
          %v3724 = vadd.f32 %v3680, 1.0
          %v3725 = vadd.f32 %v3682, 1.0
          %v3726 = vadd.f32 %v3684, 1.0
          %v3727 = vadd.f32 %v3686, 1.0
          %v3728 = vadd.f32 %v3688, 1.0
          %v3729 = vadd.f32 %v3690, 1.0
          %v3730 = vadd.f32 %v3692, 1.0
          %v3731 = vadd.f32 %v3694, 1.0
          %v3732 = vadd.f32 %v3696, 1.0
          %v3733 = vadd.f32 %v3698, 1.0
          %v3734 = vadd.f32 %v3700, 1.0
          %v3735 = vadd.f32 %v3702, 1.0
          %v3736 = vadd.f32 %v3704, 1.0
          %v3737 = vadd.f32 %v3706, 1.0
          %v3738 = vadd.f32 %v3708, 1.0
          %v3739 = vrcp.pop %v3709
          %v3740 = vmul.f32 %v3709, %v3739
          %v3741 = vsub.f32 1.0, %v3740
          %v3742 = vmul.f32 %v3739, %v3741
          %v3743 = vadd.f32 %v3739, %v3742
          %vm3744 = vweird.f32 %v3709
          %vm3745 = vweird.f32 %v3739
          %vm3746 = vmor %vm3744, %vm3745
          %v3747 = vsel %vm3746, %v3739, %v3743
          %v3748 = vand.u32 2147483647, %v3709
          %vm3749 = vcmp.eq.f32.partialorder %v3748, 8.507059e+37
          %v3750 = vand.u32 %v3709, 2147483648
          %v3751 = vor.u32 1.1754944e-38, %v3750
          %v3752 = vsel %vm3749, %v3751, %v3747
          %v3753 = vmul.f32 1.0, %v3752
          %v3754 = vrcp.pop %v3710
          %v3755 = vmul.f32 %v3710, %v3754
          %v3756 = vsub.f32 1.0, %v3755
          %v3757 = vmul.f32 %v3754, %v3756
          %v3758 = vadd.f32 %v3754, %v3757
          %vm3759 = vweird.f32 %v3710
          %vm3760 = vweird.f32 %v3754
          %vm3761 = vmor %vm3759, %vm3760
          %v3762 = vsel %vm3761, %v3754, %v3758
          %v3763 = vand.u32 2147483647, %v3710
          %vm3764 = vcmp.eq.f32.partialorder %v3763, 8.507059e+37
          %v3765 = vand.u32 %v3710, 2147483648
          %v3766 = vor.u32 1.1754944e-38, %v3765
          %v3767 = vsel %vm3764, %v3766, %v3762
          %v3768 = vmul.f32 1.0, %v3767
          %v3769 = vrcp.pop %v3711
          %v3770 = vmul.f32 %v3711, %v3769
          %v3771 = vsub.f32 1.0, %v3770
          %v3772 = vmul.f32 %v3769, %v3771
          %v3773 = vadd.f32 %v3769, %v3772
          %vm3774 = vweird.f32 %v3711
          %vm3775 = vweird.f32 %v3769
          %vm3776 = vmor %vm3774, %vm3775
          %v3777 = vsel %vm3776, %v3769, %v3773
          %v3778 = vand.u32 2147483647, %v3711
          %vm3779 = vcmp.eq.f32.partialorder %v3778, 8.507059e+37
          %v3780 = vand.u32 %v3711, 2147483648
          %v3781 = vor.u32 1.1754944e-38, %v3780
          %v3782 = vsel %vm3779, %v3781, %v3777
          %v3783 = vmul.f32 1.0, %v3782
          %v3784 = vrcp.pop %v3712
          %v3785 = vmul.f32 %v3712, %v3784
          %v3786 = vsub.f32 1.0, %v3785
          %v3787 = vmul.f32 %v3784, %v3786
          %v3788 = vadd.f32 %v3784, %v3787
          %vm3789 = vweird.f32 %v3712
          %vm3790 = vweird.f32 %v3784
          %vm3791 = vmor %vm3789, %vm3790
          %v3792 = vsel %vm3791, %v3784, %v3788
          %v3793 = vand.u32 2147483647, %v3712
          %vm3794 = vcmp.eq.f32.partialorder %v3793, 8.507059e+37
          %v3795 = vand.u32 %v3712, 2147483648
          %v3796 = vor.u32 1.1754944e-38, %v3795
          %v3797 = vsel %vm3794, %v3796, %v3792
          %v3798 = vmul.f32 1.0, %v3797
          %v3799 = vrcp.pop %v3713
          %v3800 = vmul.f32 %v3713, %v3799
          %v3801 = vsub.f32 1.0, %v3800
          %v3802 = vmul.f32 %v3799, %v3801
          %v3803 = vadd.f32 %v3799, %v3802
          %vm3804 = vweird.f32 %v3713
          %vm3805 = vweird.f32 %v3799
          %vm3806 = vmor %vm3804, %vm3805
          %v3807 = vsel %vm3806, %v3799, %v3803
          %v3808 = vand.u32 2147483647, %v3713
          %vm3809 = vcmp.eq.f32.partialorder %v3808, 8.507059e+37
          %v3810 = vand.u32 %v3713, 2147483648
          %v3811 = vor.u32 1.1754944e-38, %v3810
          %v3812 = vsel %vm3809, %v3811, %v3807
          %v3813 = vmul.f32 1.0, %v3812
          %v3814 = vrcp.pop %v3714
          %v3815 = vmul.f32 %v3714, %v3814
          %v3816 = vsub.f32 1.0, %v3815
          %v3817 = vmul.f32 %v3814, %v3816
          %v3818 = vadd.f32 %v3814, %v3817
          %vm3819 = vweird.f32 %v3714
          %vm3820 = vweird.f32 %v3814
          %vm3821 = vmor %vm3819, %vm3820
          %v3822 = vsel %vm3821, %v3814, %v3818
          %v3823 = vand.u32 2147483647, %v3714
          %vm3824 = vcmp.eq.f32.partialorder %v3823, 8.507059e+37
          %v3825 = vand.u32 %v3714, 2147483648
          %v3826 = vor.u32 1.1754944e-38, %v3825
          %v3827 = vsel %vm3824, %v3826, %v3822
          %v3828 = vmul.f32 1.0, %v3827
          %v3829 = vrcp.pop %v3715
          %v3830 = vmul.f32 %v3715, %v3829
          %v3831 = vsub.f32 1.0, %v3830
          %v3832 = vmul.f32 %v3829, %v3831
          %v3833 = vadd.f32 %v3829, %v3832
          %vm3834 = vweird.f32 %v3715
          %vm3835 = vweird.f32 %v3829
          %vm3836 = vmor %vm3834, %vm3835
          %v3837 = vsel %vm3836, %v3829, %v3833
          %v3838 = vand.u32 2147483647, %v3715
          %vm3839 = vcmp.eq.f32.partialorder %v3838, 8.507059e+37
          %v3840 = vand.u32 %v3715, 2147483648
          %v3841 = vor.u32 1.1754944e-38, %v3840
          %v3842 = vsel %vm3839, %v3841, %v3837
          %v3843 = vmul.f32 1.0, %v3842
          %v3844 = vrcp.pop %v3716
          %v3845 = vmul.f32 %v3716, %v3844
          %v3846 = vsub.f32 1.0, %v3845
          %v3847 = vmul.f32 %v3844, %v3846
          %v3848 = vadd.f32 %v3844, %v3847
          %vm3849 = vweird.f32 %v3716
          %vm3850 = vweird.f32 %v3844
          %vm3851 = vmor %vm3849, %vm3850
          %v3852 = vsel %vm3851, %v3844, %v3848
          %v3853 = vand.u32 2147483647, %v3716
          %vm3854 = vcmp.eq.f32.partialorder %v3853, 8.507059e+37
          %v3855 = vand.u32 %v3716, 2147483648
          %v3856 = vor.u32 1.1754944e-38, %v3855
          %v3857 = vsel %vm3854, %v3856, %v3852
          %v3858 = vmul.f32 1.0, %v3857
          %v3859 = vrcp.pop %v3717
          %v3860 = vmul.f32 %v3717, %v3859
          %v3861 = vsub.f32 1.0, %v3860
          %v3862 = vmul.f32 %v3859, %v3861
          %v3863 = vadd.f32 %v3859, %v3862
          %vm3864 = vweird.f32 %v3717
          %vm3865 = vweird.f32 %v3859
          %vm3866 = vmor %vm3864, %vm3865
          %v3867 = vsel %vm3866, %v3859, %v3863
          %v3868 = vand.u32 2147483647, %v3717
          %vm3869 = vcmp.eq.f32.partialorder %v3868, 8.507059e+37
          %v3870 = vand.u32 %v3717, 2147483648
          %v3871 = vor.u32 1.1754944e-38, %v3870
          %v3872 = vsel %vm3869, %v3871, %v3867
          %v3873 = vmul.f32 1.0, %v3872
          %v3874 = vrcp.pop %v3718
          %v3875 = vmul.f32 %v3718, %v3874
          %v3876 = vsub.f32 1.0, %v3875
          %v3877 = vmul.f32 %v3874, %v3876
          %v3878 = vadd.f32 %v3874, %v3877
          %vm3879 = vweird.f32 %v3718
          %vm3880 = vweird.f32 %v3874
          %vm3881 = vmor %vm3879, %vm3880
          %v3882 = vsel %vm3881, %v3874, %v3878
          %v3883 = vand.u32 2147483647, %v3718
          %vm3884 = vcmp.eq.f32.partialorder %v3883, 8.507059e+37
          %v3885 = vand.u32 %v3718, 2147483648
          %v3886 = vor.u32 1.1754944e-38, %v3885
          %v3887 = vsel %vm3884, %v3886, %v3882
          %v3888 = vmul.f32 1.0, %v3887
          %v3889 = vrcp.pop %v3719
          %v3890 = vmul.f32 %v3719, %v3889
          %v3891 = vsub.f32 1.0, %v3890
          %v3892 = vmul.f32 %v3889, %v3891
          %v3893 = vadd.f32 %v3889, %v3892
          %vm3894 = vweird.f32 %v3719
          %vm3895 = vweird.f32 %v3889
          %vm3896 = vmor %vm3894, %vm3895
          %v3897 = vsel %vm3896, %v3889, %v3893
          %v3898 = vand.u32 2147483647, %v3719
          %vm3899 = vcmp.eq.f32.partialorder %v3898, 8.507059e+37
          %v3900 = vand.u32 %v3719, 2147483648
          %v3901 = vor.u32 1.1754944e-38, %v3900
          %v3902 = vsel %vm3899, %v3901, %v3897
          %v3903 = vmul.f32 1.0, %v3902
          %v3904 = vrcp.pop %v3720
          %v3905 = vmul.f32 %v3720, %v3904
          %v3906 = vsub.f32 1.0, %v3905
          %v3907 = vmul.f32 %v3904, %v3906
          %v3908 = vadd.f32 %v3904, %v3907
          %vm3909 = vweird.f32 %v3720
          %vm3910 = vweird.f32 %v3904
          %vm3911 = vmor %vm3909, %vm3910
          %v3912 = vsel %vm3911, %v3904, %v3908
          %v3913 = vand.u32 2147483647, %v3720
          %vm3914 = vcmp.eq.f32.partialorder %v3913, 8.507059e+37
          %v3915 = vand.u32 %v3720, 2147483648
          %v3916 = vor.u32 1.1754944e-38, %v3915
          %v3917 = vsel %vm3914, %v3916, %v3912
          %v3918 = vmul.f32 1.0, %v3917
          %v3919 = vrcp.pop %v3721
          %v3920 = vmul.f32 %v3721, %v3919
          %v3921 = vsub.f32 1.0, %v3920
          %v3922 = vmul.f32 %v3919, %v3921
          %v3923 = vadd.f32 %v3919, %v3922
          %vm3924 = vweird.f32 %v3721
          %vm3925 = vweird.f32 %v3919
          %vm3926 = vmor %vm3924, %vm3925
          %v3927 = vsel %vm3926, %v3919, %v3923
          %v3928 = vand.u32 2147483647, %v3721
          %vm3929 = vcmp.eq.f32.partialorder %v3928, 8.507059e+37
          %v3930 = vand.u32 %v3721, 2147483648
          %v3931 = vor.u32 1.1754944e-38, %v3930
          %v3932 = vsel %vm3929, %v3931, %v3927
          %v3933 = vmul.f32 1.0, %v3932
          %v3934 = vrcp.pop %v3722
          %v3935 = vmul.f32 %v3722, %v3934
          %v3936 = vsub.f32 1.0, %v3935
          %v3937 = vmul.f32 %v3934, %v3936
          %v3938 = vadd.f32 %v3934, %v3937
          %vm3939 = vweird.f32 %v3722
          %vm3940 = vweird.f32 %v3934
          %vm3941 = vmor %vm3939, %vm3940
          %v3942 = vsel %vm3941, %v3934, %v3938
          %v3943 = vand.u32 2147483647, %v3722
          %vm3944 = vcmp.eq.f32.partialorder %v3943, 8.507059e+37
          %v3945 = vand.u32 %v3722, 2147483648
          %v3946 = vor.u32 1.1754944e-38, %v3945
          %v3947 = vsel %vm3944, %v3946, %v3942
          %v3948 = vmul.f32 1.0, %v3947
          %v3949 = vrcp.pop %v3723
          %v3950 = vmul.f32 %v3723, %v3949
          %v3951 = vsub.f32 1.0, %v3950
          %v3952 = vmul.f32 %v3949, %v3951
          %v3953 = vadd.f32 %v3949, %v3952
          %vm3954 = vweird.f32 %v3723
          %vm3955 = vweird.f32 %v3949
          %vm3956 = vmor %vm3954, %vm3955
          %v3957 = vsel %vm3956, %v3949, %v3953
          %v3958 = vand.u32 2147483647, %v3723
          %vm3959 = vcmp.eq.f32.partialorder %v3958, 8.507059e+37
          %v3960 = vand.u32 %v3723, 2147483648
          %v3961 = vor.u32 1.1754944e-38, %v3960
          %v3962 = vsel %vm3959, %v3961, %v3957
          %v3963 = vmul.f32 1.0, %v3962
          %v3964 = vrcp.pop %v3724
          %v3965 = vmul.f32 %v3724, %v3964
          %v3966 = vsub.f32 1.0, %v3965
          %v3967 = vmul.f32 %v3964, %v3966
          %v3968 = vadd.f32 %v3964, %v3967
          %vm3969 = vweird.f32 %v3724
          %vm3970 = vweird.f32 %v3964
          %vm3971 = vmor %vm3969, %vm3970
          %v3972 = vsel %vm3971, %v3964, %v3968
          %v3973 = vand.u32 2147483647, %v3724
          %vm3974 = vcmp.eq.f32.partialorder %v3973, 8.507059e+37
          %v3975 = vand.u32 %v3724, 2147483648
          %v3976 = vor.u32 1.1754944e-38, %v3975
          %v3977 = vsel %vm3974, %v3976, %v3972
          %v3978 = vmul.f32 1.0, %v3977
          %v3979 = vrcp.pop %v3725
          %v3980 = vmul.f32 %v3725, %v3979
          %v3981 = vsub.f32 1.0, %v3980
          %v3982 = vmul.f32 %v3979, %v3981
          %v3983 = vadd.f32 %v3979, %v3982
          %vm3984 = vweird.f32 %v3725
          %vm3985 = vweird.f32 %v3979
          %vm3986 = vmor %vm3984, %vm3985
          %v3987 = vsel %vm3986, %v3979, %v3983
          %v3988 = vand.u32 2147483647, %v3725
          %vm3989 = vcmp.eq.f32.partialorder %v3988, 8.507059e+37
          %v3990 = vand.u32 %v3725, 2147483648
          %v3991 = vor.u32 1.1754944e-38, %v3990
          %v3992 = vsel %vm3989, %v3991, %v3987
          %v3993 = vmul.f32 1.0, %v3992
          %v3994 = vrcp.pop %v3726
          %v3995 = vmul.f32 %v3726, %v3994
          %v3996 = vsub.f32 1.0, %v3995
          %v3997 = vmul.f32 %v3994, %v3996
          %v3998 = vadd.f32 %v3994, %v3997
          %vm3999 = vweird.f32 %v3726
          %vm4000 = vweird.f32 %v3994
          %vm4001 = vmor %vm3999, %vm4000
          %v4002 = vsel %vm4001, %v3994, %v3998
          %v4003 = vand.u32 2147483647, %v3726
          %vm4004 = vcmp.eq.f32.partialorder %v4003, 8.507059e+37
          %v4005 = vand.u32 %v3726, 2147483648
          %v4006 = vor.u32 1.1754944e-38, %v4005
          %v4007 = vsel %vm4004, %v4006, %v4002
          %v4008 = vmul.f32 1.0, %v4007
          %v4009 = vrcp.pop %v3727
          %v4010 = vmul.f32 %v3727, %v4009
          %v4011 = vsub.f32 1.0, %v4010
          %v4012 = vmul.f32 %v4009, %v4011
          %v4013 = vadd.f32 %v4009, %v4012
          %vm4014 = vweird.f32 %v3727
          %vm4015 = vweird.f32 %v4009
          %vm4016 = vmor %vm4014, %vm4015
          %v4017 = vsel %vm4016, %v4009, %v4013
          %v4018 = vand.u32 2147483647, %v3727
          %vm4019 = vcmp.eq.f32.partialorder %v4018, 8.507059e+37
          %v4020 = vand.u32 %v3727, 2147483648
          %v4021 = vor.u32 1.1754944e-38, %v4020
          %v4022 = vsel %vm4019, %v4021, %v4017
          %v4023 = vmul.f32 1.0, %v4022
          %v4024 = vrcp.pop %v3728
          %v4025 = vmul.f32 %v3728, %v4024
          %v4026 = vsub.f32 1.0, %v4025
          %v4027 = vmul.f32 %v4024, %v4026
          %v4028 = vadd.f32 %v4024, %v4027
          %vm4029 = vweird.f32 %v3728
          %vm4030 = vweird.f32 %v4024
          %vm4031 = vmor %vm4029, %vm4030
          %v4032 = vsel %vm4031, %v4024, %v4028
          %v4033 = vand.u32 2147483647, %v3728
          %vm4034 = vcmp.eq.f32.partialorder %v4033, 8.507059e+37
          %v4035 = vand.u32 %v3728, 2147483648
          %v4036 = vor.u32 1.1754944e-38, %v4035
          %v4037 = vsel %vm4034, %v4036, %v4032
          %v4038 = vmul.f32 1.0, %v4037
          %v4039 = vrcp.pop %v3729
          %v4040 = vmul.f32 %v3729, %v4039
          %v4041 = vsub.f32 1.0, %v4040
          %v4042 = vmul.f32 %v4039, %v4041
          %v4043 = vadd.f32 %v4039, %v4042
          %vm4044 = vweird.f32 %v3729
          %vm4045 = vweird.f32 %v4039
          %vm4046 = vmor %vm4044, %vm4045
          %v4047 = vsel %vm4046, %v4039, %v4043
          %v4048 = vand.u32 2147483647, %v3729
          %vm4049 = vcmp.eq.f32.partialorder %v4048, 8.507059e+37
          %v4050 = vand.u32 %v3729, 2147483648
          %v4051 = vor.u32 1.1754944e-38, %v4050
          %v4052 = vsel %vm4049, %v4051, %v4047
          %v4053 = vmul.f32 1.0, %v4052
          %v4054 = vrcp.pop %v3730
          %v4055 = vmul.f32 %v3730, %v4054
          %v4056 = vsub.f32 1.0, %v4055
          %v4057 = vmul.f32 %v4054, %v4056
          %v4058 = vadd.f32 %v4054, %v4057
          %vm4059 = vweird.f32 %v3730
          %vm4060 = vweird.f32 %v4054
          %vm4061 = vmor %vm4059, %vm4060
          %v4062 = vsel %vm4061, %v4054, %v4058
          %v4063 = vand.u32 2147483647, %v3730
          %vm4064 = vcmp.eq.f32.partialorder %v4063, 8.507059e+37
          %v4065 = vand.u32 %v3730, 2147483648
          %v4066 = vor.u32 1.1754944e-38, %v4065
          %v4067 = vsel %vm4064, %v4066, %v4062
          %v4068 = vmul.f32 1.0, %v4067
          %v4069 = vrcp.pop %v3731
          %v4070 = vmul.f32 %v3731, %v4069
          %v4071 = vsub.f32 1.0, %v4070
          %v4072 = vmul.f32 %v4069, %v4071
          %v4073 = vadd.f32 %v4069, %v4072
          %vm4074 = vweird.f32 %v3731
          %vm4075 = vweird.f32 %v4069
          %vm4076 = vmor %vm4074, %vm4075
          %v4077 = vsel %vm4076, %v4069, %v4073
          %v4078 = vand.u32 2147483647, %v3731
          %vm4079 = vcmp.eq.f32.partialorder %v4078, 8.507059e+37
          %v4080 = vand.u32 %v3731, 2147483648
          %v4081 = vor.u32 1.1754944e-38, %v4080
          %v4082 = vsel %vm4079, %v4081, %v4077
          %v4083 = vmul.f32 1.0, %v4082
          %v4084 = vrcp.pop %v3732
          %v4085 = vmul.f32 %v3732, %v4084
          %v4086 = vsub.f32 1.0, %v4085
          %v4087 = vmul.f32 %v4084, %v4086
          %v4088 = vadd.f32 %v4084, %v4087
          %vm4089 = vweird.f32 %v3732
          %vm4090 = vweird.f32 %v4084
          %vm4091 = vmor %vm4089, %vm4090
          %v4092 = vsel %vm4091, %v4084, %v4088
          %v4093 = vand.u32 2147483647, %v3732
          %vm4094 = vcmp.eq.f32.partialorder %v4093, 8.507059e+37
          %v4095 = vand.u32 %v3732, 2147483648
          %v4096 = vor.u32 1.1754944e-38, %v4095
          %v4097 = vsel %vm4094, %v4096, %v4092
          %v4098 = vmul.f32 1.0, %v4097
          %v4099 = vrcp.pop %v3733
          %v4100 = vmul.f32 %v3733, %v4099
          %v4101 = vsub.f32 1.0, %v4100
          %v4102 = vmul.f32 %v4099, %v4101
          %v4103 = vadd.f32 %v4099, %v4102
          %vm4104 = vweird.f32 %v3733
          %vm4105 = vweird.f32 %v4099
          %vm4106 = vmor %vm4104, %vm4105
          %v4107 = vsel %vm4106, %v4099, %v4103
          %v4108 = vand.u32 2147483647, %v3733
          %vm4109 = vcmp.eq.f32.partialorder %v4108, 8.507059e+37
          %v4110 = vand.u32 %v3733, 2147483648
          %v4111 = vor.u32 1.1754944e-38, %v4110
          %v4112 = vsel %vm4109, %v4111, %v4107
          %v4113 = vmul.f32 1.0, %v4112
          %v4114 = vrcp.pop %v3734
          %v4115 = vmul.f32 %v3734, %v4114
          %v4116 = vsub.f32 1.0, %v4115
          %v4117 = vmul.f32 %v4114, %v4116
          %v4118 = vadd.f32 %v4114, %v4117
          %vm4119 = vweird.f32 %v3734
          %vm4120 = vweird.f32 %v4114
          %vm4121 = vmor %vm4119, %vm4120
          %v4122 = vsel %vm4121, %v4114, %v4118
          %v4123 = vand.u32 2147483647, %v3734
          %vm4124 = vcmp.eq.f32.partialorder %v4123, 8.507059e+37
          %v4125 = vand.u32 %v3734, 2147483648
          %v4126 = vor.u32 1.1754944e-38, %v4125
          %v4127 = vsel %vm4124, %v4126, %v4122
          %v4128 = vmul.f32 1.0, %v4127
          %v4129 = vrcp.pop %v3735
          %v4130 = vmul.f32 %v3735, %v4129
          %v4131 = vsub.f32 1.0, %v4130
          %v4132 = vmul.f32 %v4129, %v4131
          %v4133 = vadd.f32 %v4129, %v4132
          %vm4134 = vweird.f32 %v3735
          %vm4135 = vweird.f32 %v4129
          %vm4136 = vmor %vm4134, %vm4135
          %v4137 = vsel %vm4136, %v4129, %v4133
          %v4138 = vand.u32 2147483647, %v3735
          %vm4139 = vcmp.eq.f32.partialorder %v4138, 8.507059e+37
          %v4140 = vand.u32 %v3735, 2147483648
          %v4141 = vor.u32 1.1754944e-38, %v4140
          %v4142 = vsel %vm4139, %v4141, %v4137
          %v4143 = vmul.f32 1.0, %v4142
          %v4144 = vrcp.pop %v3736
          %v4145 = vmul.f32 %v3736, %v4144
          %v4146 = vsub.f32 1.0, %v4145
          %v4147 = vmul.f32 %v4144, %v4146
          %v4148 = vadd.f32 %v4144, %v4147
          %vm4149 = vweird.f32 %v3736
          %vm4150 = vweird.f32 %v4144
          %vm4151 = vmor %vm4149, %vm4150
          %v4152 = vsel %vm4151, %v4144, %v4148
          %v4153 = vand.u32 2147483647, %v3736
          %vm4154 = vcmp.eq.f32.partialorder %v4153, 8.507059e+37
          %v4155 = vand.u32 %v3736, 2147483648
          %v4156 = vor.u32 1.1754944e-38, %v4155
          %v4157 = vsel %vm4154, %v4156, %v4152
          %v4158 = vmul.f32 1.0, %v4157
          %v4159 = vrcp.pop %v3737
          %v4160 = vmul.f32 %v3737, %v4159
          %v4161 = vsub.f32 1.0, %v4160
          %v4162 = vmul.f32 %v4159, %v4161
          %v4163 = vadd.f32 %v4159, %v4162
          %vm4164 = vweird.f32 %v3737
          %vm4165 = vweird.f32 %v4159
          %vm4166 = vmor %vm4164, %vm4165
          %v4167 = vsel %vm4166, %v4159, %v4163
          %v4168 = vand.u32 2147483647, %v3737
          %vm4169 = vcmp.eq.f32.partialorder %v4168, 8.507059e+37
          %v4170 = vand.u32 %v3737, 2147483648
          %v4171 = vor.u32 1.1754944e-38, %v4170
          %v4172 = vsel %vm4169, %v4171, %v4167
          %v4173 = vmul.f32 1.0, %v4172
          %v4174 = vrcp.pop %v3738
          %v4175 = vmul.f32 %v3738, %v4174
          %v4176 = vsub.f32 1.0, %v4175
          %v4177 = vmul.f32 %v4174, %v4176
          %v4178 = vadd.f32 %v4174, %v4177
          %vm4179 = vweird.f32 %v3738
          %vm4180 = vweird.f32 %v4174
          %vm4181 = vmor %vm4179, %vm4180
          %v4182 = vsel %vm4181, %v4174, %v4178
          %v4183 = vand.u32 2147483647, %v3738
          %vm4184 = vcmp.eq.f32.partialorder %v4183, 8.507059e+37
          %v4185 = vand.u32 %v3738, 2147483648
          %v4186 = vor.u32 1.1754944e-38, %v4185
          %v4187 = vsel %vm4184, %v4186, %v4182
          %v4188 = vmul.f32 1.0, %v4187
          %v4189 = vmul.f32 %v3589, %v3753
          %v4190 = vmul.f32 %v3590, %v3768
          %v4191 = vmul.f32 %v3591, %v3783
          %v4192 = vmul.f32 %v3592, %v3798
          %v4193 = vmul.f32 %v3593, %v3813
          %v4194 = vmul.f32 %v3594, %v3828
          %v4195 = vmul.f32 %v3595, %v3843
          %v4196 = vmul.f32 %v3596, %v3858
          %v4197 = vmul.f32 %v3597, %v3873
          %v4198 = vmul.f32 %v3598, %v3888
          %v4199 = vmul.f32 %v3599, %v3903
          %v4200 = vmul.f32 %v3600, %v3918
          %v4201 = vmul.f32 %v3601, %v3933
          %v4202 = vmul.f32 %v3602, %v3948
          %v4203 = vmul.f32 %v3603, %v3963
          %v4204 = vmul.f32 %v3604, %v3978
          %v4205 = vmul.f32 %v3605, %v3993
          %v4206 = vmul.f32 %v3606, %v4008
          %v4207 = vmul.f32 %v3607, %v4023
          %v4208 = vmul.f32 %v3608, %v4038
          %v4209 = vmul.f32 %v3609, %v4053
          %v4210 = vmul.f32 %v3610, %v4068
          %v4211 = vmul.f32 %v3611, %v4083
          %v4212 = vmul.f32 %v3612, %v4098
          %v4213 = vmul.f32 %v3613, %v4113
          %v4214 = vmul.f32 %v3614, %v4128
          %v4215 = vmul.f32 %v3615, %v4143
          %v4216 = vmul.f32 %v3616, %v4158
          %v4217 = vmul.f32 %v3617, %v4173
          %v4218 = vmul.f32 %v3618, %v4188
          %v4219 = vpack.c.bf16 %v4189, %v4189
          %v4220 = vpack.c.bf16 %v4190, %v4190
          %v4221 = vpack.c.bf16 %v4191, %v4191
          %v4222 = vpack.c.bf16 %v4192, %v4192
          %v4223 = vpack.c.bf16 %v4193, %v4193
          %v4224 = vpack.c.bf16 %v4194, %v4194
          %v4225 = vpack.c.bf16 %v4195, %v4195
          %v4226 = vpack.c.bf16 %v4196, %v4196
          %v4227 = vpack.c.bf16 %v4197, %v4197
          %v4228 = vpack.c.bf16 %v4198, %v4198
          %v4229 = vpack.c.bf16 %v4199, %v4199
          %v4230 = vpack.c.bf16 %v4200, %v4200
          %v4231 = vpack.c.bf16 %v4201, %v4201
          %v4232 = vpack.c.bf16 %v4202, %v4202
          %v4233 = vpack.c.bf16 %v4203, %v4203
          %v4234 = vpack.c.bf16 %v4204, %v4204
          %v4235 = vpack.c.bf16 %v4205, %v4205
          %v4236 = vpack.c.bf16 %v4206, %v4206
          %v4237 = vpack.c.bf16 %v4207, %v4207
          %v4238 = vpack.c.bf16 %v4208, %v4208
          %v4239 = vpack.c.bf16 %v4209, %v4209
          %v4240 = vpack.c.bf16 %v4210, %v4210
          %v4241 = vpack.c.bf16 %v4211, %v4211
          %v4242 = vpack.c.bf16 %v4212, %v4212
          %v4243 = vpack.c.bf16 %v4213, %v4213
          %v4244 = vpack.c.bf16 %v4214, %v4214
          %v4245 = vpack.c.bf16 %v4215, %v4215
          %v4246 = vpack.c.bf16 %v4216, %v4216
          %v4247 = vpack.c.bf16 %v4217, %v4217
          %v4248 = vpack.c.bf16 %v4218, %v4218
          %4279 = vrot.lane.b32.xlu0 %v4219, 12
          %v4280 = vpop.permute.xlu0 %4279
          %4281 = vrot.lane.b32.xlu0 %v4220, 12
          %v4282 = vpop.permute.xlu0 %4281
          %4283 = vrot.lane.b32.xlu0 %v4221, 12
          %v4284 = vpop.permute.xlu0 %4283
          %4285 = vrot.lane.b32.xlu0 %v4222, 12
          %v4286 = vpop.permute.xlu0 %4285
          %4287 = vrot.lane.b32.xlu0 %v4223, 12
          %v4288 = vpop.permute.xlu0 %4287
          %4289 = vrot.lane.b32.xlu0 %v4224, 12
          %v4290 = vpop.permute.xlu0 %4289
          %4291 = vrot.lane.b32.xlu0 %v4225, 12
          %v4292 = vpop.permute.xlu0 %4291
          %4293 = vrot.lane.b32.xlu0 %v4226, 12
          %v4294 = vpop.permute.xlu0 %4293
          %4295 = vrot.lane.b32.xlu0 %v4227, 12
          %v4296 = vpop.permute.xlu0 %4295
          %4297 = vrot.lane.b32.xlu0 %v4228, 12
          %v4298 = vpop.permute.xlu0 %4297
          %4299 = vrot.lane.b32.xlu0 %v4229, 12
          %v4300 = vpop.permute.xlu0 %4299
          %4301 = vrot.lane.b32.xlu0 %v4230, 12
          %v4302 = vpop.permute.xlu0 %4301
          %4303 = vrot.lane.b32.xlu0 %v4231, 12
          %v4304 = vpop.permute.xlu0 %4303
          %4305 = vrot.lane.b32.xlu0 %v4232, 12
          %v4306 = vpop.permute.xlu0 %4305
          %4307 = vrot.lane.b32.xlu0 %v4233, 12
          %v4308 = vpop.permute.xlu0 %4307
          %4309 = vrot.lane.b32.xlu0 %v4234, 12
          %v4310 = vpop.permute.xlu0 %4309
          %4311 = vrot.lane.b32.xlu0 %v4235, 12
          %v4312 = vpop.permute.xlu0 %4311
          %4313 = vrot.lane.b32.xlu0 %v4236, 12
          %v4314 = vpop.permute.xlu0 %4313
          %4315 = vrot.lane.b32.xlu0 %v4237, 12
          %v4316 = vpop.permute.xlu0 %4315
          %4317 = vrot.lane.b32.xlu0 %v4238, 12
          %v4318 = vpop.permute.xlu0 %4317
          %4319 = vrot.lane.b32.xlu0 %v4239, 12
          %v4320 = vpop.permute.xlu0 %4319
          %4321 = vrot.lane.b32.xlu0 %v4240, 12
          %v4322 = vpop.permute.xlu0 %4321
          %4323 = vrot.lane.b32.xlu0 %v4241, 12
          %v4324 = vpop.permute.xlu0 %4323
          %4325 = vrot.lane.b32.xlu0 %v4242, 12
          %v4326 = vpop.permute.xlu0 %4325
          %4327 = vrot.lane.b32.xlu0 %v4243, 12
          %v4328 = vpop.permute.xlu0 %4327
          %4329 = vrot.lane.b32.xlu0 %v4244, 12
          %v4330 = vpop.permute.xlu0 %4329
          %4331 = vrot.lane.b32.xlu0 %v4245, 12
          %v4332 = vpop.permute.xlu0 %4331
          %4333 = vrot.lane.b32.xlu0 %v4246, 12
          %v4334 = vpop.permute.xlu0 %4333
          %4335 = vrot.lane.b32.xlu0 %v4247, 12
          %v4336 = vpop.permute.xlu0 %4335
          %4337 = vrot.lane.b32.xlu0 %v4248, 12
          %v4338 = vpop.permute.xlu0 %4337
          %vm4369 = vcmask 126048
          %4370 = vst.msk [vmem:[#allocation2] sm:$0xf] %vm4369, %v4280
          %4371 = vst.msk [vmem:[#allocation2 + $0x4] sm:$0xf] %vm4369, %v4282
          %vm4372 = vcmask 122976
          %4373 = vst.msk [vmem:[#allocation2 + $0x8] sm:$0x1] %vm4372, %v4284
          %4374 = vst.msk [vmem:[#allocation2 + $0xc] sm:$0xf] %vm4369, %v4286
          %4375 = vst.msk [vmem:[#allocation2 + $0x10] sm:$0xf] %vm4369, %v4288
          %4376 = vst.msk [vmem:[#allocation2 + $0x14] sm:$0x1] %vm4372, %v4290
          %4377 = vst.msk [vmem:[#allocation2 + $0x18] sm:$0xf] %vm4369, %v4292
          %4378 = vst.msk [vmem:[#allocation2 + $0x1c] sm:$0xf] %vm4369, %v4294
          %4379 = vst.msk [vmem:[#allocation2 + $0x20] sm:$0x1] %vm4372, %v4296
          %4380 = vst.msk [vmem:[#allocation2 + $0x24] sm:$0xf] %vm4369, %v4298
          %4381 = vst.msk [vmem:[#allocation2 + $0x28] sm:$0xf] %vm4369, %v4300
          %4382 = vst.msk [vmem:[#allocation2 + $0x2c] sm:$0x1] %vm4372, %v4302
          %4383 = vst.msk [vmem:[#allocation2 + $0x30] sm:$0xf] %vm4369, %v4304
          %4384 = vst.msk [vmem:[#allocation2 + $0x34] sm:$0xf] %vm4369, %v4306
          %4385 = vst.msk [vmem:[#allocation2 + $0x38] sm:$0x1] %vm4372, %v4308
          %4386 = vst.msk [vmem:[#allocation2 + $0x3c] sm:$0xf] %vm4369, %v4310
          %4387 = vst.msk [vmem:[#allocation2 + $0x40] sm:$0xf] %vm4369, %v4312
          %4388 = vst.msk [vmem:[#allocation2 + $0x44] sm:$0x1] %vm4372, %v4314
          %4389 = vst.msk [vmem:[#allocation2 + $0x48] sm:$0xf] %vm4369, %v4316
          %4390 = vst.msk [vmem:[#allocation2 + $0x4c] sm:$0xf] %vm4369, %v4318
          %4391 = vst.msk [vmem:[#allocation2 + $0x50] sm:$0x1] %vm4372, %v4320
          %4392 = vst.msk [vmem:[#allocation2 + $0x54] sm:$0xf] %vm4369, %v4322
          %4393 = vst.msk [vmem:[#allocation2 + $0x58] sm:$0xf] %vm4369, %v4324
          %4394 = vst.msk [vmem:[#allocation2 + $0x5c] sm:$0x1] %vm4372, %v4326
          %4395 = vst.msk [vmem:[#allocation2 + $0x60] sm:$0xf] %vm4369, %v4328
          %4396 = vst.msk [vmem:[#allocation2 + $0x64] sm:$0xf] %vm4369, %v4330
          %4397 = vst.msk [vmem:[#allocation2 + $0x68] sm:$0x1] %vm4372, %v4332
          %4398 = vst.msk [vmem:[#allocation2 + $0x6c] sm:$0xf] %vm4369, %v4334
          %4399 = vst.msk [vmem:[#allocation2 + $0x70] sm:$0xf] %vm4369, %v4336
          %4400 = vst.msk [vmem:[#allocation2 + $0x74] sm:$0x1] %vm4372, %v4338
          %v4401 = vld [vmem:[#allocation2] sm:$0xf]
          %v4402 = vld [vmem:[#allocation2 + $0x4] sm:$0xf]
          %v4403 = vld [vmem:[#allocation2 + $0xc] sm:$0xf]
          %v4404 = vld [vmem:[#allocation2 + $0x10] sm:$0xf]
          %v4405 = vld [vmem:[#allocation2 + $0x18] sm:$0xf]
          %v4406 = vld [vmem:[#allocation2 + $0x1c] sm:$0xf]
          %v4407 = vld [vmem:[#allocation2 + $0x24] sm:$0xf]
          %v4408 = vld [vmem:[#allocation2 + $0x28] sm:$0xf]
          %v4409 = vld [vmem:[#allocation2 + $0x30] sm:$0xf]
          %v4410 = vld [vmem:[#allocation2 + $0x34] sm:$0xf]
          %v4411 = vld [vmem:[#allocation2 + $0x3c] sm:$0xf]
          %v4412 = vld [vmem:[#allocation2 + $0x40] sm:$0xf]
          %v4413 = vld [vmem:[#allocation2 + $0x48] sm:$0xf]
          %v4414 = vld [vmem:[#allocation2 + $0x4c] sm:$0xf]
          %v4415 = vld [vmem:[#allocation2 + $0x54] sm:$0xf]
          %v4416 = vld [vmem:[#allocation2 + $0x58] sm:$0xf]
          %v4417 = vld [vmem:[#allocation2 + $0x60] sm:$0xf]
          %v4418 = vld [vmem:[#allocation2 + $0x64] sm:$0xf]
          %v4419 = vld [vmem:[#allocation2 + $0x6c] sm:$0xf]
          %v4420 = vld [vmem:[#allocation2 + $0x70] sm:$0xf]
          %v4421 = vld [vmem:[#allocation2 + $0x8] sm:$0x1]
          %v4422 = vld [vmem:[#allocation2 + $0x14] sm:$0x1]
          %v4423 = vld [vmem:[#allocation2 + $0x20] sm:$0x1]
          %v4424 = vld [vmem:[#allocation2 + $0x2c] sm:$0x1]
          %v4425 = vld [vmem:[#allocation2 + $0x38] sm:$0x1]
          %v4426 = vld [vmem:[#allocation2 + $0x44] sm:$0x1]
          %v4427 = vld [vmem:[#allocation2 + $0x50] sm:$0x1]
          %v4428 = vld [vmem:[#allocation2 + $0x5c] sm:$0x1]
          %v4429 = vld [vmem:[#allocation2 + $0x68] sm:$0x1]
          %v4430 = vld [vmem:[#allocation2 + $0x74] sm:$0x1]
          %v4431 = vld [vmem:[#allocation2] sm:$0xe]
          %v4432 = vld [vmem:[#allocation2 + $0xc] sm:$0xe]
          %v4433 = vld [vmem:[#allocation2 + $0x18] sm:$0xe]
          %v4434 = vld [vmem:[#allocation2 + $0x24] sm:$0xe]
          %v4435 = vld [vmem:[#allocation2 + $0x30] sm:$0xe]
          %v4436 = vld [vmem:[#allocation2 + $0x3c] sm:$0xe]
          %v4437 = vld [vmem:[#allocation2 + $0x48] sm:$0xe]
          %v4438 = vld [vmem:[#allocation2 + $0x54] sm:$0xe]
          %v4439 = vld [vmem:[#allocation2 + $0x60] sm:$0xe]
          %v4440 = vld [vmem:[#allocation2 + $0x6c] sm:$0xe]
          %v4461 = vunpack.c.l.b16 %v4401
          %v4462 = vunpack.c.l.b16 %v4402
          %v4463 = vunpack.c.l.b16 %v4403
          %v4464 = vunpack.c.l.b16 %v4404
          %v4465 = vunpack.c.l.b16 %v4405
          %v4466 = vunpack.c.l.b16 %v4406
          %v4467 = vunpack.c.l.b16 %v4407
          %v4468 = vunpack.c.l.b16 %v4408
          %v4469 = vunpack.c.l.b16 %v4409
          %v4470 = vunpack.c.l.b16 %v4410
          %v4471 = vunpack.c.l.b16 %v4411
          %v4472 = vunpack.c.l.b16 %v4412
          %v4473 = vunpack.c.l.b16 %v4413
          %v4474 = vunpack.c.l.b16 %v4414
          %v4475 = vunpack.c.l.b16 %v4415
          %v4476 = vunpack.c.l.b16 %v4416
          %v4477 = vunpack.c.l.b16 %v4417
          %v4478 = vunpack.c.l.b16 %v4418
          %v4479 = vunpack.c.l.b16 %v4419
          %v4480 = vunpack.c.l.b16 %v4420
          %v4481 = vpack.c.b16 %v4462, %v4461
          %v4482 = vpack.c.b16 %v4464, %v4463
          %v4483 = vpack.c.b16 %v4466, %v4465
          %v4484 = vpack.c.b16 %v4468, %v4467
          %v4485 = vpack.c.b16 %v4470, %v4469
          %v4486 = vpack.c.b16 %v4472, %v4471
          %v4487 = vpack.c.b16 %v4474, %v4473
          %v4488 = vpack.c.b16 %v4476, %v4475
          %v4489 = vpack.c.b16 %v4478, %v4477
          %v4490 = vpack.c.b16 %v4480, %v4479
          %v4501 = vunpack.c.l.b16 %v4421
          %v4502 = vunpack.c.l.b16 %v4422
          %v4503 = vunpack.c.l.b16 %v4423
          %v4504 = vunpack.c.l.b16 %v4424
          %v4505 = vunpack.c.l.b16 %v4425
          %v4506 = vunpack.c.l.b16 %v4426
          %v4507 = vunpack.c.l.b16 %v4427
          %v4508 = vunpack.c.l.b16 %v4428
          %v4509 = vunpack.c.l.b16 %v4429
          %v4510 = vunpack.c.l.b16 %v4430
          %v4511 = vpack.c.b16 %v4501, %v4501
          %v4512 = vpack.c.b16 %v4502, %v4502
          %v4513 = vpack.c.b16 %v4503, %v4503
          %v4514 = vpack.c.b16 %v4504, %v4504
          %v4515 = vpack.c.b16 %v4505, %v4505
          %v4516 = vpack.c.b16 %v4506, %v4506
          %v4517 = vpack.c.b16 %v4507, %v4507
          %v4518 = vpack.c.b16 %v4508, %v4508
          %v4519 = vpack.c.b16 %v4509, %v4509
          %v4520 = vpack.c.b16 %v4510, %v4510
          %vm4521 = vsmask.f32 7424
          %v4523 = vshrl.u32 %v4481, 16
          %v4525 = vshll.u32 %v4481, 16
          %v4527 = vrot.slane %v4525, 1
          %v4528 = vor.u32 %v4523, %v4527
          %v4530 = vshll.u32 %v4511, 16
          %v4532 = vrot.slane %v4530, 1
          %v4533 = vsel %vm4521, %v4528, %v4532
          %v4535 = vshrl.u32 %v4482, 16
          %v4537 = vshll.u32 %v4482, 16
          %v4539 = vrot.slane %v4537, 1
          %v4540 = vor.u32 %v4535, %v4539
          %v4542 = vshll.u32 %v4512, 16
          %v4544 = vrot.slane %v4542, 1
          %v4545 = vsel %vm4521, %v4540, %v4544
          %v4547 = vshrl.u32 %v4483, 16
          %v4549 = vshll.u32 %v4483, 16
          %v4551 = vrot.slane %v4549, 1
          %v4552 = vor.u32 %v4547, %v4551
          %v4554 = vshll.u32 %v4513, 16
          %v4556 = vrot.slane %v4554, 1
          %v4557 = vsel %vm4521, %v4552, %v4556
          %v4559 = vshrl.u32 %v4484, 16
          %v4561 = vshll.u32 %v4484, 16
          %v4563 = vrot.slane %v4561, 1
          %v4564 = vor.u32 %v4559, %v4563
          %v4566 = vshll.u32 %v4514, 16
          %v4568 = vrot.slane %v4566, 1
          %v4569 = vsel %vm4521, %v4564, %v4568
          %v4571 = vshrl.u32 %v4485, 16
          %v4573 = vshll.u32 %v4485, 16
          %v4575 = vrot.slane %v4573, 1
          %v4576 = vor.u32 %v4571, %v4575
          %v4578 = vshll.u32 %v4515, 16
          %v4580 = vrot.slane %v4578, 1
          %v4581 = vsel %vm4521, %v4576, %v4580
          %v4583 = vshrl.u32 %v4486, 16
          %v4585 = vshll.u32 %v4486, 16
          %v4587 = vrot.slane %v4585, 1
          %v4588 = vor.u32 %v4583, %v4587
          %v4590 = vshll.u32 %v4516, 16
          %v4592 = vrot.slane %v4590, 1
          %v4593 = vsel %vm4521, %v4588, %v4592
          %v4595 = vshrl.u32 %v4487, 16
          %v4597 = vshll.u32 %v4487, 16
          %v4599 = vrot.slane %v4597, 1
          %v4600 = vor.u32 %v4595, %v4599
          %v4602 = vshll.u32 %v4517, 16
          %v4604 = vrot.slane %v4602, 1
          %v4605 = vsel %vm4521, %v4600, %v4604
          %v4607 = vshrl.u32 %v4488, 16
          %v4609 = vshll.u32 %v4488, 16
          %v4611 = vrot.slane %v4609, 1
          %v4612 = vor.u32 %v4607, %v4611
          %v4614 = vshll.u32 %v4518, 16
          %v4616 = vrot.slane %v4614, 1
          %v4617 = vsel %vm4521, %v4612, %v4616
          %v4619 = vshrl.u32 %v4489, 16
          %v4621 = vshll.u32 %v4489, 16
          %v4623 = vrot.slane %v4621, 1
          %v4624 = vor.u32 %v4619, %v4623
          %v4626 = vshll.u32 %v4519, 16
          %v4628 = vrot.slane %v4626, 1
          %v4629 = vsel %vm4521, %v4624, %v4628
          %v4631 = vshrl.u32 %v4490, 16
          %v4633 = vshll.u32 %v4490, 16
          %v4635 = vrot.slane %v4633, 1
          %v4636 = vor.u32 %v4631, %v4635
          %v4638 = vshll.u32 %v4520, 16
          %v4640 = vrot.slane %v4638, 1
          %v4641 = vsel %vm4521, %v4636, %v4640
          %4642 = vrot.lane.b32.xlu0 %v4533, 20
          %v4643 = vpop.permute.xlu0 %4642
          %4644 = vrot.lane.b32.xlu0 %v4545, 20
          %v4645 = vpop.permute.xlu0 %4644
          %4646 = vrot.lane.b32.xlu0 %v4557, 20
          %v4647 = vpop.permute.xlu0 %4646
          %4648 = vrot.lane.b32.xlu0 %v4569, 20
          %v4649 = vpop.permute.xlu0 %4648
          %4650 = vrot.lane.b32.xlu0 %v4581, 20
          %v4651 = vpop.permute.xlu0 %4650
          %4652 = vrot.lane.b32.xlu0 %v4593, 20
          %v4653 = vpop.permute.xlu0 %4652
          %4654 = vrot.lane.b32.xlu0 %v4605, 20
          %v4655 = vpop.permute.xlu0 %4654
          %4656 = vrot.lane.b32.xlu0 %v4617, 20
          %v4657 = vpop.permute.xlu0 %4656
          %4658 = vrot.lane.b32.xlu0 %v4629, 20
          %v4659 = vpop.permute.xlu0 %4658
          %4660 = vrot.lane.b32.xlu0 %v4641, 20
          %v4661 = vpop.permute.xlu0 %4660
          %v4672 = vunpack.c.l.b16 %v4431
          %v4673 = vunpack.c.l.b16 %v4432
          %v4674 = vunpack.c.l.b16 %v4433
          %v4675 = vunpack.c.l.b16 %v4434
          %v4676 = vunpack.c.l.b16 %v4435
          %v4677 = vunpack.c.l.b16 %v4436
          %v4678 = vunpack.c.l.b16 %v4437
          %v4679 = vunpack.c.l.b16 %v4438
          %v4680 = vunpack.c.l.b16 %v4439
          %v4681 = vunpack.c.l.b16 %v4440
          %v4682 = vpack.c.b16 %v4462, %v4672
          %v4683 = vpack.c.b16 %v4464, %v4673
          %v4684 = vpack.c.b16 %v4466, %v4674
          %v4685 = vpack.c.b16 %v4468, %v4675
          %v4686 = vpack.c.b16 %v4470, %v4676
          %v4687 = vpack.c.b16 %v4472, %v4677
          %v4688 = vpack.c.b16 %v4474, %v4678
          %v4689 = vpack.c.b16 %v4476, %v4679
          %v4690 = vpack.c.b16 %v4478, %v4680
          %v4691 = vpack.c.b16 %v4480, %v4681
          %vm4692 = vcmask 1046528
          %v4693 = vrot.slane %v4682, 1
          %v4694 = vrot.slane %v4511, 1
          %v4695 = vsel %vm4692, %v4693, %v4694
          %v4696 = vrot.slane %v4683, 1
          %v4697 = vrot.slane %v4512, 1
          %v4698 = vsel %vm4692, %v4696, %v4697
          %v4699 = vrot.slane %v4684, 1
          %v4700 = vrot.slane %v4513, 1
          %v4701 = vsel %vm4692, %v4699, %v4700
          %v4702 = vrot.slane %v4685, 1
          %v4703 = vrot.slane %v4514, 1
          %v4704 = vsel %vm4692, %v4702, %v4703
          %v4705 = vrot.slane %v4686, 1
          %v4706 = vrot.slane %v4515, 1
          %v4707 = vsel %vm4692, %v4705, %v4706
          %v4708 = vrot.slane %v4687, 1
          %v4709 = vrot.slane %v4516, 1
          %v4710 = vsel %vm4692, %v4708, %v4709
          %v4711 = vrot.slane %v4688, 1
          %v4712 = vrot.slane %v4517, 1
          %v4713 = vsel %vm4692, %v4711, %v4712
          %v4714 = vrot.slane %v4689, 1
          %v4715 = vrot.slane %v4518, 1
          %v4716 = vsel %vm4692, %v4714, %v4715
          %v4717 = vrot.slane %v4690, 1
          %v4718 = vrot.slane %v4519, 1
          %v4719 = vsel %vm4692, %v4717, %v4718
          %v4720 = vrot.slane %v4691, 1
          %v4721 = vrot.slane %v4520, 1
          %v4722 = vsel %vm4692, %v4720, %v4721
          %4723 = vrot.lane.b32.xlu0 %v4695, 40
          %v4724 = vpop.permute.xlu0 %4723
          %4725 = vrot.lane.b32.xlu0 %v4698, 40
          %v4726 = vpop.permute.xlu0 %4725
          %4727 = vrot.lane.b32.xlu0 %v4701, 40
          %v4728 = vpop.permute.xlu0 %4727
          %4729 = vrot.lane.b32.xlu0 %v4704, 40
          %v4730 = vpop.permute.xlu0 %4729
          %4731 = vrot.lane.b32.xlu0 %v4707, 40
          %v4732 = vpop.permute.xlu0 %4731
          %4733 = vrot.lane.b32.xlu0 %v4710, 40
          %v4734 = vpop.permute.xlu0 %4733
          %4735 = vrot.lane.b32.xlu0 %v4713, 40
          %v4736 = vpop.permute.xlu0 %4735
          %4737 = vrot.lane.b32.xlu0 %v4716, 40
          %v4738 = vpop.permute.xlu0 %4737
          %4739 = vrot.lane.b32.xlu0 %v4719, 40
          %v4740 = vpop.permute.xlu0 %4739
          %4741 = vrot.lane.b32.xlu0 %v4722, 40
          %v4742 = vpop.permute.xlu0 %4741
          %vm4743 = vcmask 162816
          %v4745 = vsel %vm4743, %v4481, %v4643
          %v4747 = vsel %vm4743, %v4482, %v4645
          %v4749 = vsel %vm4743, %v4483, %v4647
          %v4751 = vsel %vm4743, %v4484, %v4649
          %v4753 = vsel %vm4743, %v4485, %v4651
          %v4755 = vsel %vm4743, %v4486, %v4653
          %v4757 = vsel %vm4743, %v4487, %v4655
          %v4759 = vsel %vm4743, %v4488, %v4657
          %v4761 = vsel %vm4743, %v4489, %v4659
          %v4763 = vsel %vm4743, %v4490, %v4661
          %vm4764 = vcmask 326656
          %v4766 = vsel %vm4764, %v4745, %v4724
          %v4768 = vsel %vm4764, %v4747, %v4726
          %v4770 = vsel %vm4764, %v4749, %v4728
          %v4772 = vsel %vm4764, %v4751, %v4730
          %v4774 = vsel %vm4764, %v4753, %v4732
          %v4776 = vsel %vm4764, %v4755, %v4734
          %v4778 = vsel %vm4764, %v4757, %v4736
          %v4780 = vsel %vm4764, %v4759, %v4738
          %v4782 = vsel %vm4764, %v4761, %v4740
          %v4784 = vsel %vm4764, %v4763, %v4742
          %v4785 = vld [vmem:[%s2] sm:$0xf]
          %v4786 = vld [vmem:[%s2 + $0x4] sm:$0xf]
          %v4787 = vld [vmem:[%s2 + $0x8] sm:$0xf]
          %v4788 = vld [vmem:[%s2 + $0xc] sm:$0xf]
          %v4789 = vld [vmem:[%s2 + $0x10] sm:$0xf]
          %v4790 = vld [vmem:[%s2 + $0x14] sm:$0xf]
          %v4791 = vld [vmem:[%s2 + $0x18] sm:$0xf]
          %v4792 = vld [vmem:[%s2 + $0x1c] sm:$0x3]
          %s4793 = scalar_lea.vmem %s2, 32
          %v4794 = vld [vmem:[%s4793] sm:$0xf]
          %v4795 = vld [vmem:[%s4793 + $0x4] sm:$0xf]
          %v4796 = vld [vmem:[%s4793 + $0x8] sm:$0xf]
          %v4797 = vld [vmem:[%s4793 + $0xc] sm:$0xf]
          %v4798 = vld [vmem:[%s4793 + $0x10] sm:$0xf]
          %v4799 = vld [vmem:[%s4793 + $0x14] sm:$0xf]
          %v4800 = vld [vmem:[%s4793 + $0x18] sm:$0xf]
          %v4801 = vld [vmem:[%s4793 + $0x1c] sm:$0x3]
          %v4810 = vunpack.c.l.b16 %v4794
          %v4811 = vunpack.c.l.b16 %v4795
          %v4812 = vunpack.c.l.b16 %v4796
          %v4813 = vunpack.c.l.b16 %v4797
          %v4814 = vunpack.c.l.b16 %v4798
          %v4815 = vunpack.c.l.b16 %v4799
          %v4816 = vunpack.c.l.b16 %v4800
          %v4817 = vunpack.c.l.b16 %v4801
          %v4818 = vpack.c.b16 %v4811, %v4810
          %v4819 = vpack.c.b16 %v4813, %v4812
          %v4820 = vpack.c.b16 %v4815, %v4814
          %v4821 = vpack.c.b16 %v4817, %v4816
          %vm4825 = vcmask 490496
          %v4826 = vsel %vm4825, %v4768, 0
          %v4828 = vsel %vm4825, %v4770, 0
          %v4830 = vsel %vm4825, %v4772, 0
          %v4832 = vsel %vm4825, %v4774, 0
          %v4834 = vsel %vm4825, %v4776, 0
          %v4836 = vsel %vm4825, %v4778, 0
          %v4838 = vsel %vm4825, %v4780, 0
          %v4840 = vsel %vm4825, %v4782, 0
          %vm4842 = vcmask 1045504
          %v4844 = vsel %vm4842, %v4821, 0
          %4846 = vmatpush.bf16.msra.mxu0 0
          %4847 = vmatpush.bf16.msra.mxu0 0
          %4848 = vmatpush.bf16.msra.mxu0 0
          %4849 = vmatpush.bf16.msra.mxu0 0
          %4850 = vmatpush.bf16.msra.mxu0 %v4844
          %4851 = vmatpush.bf16.msra.mxu0 %v4820
          %4852 = vmatpush.bf16.msra.mxu0 %v4819
          %4853 = vmatpush.bf16.msra.mxu0 %v4818
          %4854 = vmatmul.bf16.gmra.mxu0 %v4826
          %v4855 = vpop.f32.mrf.mxu0
          %v4856 = vadd.f32 0.0, %v4855
          %v4857 = vpop.f32.mrf.mxu0
          %v4858 = vadd.f32 0.0, %v4857
          %4859 = vmatmul.bf16.gmra.mxu0 %v4828
          %v4860 = vpop.f32.mrf.mxu0
          %v4861 = vadd.f32 0.0, %v4860
          %v4862 = vpop.f32.mrf.mxu0
          %v4863 = vadd.f32 0.0, %v4862
          %4864 = vmatmul.bf16.gmra.mxu0 %v4830
          %v4865 = vpop.f32.mrf.mxu0
          %v4866 = vadd.f32 0.0, %v4865
          %v4867 = vpop.f32.mrf.mxu0
          %v4868 = vadd.f32 0.0, %v4867
          %4869 = vmatmul.bf16.gmra.mxu0 %v4832
          %v4870 = vpop.f32.mrf.mxu0
          %v4871 = vadd.f32 0.0, %v4870
          %v4872 = vpop.f32.mrf.mxu0
          %v4873 = vadd.f32 0.0, %v4872
          %4874 = vmatmul.bf16.gmra.mxu0 %v4834
          %v4875 = vpop.f32.mrf.mxu0
          %v4876 = vadd.f32 0.0, %v4875
          %v4877 = vpop.f32.mrf.mxu0
          %v4878 = vadd.f32 0.0, %v4877
          %4879 = vmatmul.bf16.gmra.mxu0 %v4836
          %v4880 = vpop.f32.mrf.mxu0
          %v4881 = vadd.f32 0.0, %v4880
          %v4882 = vpop.f32.mrf.mxu0
          %v4883 = vadd.f32 0.0, %v4882
          %4884 = vmatmul.bf16.gmra.mxu0 %v4838
          %v4885 = vpop.f32.mrf.mxu0
          %v4886 = vadd.f32 0.0, %v4885
          %v4887 = vpop.f32.mrf.mxu0
          %v4888 = vadd.f32 0.0, %v4887
          %4889 = vmatmul.bf16.gmra.mxu0 %v4840
          %v4890 = vpop.f32.mrf.mxu0
          %v4891 = vadd.f32 0.0, %v4890
          %v4892 = vpop.f32.mrf.mxu0
          %v4893 = vadd.f32 0.0, %v4892
          %4894 = vdwg.mxu0
          %v4903 = vunpack.c.l.b16 %v4785
          %v4904 = vunpack.c.l.b16 %v4786
          %v4905 = vunpack.c.l.b16 %v4787
          %v4906 = vunpack.c.l.b16 %v4788
          %v4907 = vunpack.c.l.b16 %v4789
          %v4908 = vunpack.c.l.b16 %v4790
          %v4909 = vunpack.c.l.b16 %v4791
          %v4910 = vunpack.c.l.b16 %v4792
          %v4911 = vpack.c.b16 %v4904, %v4903
          %v4912 = vpack.c.b16 %v4906, %v4905
          %v4913 = vpack.c.b16 %v4908, %v4907
          %v4914 = vpack.c.b16 %v4910, %v4909
          %v4918 = vsel %vm4825, %v4766, 0
          %v4921 = vsel %vm4842, %v4914, 0
          %4923 = vmatpush.bf16.msra.mxu0 0
          %4924 = vmatpush.bf16.msra.mxu0 0
          %4925 = vmatpush.bf16.msra.mxu0 0
          %4926 = vmatpush.bf16.msra.mxu0 0
          %4927 = vmatpush.bf16.msra.mxu0 %v4921
          %4928 = vmatpush.bf16.msra.mxu0 %v4913
          %4929 = vmatpush.bf16.msra.mxu0 %v4912
          %4930 = vmatpush.bf16.msra.mxu0 %v4911
          %4931 = vmatmul.bf16.gmra.mxu0 %v4918
          %v4932 = vpop.f32.mrf.mxu0
          %v4933 = vadd.f32 %v4856, %v4932
          %v4934 = vpop.f32.mrf.mxu0
          %v4935 = vadd.f32 %v4858, %v4934
          %4936 = vmatmul.bf16.gmra.mxu0 %v4826
          %v4937 = vpop.f32.mrf.mxu0
          %v4938 = vadd.f32 %v4861, %v4937
          %v4939 = vpop.f32.mrf.mxu0
          %v4940 = vadd.f32 %v4863, %v4939
          %4941 = vmatmul.bf16.gmra.mxu0 %v4828
          %v4942 = vpop.f32.mrf.mxu0
          %v4943 = vadd.f32 %v4866, %v4942
          %v4944 = vpop.f32.mrf.mxu0
          %v4945 = vadd.f32 %v4868, %v4944
          %4946 = vmatmul.bf16.gmra.mxu0 %v4830
          %v4947 = vpop.f32.mrf.mxu0
          %v4948 = vadd.f32 %v4871, %v4947
          %v4949 = vpop.f32.mrf.mxu0
          %v4950 = vadd.f32 %v4873, %v4949
          %4951 = vmatmul.bf16.gmra.mxu0 %v4832
          %v4952 = vpop.f32.mrf.mxu0
          %v4953 = vadd.f32 %v4876, %v4952
          %v4954 = vpop.f32.mrf.mxu0
          %v4955 = vadd.f32 %v4878, %v4954
          %4956 = vmatmul.bf16.gmra.mxu0 %v4834
          %v4957 = vpop.f32.mrf.mxu0
          %v4958 = vadd.f32 %v4881, %v4957
          %v4959 = vpop.f32.mrf.mxu0
          %v4960 = vadd.f32 %v4883, %v4959
          %4961 = vmatmul.bf16.gmra.mxu0 %v4836
          %v4962 = vpop.f32.mrf.mxu0
          %v4963 = vadd.f32 %v4886, %v4962
          %v4964 = vpop.f32.mrf.mxu0
          %v4965 = vadd.f32 %v4888, %v4964
          %4966 = vmatmul.bf16.gmra.mxu0 %v4838
          %v4967 = vpop.f32.mrf.mxu0
          %v4968 = vadd.f32 %v4891, %v4967
          %v4969 = vpop.f32.mrf.mxu0
          %v4970 = vadd.f32 %v4893, %v4969
          %4971 = vdwg.mxu0
          %s4972 = scalar_lea.vmem %s2, 64
          %v4973 = vld [vmem:[%s4972] sm:$0xf]
          %v4974 = vld [vmem:[%s4972 + $0x4] sm:$0xf]
          %v4975 = vld [vmem:[%s4972 + $0x8] sm:$0xf]
          %v4976 = vld [vmem:[%s4972 + $0xc] sm:$0xf]
          %v4977 = vld [vmem:[%s4972 + $0x10] sm:$0xf]
          %v4978 = vld [vmem:[%s4972 + $0x14] sm:$0xf]
          %v4979 = vld [vmem:[%s4972 + $0x18] sm:$0xf]
          %v4980 = vld [vmem:[%s4972 + $0x1c] sm:$0x3]
          %v4989 = vunpack.c.l.b16 %v4973
          %v4990 = vunpack.c.l.b16 %v4974
          %v4991 = vunpack.c.l.b16 %v4975
          %v4992 = vunpack.c.l.b16 %v4976
          %v4993 = vunpack.c.l.b16 %v4977
          %v4994 = vunpack.c.l.b16 %v4978
          %v4995 = vunpack.c.l.b16 %v4979
          %v4996 = vunpack.c.l.b16 %v4980
          %v4997 = vpack.c.b16 %v4990, %v4989
          %v4998 = vpack.c.b16 %v4992, %v4991
          %v4999 = vpack.c.b16 %v4994, %v4993
          %v5000 = vpack.c.b16 %v4996, %v4995
          %v5004 = vsel %vm4825, %v4784, 0
          %v5007 = vsel %vm4842, %v5000, 0
          %5009 = vmatpush.bf16.msra.mxu0 0
          %5010 = vmatpush.bf16.msra.mxu0 0
          %5011 = vmatpush.bf16.msra.mxu0 0
          %5012 = vmatpush.bf16.msra.mxu0 0
          %5013 = vmatpush.bf16.msra.mxu0 %v5007
          %5014 = vmatpush.bf16.msra.mxu0 %v4999
          %5015 = vmatpush.bf16.msra.mxu0 %v4998
          %5016 = vmatpush.bf16.msra.mxu0 %v4997
          %5017 = vmatmul.bf16.gmra.mxu0 %v4828
          %v5018 = vpop.f32.mrf.mxu0
          %v5019 = vadd.f32 0.0, %v5018
          %v5020 = vpop.f32.mrf.mxu0
          %v5021 = vadd.f32 0.0, %v5020
          %5022 = vmatmul.bf16.gmra.mxu0 %v4830
          %v5023 = vpop.f32.mrf.mxu0
          %v5024 = vadd.f32 0.0, %v5023
          %v5025 = vpop.f32.mrf.mxu0
          %v5026 = vadd.f32 0.0, %v5025
          %5027 = vmatmul.bf16.gmra.mxu0 %v4832
          %v5028 = vpop.f32.mrf.mxu0
          %v5029 = vadd.f32 0.0, %v5028
          %v5030 = vpop.f32.mrf.mxu0
          %v5031 = vadd.f32 0.0, %v5030
          %5032 = vmatmul.bf16.gmra.mxu0 %v4834
          %v5033 = vpop.f32.mrf.mxu0
          %v5034 = vadd.f32 0.0, %v5033
          %v5035 = vpop.f32.mrf.mxu0
          %v5036 = vadd.f32 0.0, %v5035
          %5037 = vmatmul.bf16.gmra.mxu0 %v4836
          %v5038 = vpop.f32.mrf.mxu0
          %v5039 = vadd.f32 0.0, %v5038
          %v5040 = vpop.f32.mrf.mxu0
          %v5041 = vadd.f32 0.0, %v5040
          %5042 = vmatmul.bf16.gmra.mxu0 %v4838
          %v5043 = vpop.f32.mrf.mxu0
          %v5044 = vadd.f32 0.0, %v5043
          %v5045 = vpop.f32.mrf.mxu0
          %v5046 = vadd.f32 0.0, %v5045
          %5047 = vmatmul.bf16.gmra.mxu0 %v4840
          %v5048 = vpop.f32.mrf.mxu0
          %v5049 = vadd.f32 0.0, %v5048
          %v5050 = vpop.f32.mrf.mxu0
          %v5051 = vadd.f32 0.0, %v5050
          %5052 = vmatmul.bf16.gmra.mxu0 %v5004
          %v5053 = vpop.f32.mrf.mxu0
          %v5054 = vadd.f32 0.0, %v5053
          %v5055 = vpop.f32.mrf.mxu0
          %v5056 = vadd.f32 0.0, %v5055
          %5057 = vdwg.mxu0
          %v5058 = vadd.f32 %v4933, %v5019
          %v5059 = vadd.f32 %v4935, %v5021
          %v5060 = vadd.f32 %v4938, %v5024
          %v5061 = vadd.f32 %v4940, %v5026
          %v5062 = vadd.f32 %v4943, %v5029
          %v5063 = vadd.f32 %v4945, %v5031
          %v5064 = vadd.f32 %v4948, %v5034
          %v5065 = vadd.f32 %v4950, %v5036
          %v5066 = vadd.f32 %v4953, %v5039
          %v5067 = vadd.f32 %v4955, %v5041
          %v5068 = vadd.f32 %v4958, %v5044
          %v5069 = vadd.f32 %v4960, %v5046
          %v5070 = vadd.f32 %v4963, %v5049
          %v5071 = vadd.f32 %v4965, %v5051
          %v5072 = vadd.f32 %v4968, %v5054
          %v5073 = vadd.f32 %v4970, %v5056
          %s5074 = smul.u32 %s187, 128
          %s5075 = scalar_lea.vmem %s184, %s5074
          %vm5076 = vcmask 64512
          %5077 = vst.msk [vmem:[%s5075] sm:$0xff] %vm5076, %v5058
          %5078 = vst.msk [vmem:[%s5075 + $0x8] sm:$0xff] %vm5076, %v5059
          %5079 = vst.msk [vmem:[%s5075 + $0x10] sm:$0xff] %vm5076, %v5060
          %5080 = vst.msk [vmem:[%s5075 + $0x18] sm:$0xff] %vm5076, %v5061
          %5081 = vst.msk [vmem:[%s5075 + $0x20] sm:$0xff] %vm5076, %v5062
          %5082 = vst.msk [vmem:[%s5075 + $0x28] sm:$0xff] %vm5076, %v5063
          %5083 = vst.msk [vmem:[%s5075 + $0x30] sm:$0xff] %vm5076, %v5064
          %5084 = vst.msk [vmem:[%s5075 + $0x38] sm:$0xff] %vm5076, %v5065
          %5085 = vst.msk [vmem:[%s5075 + $0x40] sm:$0xff] %vm5076, %v5066
          %5086 = vst.msk [vmem:[%s5075 + $0x48] sm:$0xff] %vm5076, %v5067
          %5087 = vst.msk [vmem:[%s5075 + $0x50] sm:$0xff] %vm5076, %v5068
          %5088 = vst.msk [vmem:[%s5075 + $0x58] sm:$0xff] %vm5076, %v5069
          %5089 = vst.msk [vmem:[%s5075 + $0x60] sm:$0xff] %vm5076, %v5070
          %5090 = vst.msk [vmem:[%s5075 + $0x68] sm:$0xff] %vm5076, %v5071
          %5091 = vst.msk [vmem:[%s5075 + $0x70] sm:$0xff] %vm5076, %v5072
          %5092 = vst.msk [vmem:[%s5075 + $0x78] sm:$0xff] %vm5076, %v5073
          %v5093 = vsel %vm5076, %v5058, 0.0
          %v5094 = vsel %vm5076, %v5059, 0.0
          %v5095 = vadd.f32 %v5093, %v5094
          %v5096 = vsel %vm5076, %v5060, 0.0
          %v5097 = vadd.f32 %v5095, %v5096
          %v5098 = vsel %vm5076, %v5061, 0.0
          %v5099 = vadd.f32 %v5097, %v5098
          %v5100 = vsel %vm5076, %v5062, 0.0
          %v5101 = vadd.f32 %v5099, %v5100
          %v5102 = vsel %vm5076, %v5063, 0.0
          %v5103 = vadd.f32 %v5101, %v5102
          %v5104 = vsel %vm5076, %v5064, 0.0
          %v5105 = vadd.f32 %v5103, %v5104
          %v5106 = vsel %vm5076, %v5065, 0.0
          %v5107 = vadd.f32 %v5105, %v5106
          %v5108 = vsel %vm5076, %v5066, 0.0
          %v5109 = vadd.f32 %v5107, %v5108
          %v5110 = vsel %vm5076, %v5067, 0.0
          %v5111 = vadd.f32 %v5109, %v5110
          %v5112 = vsel %vm5076, %v5068, 0.0
          %v5113 = vadd.f32 %v5111, %v5112
          %v5114 = vsel %vm5076, %v5069, 0.0
          %v5115 = vadd.f32 %v5113, %v5114
          %v5116 = vsel %vm5076, %v5070, 0.0
          %v5117 = vadd.f32 %v5115, %v5116
          %v5118 = vsel %vm5076, %v5071, 0.0
          %v5119 = vadd.f32 %v5117, %v5118
          %v5120 = vsel %vm5076, %v5072, 0.0
          %v5121 = vadd.f32 %v5119, %v5120
          %v5122 = vsel %vm5076, %v5073, 0.0
          %v5123 = vadd.f32 %v5121, %v5122
          %v5124 = vrot.slane %v5123, 4
          %v5125 = vadd.f32 %v5123, %v5124
          %v5126 = vrot.slane %v5125, 2
          %v5127 = vadd.f32 %v5125, %v5126
          %v5128 = vrot.slane %v5127, 1
          %v5129 = vadd.f32 %v5127, %v5128
          %v5130 = vadd.f32 %v192, %v5129
          %v5131 = vmul.f32 %v5058, %v5058
          %v5132 = vmul.f32 %v5059, %v5059
          %v5133 = vmul.f32 %v5060, %v5060
          %v5134 = vmul.f32 %v5061, %v5061
          %v5135 = vmul.f32 %v5062, %v5062
          %v5136 = vmul.f32 %v5063, %v5063
          %v5137 = vmul.f32 %v5064, %v5064
          %v5138 = vmul.f32 %v5065, %v5065
          %v5139 = vmul.f32 %v5066, %v5066
          %v5140 = vmul.f32 %v5067, %v5067
          %v5141 = vmul.f32 %v5068, %v5068
          %v5142 = vmul.f32 %v5069, %v5069
          %v5143 = vmul.f32 %v5070, %v5070
          %v5144 = vmul.f32 %v5071, %v5071
          %v5145 = vmul.f32 %v5072, %v5072
          %v5146 = vmul.f32 %v5073, %v5073
          %v5147 = vsel %vm5076, %v5131, 0.0
          %v5148 = vsel %vm5076, %v5132, 0.0
          %v5149 = vadd.f32 %v5147, %v5148
          %v5150 = vsel %vm5076, %v5133, 0.0
          %v5151 = vadd.f32 %v5149, %v5150
          %v5152 = vsel %vm5076, %v5134, 0.0
          %v5153 = vadd.f32 %v5151, %v5152
          %v5154 = vsel %vm5076, %v5135, 0.0
          %v5155 = vadd.f32 %v5153, %v5154
          %v5156 = vsel %vm5076, %v5136, 0.0
          %v5157 = vadd.f32 %v5155, %v5156
          %v5158 = vsel %vm5076, %v5137, 0.0
          %v5159 = vadd.f32 %v5157, %v5158
          %v5160 = vsel %vm5076, %v5138, 0.0
          %v5161 = vadd.f32 %v5159, %v5160
          %v5162 = vsel %vm5076, %v5139, 0.0
          %v5163 = vadd.f32 %v5161, %v5162
          %v5164 = vsel %vm5076, %v5140, 0.0
          %v5165 = vadd.f32 %v5163, %v5164
          %v5166 = vsel %vm5076, %v5141, 0.0
          %v5167 = vadd.f32 %v5165, %v5166
          %v5168 = vsel %vm5076, %v5142, 0.0
          %v5169 = vadd.f32 %v5167, %v5168
          %v5170 = vsel %vm5076, %v5143, 0.0
          %v5171 = vadd.f32 %v5169, %v5170
          %v5172 = vsel %vm5076, %v5144, 0.0
          %v5173 = vadd.f32 %v5171, %v5172
          %v5174 = vsel %vm5076, %v5145, 0.0
          %v5175 = vadd.f32 %v5173, %v5174
          %v5176 = vsel %vm5076, %v5146, 0.0
          %v5177 = vadd.f32 %v5175, %v5176
          %v5178 = vrot.slane %v5177, 4
          %v5179 = vadd.f32 %v5177, %v5178
          %v5180 = vrot.slane %v5179, 2
          %v5181 = vadd.f32 %v5179, %v5180
          %v5182 = vrot.slane %v5181, 1
          %v5183 = vadd.f32 %v5181, %v5182
          %v5184 = vadd.f32 %v193, %v5183
        $region41: #{tpu_custom_call.1} parent=31 // loop_footer
          %s191 = sadd.s32 1, %s187
        $region42: #{tpu_custom_call.1} parent=31 // loop_footer_branch
          %186 = sbr.rel target = $region38
        $region43: #{tpu_custom_call.1} parent=31 // loop_exit
          _
        %v5185 = vmul.f32 %v192, 0.00390625
        %v5186 = vmul.f32 %v193, 0.00390625
        %v5187 = vmul.f32 %v5185, %v5185
        %v5188 = vsub.f32 %v5186, %v5187
        %v5189 = vmax.f32 %v5188, 0.0
        %v5190 = vadd.f32 %v5189, 1e-05
        %v5191 = vrsqrt.pop %v5190
        %v5192 = vmul.f32 %v5191, %v5190
        %v5193 = vmul.f32 %v5192, %v5191
        %v5194 = vmul.f32 0.5, %v5193
        %v5195 = vsub.f32 1.5, %v5194
        %v5196 = vmul.f32 %v5191, %v5195
        %vm5197 = vweird.f32 %v5190
        %vm5198 = vweird.f32 %v5191
        %vm5199 = vmor %vm5197, %vm5198
        %v5200 = vsel %vm5199, %v5191, %v5196
        loop: start=0, step=1, limit=2
        $region44: #{tpu_custom_call.1} parent=31 // loop_pre_header
          _
        $region45: #{tpu_custom_call.1} parent=31 // loop_header
          %s5202 = sphi 0, %s5206
          %p5203 = scmp.ge.s32.totalorder %s5202, 2
        $region46: #{tpu_custom_call.1} parent=31 // loop_header_branch
          %5205 = sbr.rel (%p5203) target = $region50
        $region47: #{tpu_custom_call.1} parent=31 // loop_body
          %s5207 = smul.u32 %s5202, 128
          %s5208 = scalar_lea.vmem %s184, %s5207
          %v5209 = vld [vmem:[%s5208] sm:$0xff]
          %v5210 = vld [vmem:[%s5208 + $0x8] sm:$0xff]
          %v5211 = vld [vmem:[%s5208 + $0x10] sm:$0xff]
          %v5212 = vld [vmem:[%s5208 + $0x18] sm:$0xff]
          %v5213 = vld [vmem:[%s5208 + $0x20] sm:$0xff]
          %v5214 = vld [vmem:[%s5208 + $0x28] sm:$0xff]
          %v5215 = vld [vmem:[%s5208 + $0x30] sm:$0xff]
          %v5216 = vld [vmem:[%s5208 + $0x38] sm:$0xff]
          %v5217 = vld [vmem:[%s5208 + $0x40] sm:$0xff]
          %v5218 = vld [vmem:[%s5208 + $0x48] sm:$0xff]
          %v5219 = vld [vmem:[%s5208 + $0x50] sm:$0xff]
          %v5220 = vld [vmem:[%s5208 + $0x58] sm:$0xff]
          %v5221 = vld [vmem:[%s5208 + $0x60] sm:$0xff]
          %v5222 = vld [vmem:[%s5208 + $0x68] sm:$0xff]
          %v5223 = vld [vmem:[%s5208 + $0x70] sm:$0xff]
          %v5224 = vld [vmem:[%s5208 + $0x78] sm:$0xff]
          %v5225 = vsub.f32 %v5209, %v5185
          %v5226 = vsub.f32 %v5210, %v5185
          %v5227 = vsub.f32 %v5211, %v5185
          %v5228 = vsub.f32 %v5212, %v5185
          %v5229 = vsub.f32 %v5213, %v5185
          %v5230 = vsub.f32 %v5214, %v5185
          %v5231 = vsub.f32 %v5215, %v5185
          %v5232 = vsub.f32 %v5216, %v5185
          %v5233 = vsub.f32 %v5217, %v5185
          %v5234 = vsub.f32 %v5218, %v5185
          %v5235 = vsub.f32 %v5219, %v5185
          %v5236 = vsub.f32 %v5220, %v5185
          %v5237 = vsub.f32 %v5221, %v5185
          %v5238 = vsub.f32 %v5222, %v5185
          %v5239 = vsub.f32 %v5223, %v5185
          %v5240 = vsub.f32 %v5224, %v5185
          %v5241 = vmul.f32 %v5225, %v5200
          %v5242 = vmul.f32 %v5226, %v5200
          %v5243 = vmul.f32 %v5227, %v5200
          %v5244 = vmul.f32 %v5228, %v5200
          %v5245 = vmul.f32 %v5229, %v5200
          %v5246 = vmul.f32 %v5230, %v5200
          %v5247 = vmul.f32 %v5231, %v5200
          %v5248 = vmul.f32 %v5232, %v5200
          %v5249 = vmul.f32 %v5233, %v5200
          %v5250 = vmul.f32 %v5234, %v5200
          %v5251 = vmul.f32 %v5235, %v5200
          %v5252 = vmul.f32 %v5236, %v5200
          %v5253 = vmul.f32 %v5237, %v5200
          %v5254 = vmul.f32 %v5238, %v5200
          %v5255 = vmul.f32 %v5239, %v5200
          %v5256 = vmul.f32 %v5240, %v5200
          %v5257 = vxor.u32 %v5241, 2147483648
          %v5258 = vxor.u32 %v5242, 2147483648
          %v5259 = vxor.u32 %v5243, 2147483648
          %v5260 = vxor.u32 %v5244, 2147483648
          %v5261 = vxor.u32 %v5245, 2147483648
          %v5262 = vxor.u32 %v5246, 2147483648
          %v5263 = vxor.u32 %v5247, 2147483648
          %v5264 = vxor.u32 %v5248, 2147483648
          %v5265 = vxor.u32 %v5249, 2147483648
          %v5266 = vxor.u32 %v5250, 2147483648
          %v5267 = vxor.u32 %v5251, 2147483648
          %v5268 = vxor.u32 %v5252, 2147483648
          %v5269 = vxor.u32 %v5253, 2147483648
          %v5270 = vxor.u32 %v5254, 2147483648
          %v5271 = vxor.u32 %v5255, 2147483648
          %v5272 = vxor.u32 %v5256, 2147483648
          %v5273 = vmul.f32 %v5257, 1.442695
          %v5274 = vpow.pop %v5273
          %v5275 = vmul.f32 %v5258, 1.442695
          %v5276 = vpow.pop %v5275
          %v5277 = vmul.f32 %v5259, 1.442695
          %v5278 = vpow.pop %v5277
          %v5279 = vmul.f32 %v5260, 1.442695
          %v5280 = vpow.pop %v5279
          %v5281 = vmul.f32 %v5261, 1.442695
          %v5282 = vpow.pop %v5281
          %v5283 = vmul.f32 %v5262, 1.442695
          %v5284 = vpow.pop %v5283
          %v5285 = vmul.f32 %v5263, 1.442695
          %v5286 = vpow.pop %v5285
          %v5287 = vmul.f32 %v5264, 1.442695
          %v5288 = vpow.pop %v5287
          %v5289 = vmul.f32 %v5265, 1.442695
          %v5290 = vpow.pop %v5289
          %v5291 = vmul.f32 %v5266, 1.442695
          %v5292 = vpow.pop %v5291
          %v5293 = vmul.f32 %v5267, 1.442695
          %v5294 = vpow.pop %v5293
          %v5295 = vmul.f32 %v5268, 1.442695
          %v5296 = vpow.pop %v5295
          %v5297 = vmul.f32 %v5269, 1.442695
          %v5298 = vpow.pop %v5297
          %v5299 = vmul.f32 %v5270, 1.442695
          %v5300 = vpow.pop %v5299
          %v5301 = vmul.f32 %v5271, 1.442695
          %v5302 = vpow.pop %v5301
          %v5303 = vmul.f32 %v5272, 1.442695
          %v5304 = vpow.pop %v5303
          %v5305 = vadd.f32 %v5274, 1.0
          %v5306 = vadd.f32 %v5276, 1.0
          %v5307 = vadd.f32 %v5278, 1.0
          %v5308 = vadd.f32 %v5280, 1.0
          %v5309 = vadd.f32 %v5282, 1.0
          %v5310 = vadd.f32 %v5284, 1.0
          %v5311 = vadd.f32 %v5286, 1.0
          %v5312 = vadd.f32 %v5288, 1.0
          %v5313 = vadd.f32 %v5290, 1.0
          %v5314 = vadd.f32 %v5292, 1.0
          %v5315 = vadd.f32 %v5294, 1.0
          %v5316 = vadd.f32 %v5296, 1.0
          %v5317 = vadd.f32 %v5298, 1.0
          %v5318 = vadd.f32 %v5300, 1.0
          %v5319 = vadd.f32 %v5302, 1.0
          %v5320 = vadd.f32 %v5304, 1.0
          %v5321 = vrcp.pop %v5305
          %v5322 = vmul.f32 %v5305, %v5321
          %v5323 = vsub.f32 1.0, %v5322
          %v5324 = vmul.f32 %v5321, %v5323
          %v5325 = vadd.f32 %v5321, %v5324
          %vm5326 = vweird.f32 %v5305
          %vm5327 = vweird.f32 %v5321
          %vm5328 = vmor %vm5326, %vm5327
          %v5329 = vsel %vm5328, %v5321, %v5325
          %v5330 = vand.u32 2147483647, %v5305
          %vm5331 = vcmp.eq.f32.partialorder %v5330, 8.507059e+37
          %v5332 = vand.u32 %v5305, 2147483648
          %v5333 = vor.u32 1.1754944e-38, %v5332
          %v5334 = vsel %vm5331, %v5333, %v5329
          %v5335 = vmul.f32 1.0, %v5334
          %v5336 = vrcp.pop %v5306
          %v5337 = vmul.f32 %v5306, %v5336
          %v5338 = vsub.f32 1.0, %v5337
          %v5339 = vmul.f32 %v5336, %v5338
          %v5340 = vadd.f32 %v5336, %v5339
          %vm5341 = vweird.f32 %v5306
          %vm5342 = vweird.f32 %v5336
          %vm5343 = vmor %vm5341, %vm5342
          %v5344 = vsel %vm5343, %v5336, %v5340
          %v5345 = vand.u32 2147483647, %v5306
          %vm5346 = vcmp.eq.f32.partialorder %v5345, 8.507059e+37
          %v5347 = vand.u32 %v5306, 2147483648
          %v5348 = vor.u32 1.1754944e-38, %v5347
          %v5349 = vsel %vm5346, %v5348, %v5344
          %v5350 = vmul.f32 1.0, %v5349
          %v5351 = vrcp.pop %v5307
          %v5352 = vmul.f32 %v5307, %v5351
          %v5353 = vsub.f32 1.0, %v5352
          %v5354 = vmul.f32 %v5351, %v5353
          %v5355 = vadd.f32 %v5351, %v5354
          %vm5356 = vweird.f32 %v5307
          %vm5357 = vweird.f32 %v5351
          %vm5358 = vmor %vm5356, %vm5357
          %v5359 = vsel %vm5358, %v5351, %v5355
          %v5360 = vand.u32 2147483647, %v5307
          %vm5361 = vcmp.eq.f32.partialorder %v5360, 8.507059e+37
          %v5362 = vand.u32 %v5307, 2147483648
          %v5363 = vor.u32 1.1754944e-38, %v5362
          %v5364 = vsel %vm5361, %v5363, %v5359
          %v5365 = vmul.f32 1.0, %v5364
          %v5366 = vrcp.pop %v5308
          %v5367 = vmul.f32 %v5308, %v5366
          %v5368 = vsub.f32 1.0, %v5367
          %v5369 = vmul.f32 %v5366, %v5368
          %v5370 = vadd.f32 %v5366, %v5369
          %vm5371 = vweird.f32 %v5308
          %vm5372 = vweird.f32 %v5366
          %vm5373 = vmor %vm5371, %vm5372
          %v5374 = vsel %vm5373, %v5366, %v5370
          %v5375 = vand.u32 2147483647, %v5308
          %vm5376 = vcmp.eq.f32.partialorder %v5375, 8.507059e+37
          %v5377 = vand.u32 %v5308, 2147483648
          %v5378 = vor.u32 1.1754944e-38, %v5377
          %v5379 = vsel %vm5376, %v5378, %v5374
          %v5380 = vmul.f32 1.0, %v5379
          %v5381 = vrcp.pop %v5309
          %v5382 = vmul.f32 %v5309, %v5381
          %v5383 = vsub.f32 1.0, %v5382
          %v5384 = vmul.f32 %v5381, %v5383
          %v5385 = vadd.f32 %v5381, %v5384
          %vm5386 = vweird.f32 %v5309
          %vm5387 = vweird.f32 %v5381
          %vm5388 = vmor %vm5386, %vm5387
          %v5389 = vsel %vm5388, %v5381, %v5385
          %v5390 = vand.u32 2147483647, %v5309
          %vm5391 = vcmp.eq.f32.partialorder %v5390, 8.507059e+37
          %v5392 = vand.u32 %v5309, 2147483648
          %v5393 = vor.u32 1.1754944e-38, %v5392
          %v5394 = vsel %vm5391, %v5393, %v5389
          %v5395 = vmul.f32 1.0, %v5394
          %v5396 = vrcp.pop %v5310
          %v5397 = vmul.f32 %v5310, %v5396
          %v5398 = vsub.f32 1.0, %v5397
          %v5399 = vmul.f32 %v5396, %v5398
          %v5400 = vadd.f32 %v5396, %v5399
          %vm5401 = vweird.f32 %v5310
          %vm5402 = vweird.f32 %v5396
          %vm5403 = vmor %vm5401, %vm5402
          %v5404 = vsel %vm5403, %v5396, %v5400
          %v5405 = vand.u32 2147483647, %v5310
          %vm5406 = vcmp.eq.f32.partialorder %v5405, 8.507059e+37
          %v5407 = vand.u32 %v5310, 2147483648
          %v5408 = vor.u32 1.1754944e-38, %v5407
          %v5409 = vsel %vm5406, %v5408, %v5404
          %v5410 = vmul.f32 1.0, %v5409
          %v5411 = vrcp.pop %v5311
          %v5412 = vmul.f32 %v5311, %v5411
          %v5413 = vsub.f32 1.0, %v5412
          %v5414 = vmul.f32 %v5411, %v5413
          %v5415 = vadd.f32 %v5411, %v5414
          %vm5416 = vweird.f32 %v5311
          %vm5417 = vweird.f32 %v5411
          %vm5418 = vmor %vm5416, %vm5417
          %v5419 = vsel %vm5418, %v5411, %v5415
          %v5420 = vand.u32 2147483647, %v5311
          %vm5421 = vcmp.eq.f32.partialorder %v5420, 8.507059e+37
          %v5422 = vand.u32 %v5311, 2147483648
          %v5423 = vor.u32 1.1754944e-38, %v5422
          %v5424 = vsel %vm5421, %v5423, %v5419
          %v5425 = vmul.f32 1.0, %v5424
          %v5426 = vrcp.pop %v5312
          %v5427 = vmul.f32 %v5312, %v5426
          %v5428 = vsub.f32 1.0, %v5427
          %v5429 = vmul.f32 %v5426, %v5428
          %v5430 = vadd.f32 %v5426, %v5429
          %vm5431 = vweird.f32 %v5312
          %vm5432 = vweird.f32 %v5426
          %vm5433 = vmor %vm5431, %vm5432
          %v5434 = vsel %vm5433, %v5426, %v5430
          %v5435 = vand.u32 2147483647, %v5312
          %vm5436 = vcmp.eq.f32.partialorder %v5435, 8.507059e+37
          %v5437 = vand.u32 %v5312, 2147483648
          %v5438 = vor.u32 1.1754944e-38, %v5437
          %v5439 = vsel %vm5436, %v5438, %v5434
          %v5440 = vmul.f32 1.0, %v5439
          %v5441 = vrcp.pop %v5313
          %v5442 = vmul.f32 %v5313, %v5441
          %v5443 = vsub.f32 1.0, %v5442
          %v5444 = vmul.f32 %v5441, %v5443
          %v5445 = vadd.f32 %v5441, %v5444
          %vm5446 = vweird.f32 %v5313
          %vm5447 = vweird.f32 %v5441
          %vm5448 = vmor %vm5446, %vm5447
          %v5449 = vsel %vm5448, %v5441, %v5445
          %v5450 = vand.u32 2147483647, %v5313
          %vm5451 = vcmp.eq.f32.partialorder %v5450, 8.507059e+37
          %v5452 = vand.u32 %v5313, 2147483648
          %v5453 = vor.u32 1.1754944e-38, %v5452
          %v5454 = vsel %vm5451, %v5453, %v5449
          %v5455 = vmul.f32 1.0, %v5454
          %v5456 = vrcp.pop %v5314
          %v5457 = vmul.f32 %v5314, %v5456
          %v5458 = vsub.f32 1.0, %v5457
          %v5459 = vmul.f32 %v5456, %v5458
          %v5460 = vadd.f32 %v5456, %v5459
          %vm5461 = vweird.f32 %v5314
          %vm5462 = vweird.f32 %v5456
          %vm5463 = vmor %vm5461, %vm5462
          %v5464 = vsel %vm5463, %v5456, %v5460
          %v5465 = vand.u32 2147483647, %v5314
          %vm5466 = vcmp.eq.f32.partialorder %v5465, 8.507059e+37
          %v5467 = vand.u32 %v5314, 2147483648
          %v5468 = vor.u32 1.1754944e-38, %v5467
          %v5469 = vsel %vm5466, %v5468, %v5464
          %v5470 = vmul.f32 1.0, %v5469
          %v5471 = vrcp.pop %v5315
          %v5472 = vmul.f32 %v5315, %v5471
          %v5473 = vsub.f32 1.0, %v5472
          %v5474 = vmul.f32 %v5471, %v5473
          %v5475 = vadd.f32 %v5471, %v5474
          %vm5476 = vweird.f32 %v5315
          %vm5477 = vweird.f32 %v5471
          %vm5478 = vmor %vm5476, %vm5477
          %v5479 = vsel %vm5478, %v5471, %v5475
          %v5480 = vand.u32 2147483647, %v5315
          %vm5481 = vcmp.eq.f32.partialorder %v5480, 8.507059e+37
          %v5482 = vand.u32 %v5315, 2147483648
          %v5483 = vor.u32 1.1754944e-38, %v5482
          %v5484 = vsel %vm5481, %v5483, %v5479
          %v5485 = vmul.f32 1.0, %v5484
          %v5486 = vrcp.pop %v5316
          %v5487 = vmul.f32 %v5316, %v5486
          %v5488 = vsub.f32 1.0, %v5487
          %v5489 = vmul.f32 %v5486, %v5488
          %v5490 = vadd.f32 %v5486, %v5489
          %vm5491 = vweird.f32 %v5316
          %vm5492 = vweird.f32 %v5486
          %vm5493 = vmor %vm5491, %vm5492
          %v5494 = vsel %vm5493, %v5486, %v5490
          %v5495 = vand.u32 2147483647, %v5316
          %vm5496 = vcmp.eq.f32.partialorder %v5495, 8.507059e+37
          %v5497 = vand.u32 %v5316, 2147483648
          %v5498 = vor.u32 1.1754944e-38, %v5497
          %v5499 = vsel %vm5496, %v5498, %v5494
          %v5500 = vmul.f32 1.0, %v5499
          %v5501 = vrcp.pop %v5317
          %v5502 = vmul.f32 %v5317, %v5501
          %v5503 = vsub.f32 1.0, %v5502
          %v5504 = vmul.f32 %v5501, %v5503
          %v5505 = vadd.f32 %v5501, %v5504
          %vm5506 = vweird.f32 %v5317
          %vm5507 = vweird.f32 %v5501
          %vm5508 = vmor %vm5506, %vm5507
          %v5509 = vsel %vm5508, %v5501, %v5505
          %v5510 = vand.u32 2147483647, %v5317
          %vm5511 = vcmp.eq.f32.partialorder %v5510, 8.507059e+37
          %v5512 = vand.u32 %v5317, 2147483648
          %v5513 = vor.u32 1.1754944e-38, %v5512
          %v5514 = vsel %vm5511, %v5513, %v5509
          %v5515 = vmul.f32 1.0, %v5514
          %v5516 = vrcp.pop %v5318
          %v5517 = vmul.f32 %v5318, %v5516
          %v5518 = vsub.f32 1.0, %v5517
          %v5519 = vmul.f32 %v5516, %v5518
          %v5520 = vadd.f32 %v5516, %v5519
          %vm5521 = vweird.f32 %v5318
          %vm5522 = vweird.f32 %v5516
          %vm5523 = vmor %vm5521, %vm5522
          %v5524 = vsel %vm5523, %v5516, %v5520
          %v5525 = vand.u32 2147483647, %v5318
          %vm5526 = vcmp.eq.f32.partialorder %v5525, 8.507059e+37
          %v5527 = vand.u32 %v5318, 2147483648
          %v5528 = vor.u32 1.1754944e-38, %v5527
          %v5529 = vsel %vm5526, %v5528, %v5524
          %v5530 = vmul.f32 1.0, %v5529
          %v5531 = vrcp.pop %v5319
          %v5532 = vmul.f32 %v5319, %v5531
          %v5533 = vsub.f32 1.0, %v5532
          %v5534 = vmul.f32 %v5531, %v5533
          %v5535 = vadd.f32 %v5531, %v5534
          %vm5536 = vweird.f32 %v5319
          %vm5537 = vweird.f32 %v5531
          %vm5538 = vmor %vm5536, %vm5537
          %v5539 = vsel %vm5538, %v5531, %v5535
          %v5540 = vand.u32 2147483647, %v5319
          %vm5541 = vcmp.eq.f32.partialorder %v5540, 8.507059e+37
          %v5542 = vand.u32 %v5319, 2147483648
          %v5543 = vor.u32 1.1754944e-38, %v5542
          %v5544 = vsel %vm5541, %v5543, %v5539
          %v5545 = vmul.f32 1.0, %v5544
          %v5546 = vrcp.pop %v5320
          %v5547 = vmul.f32 %v5320, %v5546
          %v5548 = vsub.f32 1.0, %v5547
          %v5549 = vmul.f32 %v5546, %v5548
          %v5550 = vadd.f32 %v5546, %v5549
          %vm5551 = vweird.f32 %v5320
          %vm5552 = vweird.f32 %v5546
          %vm5553 = vmor %vm5551, %vm5552
          %v5554 = vsel %vm5553, %v5546, %v5550
          %v5555 = vand.u32 2147483647, %v5320
          %vm5556 = vcmp.eq.f32.partialorder %v5555, 8.507059e+37
          %v5557 = vand.u32 %v5320, 2147483648
          %v5558 = vor.u32 1.1754944e-38, %v5557
          %v5559 = vsel %vm5556, %v5558, %v5554
          %v5560 = vmul.f32 1.0, %v5559
          %v5561 = vmul.f32 %v5241, %v5335
          %v5562 = vmul.f32 %v5242, %v5350
          %v5563 = vmul.f32 %v5243, %v5365
          %v5564 = vmul.f32 %v5244, %v5380
          %v5565 = vmul.f32 %v5245, %v5395
          %v5566 = vmul.f32 %v5246, %v5410
          %v5567 = vmul.f32 %v5247, %v5425
          %v5568 = vmul.f32 %v5248, %v5440
          %v5569 = vmul.f32 %v5249, %v5455
          %v5570 = vmul.f32 %v5250, %v5470
          %v5571 = vmul.f32 %v5251, %v5485
          %v5572 = vmul.f32 %v5252, %v5500
          %v5573 = vmul.f32 %v5253, %v5515
          %v5574 = vmul.f32 %v5254, %v5530
          %v5575 = vmul.f32 %v5255, %v5545
          %v5576 = vmul.f32 %v5256, %v5560
          %vm5577 = vcmask 64512
          %5578 = vst.msk [vmem:[%s5208] sm:$0xff] %vm5577, %v5561
          %5579 = vst.msk [vmem:[%s5208 + $0x8] sm:$0xff] %vm5577, %v5562
          %5580 = vst.msk [vmem:[%s5208 + $0x10] sm:$0xff] %vm5577, %v5563
          %5581 = vst.msk [vmem:[%s5208 + $0x18] sm:$0xff] %vm5577, %v5564
          %5582 = vst.msk [vmem:[%s5208 + $0x20] sm:$0xff] %vm5577, %v5565
          %5583 = vst.msk [vmem:[%s5208 + $0x28] sm:$0xff] %vm5577, %v5566
          %5584 = vst.msk [vmem:[%s5208 + $0x30] sm:$0xff] %vm5577, %v5567
          %5585 = vst.msk [vmem:[%s5208 + $0x38] sm:$0xff] %vm5577, %v5568
          %5586 = vst.msk [vmem:[%s5208 + $0x40] sm:$0xff] %vm5577, %v5569
          %5587 = vst.msk [vmem:[%s5208 + $0x48] sm:$0xff] %vm5577, %v5570
          %5588 = vst.msk [vmem:[%s5208 + $0x50] sm:$0xff] %vm5577, %v5571
          %5589 = vst.msk [vmem:[%s5208 + $0x58] sm:$0xff] %vm5577, %v5572
          %5590 = vst.msk [vmem:[%s5208 + $0x60] sm:$0xff] %vm5577, %v5573
          %5591 = vst.msk [vmem:[%s5208 + $0x68] sm:$0xff] %vm5577, %v5574
          %5592 = vst.msk [vmem:[%s5208 + $0x70] sm:$0xff] %vm5577, %v5575
          %5593 = vst.msk [vmem:[%s5208 + $0x78] sm:$0xff] %vm5577, %v5576
        $region48: #{tpu_custom_call.1} parent=31 // loop_footer
          %s5206 = sadd.s32 1, %s5202
        $region49: #{tpu_custom_call.1} parent=31 // loop_footer_branch
          %5201 = sbr.rel target = $region45
        $region50: #{tpu_custom_call.1} parent=31 // loop_exit
          _
        %p5594 = scmp.lt.s32.totalorder %s15, 1
        %s5595 = scalar_select %p5594, %s15, 1
        %s5596 = smul.addr %s5595, 32
        %s5597 = smul.addr %s5596, 8
        %s5598 = scalar_lea.vmem %s3, %s5597
        // Predicated region
        $region51: #{tpu_custom_call.1} parent=31 // pred_check
          %p5599 = pneg %p101
        $region52: #{tpu_custom_call.1} parent=31 // pred_check_branch
          %5601 = sbr.rel (%p5599) target = $region54
        $region53: #{tpu_custom_call.1} parent=31 // pred_region
          _
        $region54: #{tpu_custom_call.1} parent=31 // pred_fallthru
          _
      $region32: #{tpu_custom_call.1} parent=5 // pred_fallthru
        _
      %p5602 = scmp.le.s32.totalorder 2, %s10
      // Predicated region
      $region55: #{tpu_custom_call.1} parent=5 // pred_check
        %p5603 = pneg %p5602
      $region56: #{tpu_custom_call.1} parent=5 // pred_check_branch
        %5605 = sbr.rel (%p5603) target = $region58
      $region57: #{tpu_custom_call.1} parent=5 // pred_region
        %s5606 = ssub.s32 %s10, 2
        // Predicated region
        $region59: #{tpu_custom_call.1} parent=57 // pred_check
          %p5607 = pneg %p107
        $region60: #{tpu_custom_call.1} parent=57 // pred_check_branch
          %5609 = sbr.rel (%p5607) target = $region62
        $region61: #{tpu_custom_call.1} parent=57 // pred_region
          %p5610 = scmp.lt.s32.totalorder %s16, 1
          %s5611 = scalar_select %p5610, %s16, 1
          %s5612 = smul.addr %s5611, 32
          %s5613 = smul.addr %s5612, 8
          %s5614 = scalar_lea.vmem %s3, %s5613
        $region62: #{tpu_custom_call.1} parent=57 // pred_fallthru
          _
      $region58: #{tpu_custom_call.1} parent=5 // pred_fallthru
        _
    $region6: #{tpu_custom_call.1} parent=1 // loop_footer
      %s14 = sadd.s32 1, %s10
    $region7: #{tpu_custom_call.1} parent=1 // loop_footer_branch
      %9 = sbr.rel target = $region3
    $region8: #{tpu_custom_call.1} parent=1 // loop_exit
      _
    %5615 = vsyncpa [#allocation4], 1
    %s5616 = scalar_lea.sflag [#allocation4], 1
    %5617 = vsyncpa %s5616, 1

</llo_original>
